<compile_context>
chip_gen: v7x
topology: tpu7x:2x2x1
jax: 0.10.0
libtpu: 0.0.40
codegen_flags: <defaults>
</compile_context>

<pallas_src>
import jax
import jax.numpy as jnp
from jax.experimental import pallas as pl
from jax.experimental.pallas import tpu as pltpu

IN_DIM = 6646
IN_PAD = 6656            # round up to a multiple of 128 (lane axis)
H1, H2, H3, OUT = 128, 64, 32, 1
DROP_P = 0.3


def mlp_kernel(x_ref, mask_ref,
               w1_ref, b1_ref, w2_ref, b2_ref, w3_ref, b3_ref, w4_ref, b4_ref,
               o_ref):
    # fc1 + relu  (bf16 operands, fp32 accumulate on the MXU)
    h = jnp.dot(x_ref[...], w1_ref[...], preferred_element_type=jnp.float32) + b1_ref[...]
    h = jnp.maximum(h, 0.0)

    # fc2 + relu
    h = jnp.dot(h.astype(jnp.bfloat16), w2_ref[...],
                preferred_element_type=jnp.float32) + b2_ref[...]
    h = jnp.maximum(h, 0.0)

    # fc3 + relu
    h = jnp.dot(h.astype(jnp.bfloat16), w3_ref[...],
                preferred_element_type=jnp.float32) + b3_ref[...]
    h = jnp.maximum(h, 0.0)

    # dropout(p=0.3), training-mode F.dropout semantics via a precomputed inverted-dropout mask
    h = h * mask_ref[...]

    # output linear (out_features == 1) as a lane reduction, avoids a 1-lane MXU result tile
    o = jnp.sum(h * w4_ref[...], axis=-1, keepdims=True) + b4_ref[...]
    o_ref[...] = o.astype(o_ref.dtype)


def _round_up(n, m):
    return (n + m - 1) // m * m


@jax.jit
def mlp_forward(x, mask, w1, b1, w2, b2, w3, b3, w4, b4):
    B = x.shape[0]
    tb = min(_round_up(B, 8), 256)          # rows per batch tile
    Bp = _round_up(B, tb)

    # pad lane axis of x to IN_PAD, batch axis to a tile multiple; cast x to bf16
    xp = jnp.pad(x, ((0, Bp - B), (0, IN_PAD - IN_DIM))).astype(jnp.bfloat16)
    mp = jnp.pad(mask, ((0, Bp - B), (0, 0)))

    const = lambda i: (0, 0)                # weights stay VMEM-resident across batch tiles
    out = pl.pallas_call(
        mlp_kernel,
        out_shape=jax.ShapeDtypeStruct((Bp, OUT), jnp.float32),
        grid=(Bp // tb,),
        in_specs=[
            pl.BlockSpec((tb, IN_PAD), lambda i: (i, 0)),   # x
            pl.BlockSpec((tb, H3), lambda i: (i, 0)),       # dropout mask
            pl.BlockSpec((IN_PAD, H1), const),              # w1 (bf16)
            pl.BlockSpec((1, H1), const),                   # b1
            pl.BlockSpec((H1, H2), const),                  # w2 (bf16)
            pl.BlockSpec((1, H2), const),                   # b2
            pl.BlockSpec((H2, H3), const),                  # w3 (bf16)
            pl.BlockSpec((1, H3), const),                   # b3
            pl.BlockSpec((1, H3), const),                   # w4 row (fp32)
            pl.BlockSpec((1, 1), const),                    # b4
        ],
        out_specs=pl.BlockSpec((tb, OUT), lambda i: (i, 0)),
        compiler_params=pltpu.CompilerParams(
            dimension_semantics=("parallel",),
            vmem_limit_bytes=16 << 20,      # right-sized: working set is ~4 MiB
        ),
    )(xp, mp, w1, b1, w2, b2, w3, b3, w4, b4)
    return out[:B]


def init_params(key):
    # Deterministic init mimicking nn.Linear: uniform(-1/sqrt(fan_in), +1/sqrt(fan_in)).
    dims = [(IN_DIM, H1), (H1, H2), (H2, H3), (H3, OUT)]
    raw = []
    for (fan_in, fan_out) in dims:
        key, kw, kb = jax.random.split(key, 3)
        bound = 1.0 / (fan_in ** 0.5)
        w = jax.random.uniform(kw, (fan_in, fan_out), jnp.float32, -bound, bound)
        b = jax.random.uniform(kb, (1, fan_out), jnp.float32, -bound, bound)
        raw.append((w, b))
    (w1, b1), (w2, b2), (w3, b3), (w4, b4) = raw
    w1 = jnp.pad(w1, ((0, IN_PAD - IN_DIM), (0, 0)))        # zero-pad K rows (no-op math)
    w1 = w1.astype(jnp.bfloat16)
    w2 = w2.astype(jnp.bfloat16)
    w3 = w3.astype(jnp.bfloat16)
    w4 = w4.T                                               # [1, H3] row for the lane reduction
    return [w1, b1, w2, b2, w3, b3, w4, b4]


if __name__ == "__main__":
    key = jax.random.PRNGKey(0)
    key, kx, km = jax.random.split(key, 3)

    B = 8  # small batch
    x = jax.random.normal(kx, (B, IN_DIM), dtype=jnp.float32)
    params = init_params(key)

    # Training-mode F.dropout(0.3): inverted dropout mask built on host (deterministic).
    # TODO(synk): add an eval-mode flag that passes an all-ones mask to skip dropout.
    keep = jax.random.uniform(km, (B, H3)) >= DROP_P
    mask = jnp.where(keep, 1.0 / (1.0 - DROP_P), 0.0).astype(jnp.float32)

    out = mlp_forward(x, mask, *params)
    jax.block_until_ready(out)
    assert out.shape == (B, OUT) and out.dtype == jnp.float32
    print("KERNEL_OK")
</pallas_src>

<mosaic_0001>
module attributes {stable_mosaic.version = 11 : i64} {
  func.func @mlp_kernel(%arg0: i32, %arg1: memref<8x6656xbf16, #tpu.memory_space<vmem>>, %arg2: memref<8x32xf32, #tpu.memory_space<vmem>>, %arg3: memref<6656x128xbf16, #tpu.memory_space<vmem>>, %arg4: memref<1x128xf32, #tpu.memory_space<vmem>>, %arg5: memref<128x64xbf16, #tpu.memory_space<vmem>>, %arg6: memref<1x64xf32, #tpu.memory_space<vmem>>, %arg7: memref<64x32xbf16, #tpu.memory_space<vmem>>, %arg8: memref<1x32xf32, #tpu.memory_space<vmem>>, %arg9: memref<1x32xf32, #tpu.memory_space<vmem>>, %arg10: memref<1x1xf32, #tpu.memory_space<vmem>>, %arg11: memref<8x1xf32, #tpu.memory_space<vmem>>) attributes {dimension_semantics = [#tpu.dimension_semantics<parallel>], iteration_bounds = array<i64: 1>, scalar_prefetch = 0 : i64, scratch_operands = 0 : i64, tpu.core_type = #tpu.core_type<tc>, window_params = [{transform_indices = @transform_0, window_bounds = array<i64: 8, 6656>}, {transform_indices = @transform_1, window_bounds = array<i64: 8, 32>}, {pipeline_mode = #tpu.pipeline_mode<synchronous>, transform_indices = @transform_2, window_bounds = array<i64: 6656, 128>}, {pipeline_mode = #tpu.pipeline_mode<synchronous>, transform_indices = @transform_3, window_bounds = array<i64: 1, 128>}, {pipeline_mode = #tpu.pipeline_mode<synchronous>, transform_indices = @transform_4, window_bounds = array<i64: 128, 64>}, {pipeline_mode = #tpu.pipeline_mode<synchronous>, transform_indices = @transform_5, window_bounds = array<i64: 1, 64>}, {pipeline_mode = #tpu.pipeline_mode<synchronous>, transform_indices = @transform_6, window_bounds = array<i64: 64, 32>}, {pipeline_mode = #tpu.pipeline_mode<synchronous>, transform_indices = @transform_7, window_bounds = array<i64: 1, 32>}, {pipeline_mode = #tpu.pipeline_mode<synchronous>, transform_indices = @transform_8, window_bounds = array<i64: 1, 32>}, {pipeline_mode = #tpu.pipeline_mode<synchronous>, transform_indices = @transform_9, window_bounds = array<i64: 1, 1>}, {transform_indices = @transform_10, window_bounds = array<i64: 8, 1>}]} {
    %c0 = arith.constant 0 : index
    %c0_0 = arith.constant 0 : index
    %0 = vector.load %arg1[%c0, %c0_0] : memref<8x6656xbf16, #tpu.memory_space<vmem>>, vector<8x6656xbf16>
    %c0_1 = arith.constant 0 : index
    %c0_2 = arith.constant 0 : index
    %1 = vector.load %arg3[%c0_1, %c0_2] : memref<6656x128xbf16, #tpu.memory_space<vmem>>, vector<6656x128xbf16>
    %cst = arith.constant dense<0.000000e+00> : vector<8x128xf32>
    %2 = tpu.matmul %0, %1, %cst {dimension_numbers = #tpu.dot_dimension_numbers<[1], [0], [0], [1], [0, 0, 1, 1], [], []>} : vector<8x6656xbf16>, vector<6656x128xbf16>, vector<8x128xf32> -> vector<8x128xf32>
    %c0_3 = arith.constant 0 : index
    %c0_4 = arith.constant 0 : index
    %3 = vector.load %arg4[%c0_3, %c0_4] : memref<1x128xf32, #tpu.memory_space<vmem>>, vector<1x128xf32>
    %4 = vector.broadcast %3 : vector<1x128xf32> to vector<8x128xf32>
    %5 = arith.addf %2, %4 : vector<8x128xf32>
    %cst_5 = arith.constant 0.000000e+00 : f32
    %6 = vector.broadcast %cst_5 : f32 to vector<8x128xf32>
    %7 = arith.maximumf %5, %6 : vector<8x128xf32>
    %8 = arith.truncf %7 : vector<8x128xf32> to vector<8x128xbf16>
    %c0_6 = arith.constant 0 : index
    %c0_7 = arith.constant 0 : index
    %9 = vector.load %arg5[%c0_6, %c0_7] : memref<128x64xbf16, #tpu.memory_space<vmem>>, vector<128x64xbf16>
    %cst_8 = arith.constant dense<0.000000e+00> : vector<8x64xf32>
    %10 = tpu.matmul %8, %9, %cst_8 {dimension_numbers = #tpu.dot_dimension_numbers<[1], [0], [0], [1], [0, 0, 1, 1], [], []>} : vector<8x128xbf16>, vector<128x64xbf16>, vector<8x64xf32> -> vector<8x64xf32>
    %c0_9 = arith.constant 0 : index
    %c0_10 = arith.constant 0 : index
    %11 = vector.load %arg6[%c0_9, %c0_10] : memref<1x64xf32, #tpu.memory_space<vmem>>, vector<1x64xf32>
    %12 = vector.broadcast %11 : vector<1x64xf32> to vector<8x64xf32>
    %13 = arith.addf %10, %12 : vector<8x64xf32>
    %cst_11 = arith.constant 0.000000e+00 : f32
    %14 = vector.broadcast %cst_11 : f32 to vector<8x64xf32>
    %15 = arith.maximumf %13, %14 : vector<8x64xf32>
    %16 = arith.truncf %15 : vector<8x64xf32> to vector<8x64xbf16>
    %c0_12 = arith.constant 0 : index
    %c0_13 = arith.constant 0 : index
    %17 = vector.load %arg7[%c0_12, %c0_13] : memref<64x32xbf16, #tpu.memory_space<vmem>>, vector<64x32xbf16>
    %cst_14 = arith.constant dense<0.000000e+00> : vector<8x32xf32>
    %18 = tpu.matmul %16, %17, %cst_14 {dimension_numbers = #tpu.dot_dimension_numbers<[1], [0], [0], [1], [0, 0, 1, 1], [], []>} : vector<8x64xbf16>, vector<64x32xbf16>, vector<8x32xf32> -> vector<8x32xf32>
    %c0_15 = arith.constant 0 : index
    %c0_16 = arith.constant 0 : index
    %19 = vector.load %arg8[%c0_15, %c0_16] : memref<1x32xf32, #tpu.memory_space<vmem>>, vector<1x32xf32>
    %20 = vector.broadcast %19 : vector<1x32xf32> to vector<8x32xf32>
    %21 = arith.addf %18, %20 : vector<8x32xf32>
    %cst_17 = arith.constant 0.000000e+00 : f32
    %22 = vector.broadcast %cst_17 : f32 to vector<8x32xf32>
    %23 = arith.maximumf %21, %22 : vector<8x32xf32>
    %c0_18 = arith.constant 0 : index
    %c0_19 = arith.constant 0 : index
    %24 = vector.load %arg2[%c0_18, %c0_19] : memref<8x32xf32, #tpu.memory_space<vmem>>, vector<8x32xf32>
    %25 = arith.mulf %23, %24 : vector<8x32xf32>
    %c0_20 = arith.constant 0 : index
    %c0_21 = arith.constant 0 : index
    %26 = vector.load %arg9[%c0_20, %c0_21] : memref<1x32xf32, #tpu.memory_space<vmem>>, vector<1x32xf32>
    %27 = vector.broadcast %26 : vector<1x32xf32> to vector<8x32xf32>
    %28 = arith.mulf %25, %27 : vector<8x32xf32>
    %cst_22 = arith.constant dense<0.000000e+00> : vector<8xf32>
    %29 = vector.multi_reduction <add>, %28, %cst_22 [1] : vector<8x32xf32> to vector<8xf32>
    %30 = vector.shape_cast %29 : vector<8xf32> to vector<8x1xf32>
    %c0_23 = arith.constant 0 : index
    %c0_24 = arith.constant 0 : index
    %31 = vector.load %arg10[%c0_23, %c0_24] : memref<1x1xf32, #tpu.memory_space<vmem>>, vector<1x1xf32>
    %32 = vector.broadcast %31 : vector<1x1xf32> to vector<8x1xf32>
    %33 = arith.addf %30, %32 : vector<8x1xf32>
    %c0_25 = arith.constant 0 : index
    %c0_26 = arith.constant 0 : index
    %34 = vector.load %arg11[%c0_25, %c0_26] : memref<8x1xf32, #tpu.memory_space<vmem>>, vector<8x1xf32>
    tpu.vector_store %arg11[%c0_25, %c0_26], %33 {strides = array<i32>} : memref<8x1xf32, #tpu.memory_space<vmem>>, vector<8x1xf32>,
    return
  }
  func.func @transform_0(%arg0: i32) -> (i32, i32) {
    %c0_i32 = arith.constant 0 : i32
    %c0_i32_0 = arith.constant 0 : i32
    return %arg0, %c0_i32 : i32, i32
  }
  func.func @transform_1(%arg0: i32) -> (i32, i32) {
    %c0_i32 = arith.constant 0 : i32
    %c0_i32_0 = arith.constant 0 : i32
    return %arg0, %c0_i32 : i32, i32
  }
  func.func @transform_2(%arg0: i32) -> (i32, i32) {
    %c0_i32 = arith.constant 0 : i32
    %c0_i32_0 = arith.constant 0 : i32
    %c0_i32_1 = arith.constant 0 : i32
    return %c0_i32, %c0_i32_0 : i32, i32
  }
  func.func @transform_3(%arg0: i32) -> (i32, i32) {
    %c0_i32 = arith.constant 0 : i32
    %c0_i32_0 = arith.constant 0 : i32
    %c0_i32_1 = arith.constant 0 : i32
    return %c0_i32, %c0_i32_0 : i32, i32
  }
  func.func @transform_4(%arg0: i32) -> (i32, i32) {
    %c0_i32 = arith.constant 0 : i32
    %c0_i32_0 = arith.constant 0 : i32
    %c0_i32_1 = arith.constant 0 : i32
    return %c0_i32, %c0_i32_0 : i32, i32
  }
  func.func @transform_5(%arg0: i32) -> (i32, i32) {
    %c0_i32 = arith.constant 0 : i32
    %c0_i32_0 = arith.constant 0 : i32
    %c0_i32_1 = arith.constant 0 : i32
    return %c0_i32, %c0_i32_0 : i32, i32
  }
  func.func @transform_6(%arg0: i32) -> (i32, i32) {
    %c0_i32 = arith.constant 0 : i32
    %c0_i32_0 = arith.constant 0 : i32
    %c0_i32_1 = arith.constant 0 : i32
    return %c0_i32, %c0_i32_0 : i32, i32
  }
  func.func @transform_7(%arg0: i32) -> (i32, i32) {
    %c0_i32 = arith.constant 0 : i32
    %c0_i32_0 = arith.constant 0 : i32
    %c0_i32_1 = arith.constant 0 : i32
    return %c0_i32, %c0_i32_0 : i32, i32
  }
  func.func @transform_8(%arg0: i32) -> (i32, i32) {
    %c0_i32 = arith.constant 0 : i32
    %c0_i32_0 = arith.constant 0 : i32
    %c0_i32_1 = arith.constant 0 : i32
    return %c0_i32, %c0_i32_0 : i32, i32
  }
  func.func @transform_9(%arg0: i32) -> (i32, i32) {
    %c0_i32 = arith.constant 0 : i32
    %c0_i32_0 = arith.constant 0 : i32
    %c0_i32_1 = arith.constant 0 : i32
    return %c0_i32, %c0_i32_0 : i32, i32
  }
  func.func @transform_10(%arg0: i32) -> (i32, i32) {
    %c0_i32 = arith.constant 0 : i32
    %c0_i32_0 = arith.constant 0 : i32
    return %arg0, %c0_i32 : i32, i32
  }
}

</mosaic_0001>

<llo_original>
// kernel: mlp_forward.1
$region0: #{mlp_forward.1}
  #allocation0 [shape = 'u32[]', space=smem, size = 0x4, offset = 0x4, fixed_abs, tag = 'smem constant byte address 0x4 - core index']
  #allocation1 [shape = 'u32[144,128]{1,0:T(1,128)}', space=vmem, size = 0x12000, scoped, tag = 'internal scratch']
  #allocation2 [shape = 'f32[1,1]{1,0:T(1,128)S(1)}', space=vmem, size = 0x200, scoped, tag = 'scoped memory for mlp_forward.1']
  %s0 = inlined_call_operand.vmem [shape: bf16[8,6656], index: 0, kind: input, shape index: {}]
  %s1 = inlined_call_operand.hbm [shape: f32[8,32], index: 1, kind: input, shape index: {}]
  %s2 = inlined_call_operand.hbm [shape: bf16[6656,128], index: 2, kind: input, shape index: {}]
  %s3 = inlined_call_operand.hbm [shape: f32[1,128], index: 3, kind: input, shape index: {}]
  %s4 = inlined_call_operand.vmem [shape: bf16[128,64], index: 4, kind: input, shape index: {}]
  %s5 = inlined_call_operand.hbm [shape: f32[1,64], index: 5, kind: input, shape index: {}]
  %s6 = inlined_call_operand.vmem [shape: bf16[64,32], index: 6, kind: input, shape index: {}]
  %s7 = inlined_call_operand.hbm [shape: f32[1,32], index: 7, kind: input, shape index: {}]
  %s8 = inlined_call_operand.hbm [shape: f32[1,32], index: 8, kind: input, shape index: {}]
  %s9 = inlined_call_operand.<no memory space> [shape: f32[1,1], index: 9, kind: input, shape index: {}]
  %s10 = inlined_call_operand.vmem [shape: f32[8,1], index: 10, kind: output, shape index: {}]
  %s11 = sld [smem:[#allocation0]]
  $region74: #{mlp_forward.1} parent=0
    _
  %s13 = ssub.s32 1, %s11
  %s14 = scalar_select 0, %s13, %s11
  %v15 = vstv %s9
  %16 = vst [vmem:[#allocation2] sm:$0x1] %v15
  $region1: #{mlp_forward.1} parent=0
    #allocation3 [shape = 'u8[4096]{0}', space=vmem, size = 0x1000, scoped, tag = 'input window, operand 1, single buffered']
    #allocation4 [shape = 's32[1]{0}', space=sflag, size = 0x4, scoped, tag = 'scoped memory for mlp_forward.1']
    #allocation5 [shape = 'u8[1703936]{0}', space=vmem, size = 0x1a0000, scoped, tag = 'input window, operand 2, single buffered']
    #allocation6 [shape = 's32[1]{0}', space=sflag, size = 0x4, scoped, tag = 'scoped memory for mlp_forward.1']
    #allocation7 [shape = 'u8[512]{0}', space=vmem, size = 0x400, scoped, tag = 'input window, operand 3, single buffered']
    #allocation8 [shape = 'u8[512]{0}', space=vmem, size = 0x400, scoped, tag = 'input window, operand 5, single buffered']
    #allocation9 [shape = 's32[1]{0}', space=sflag, size = 0x4, scoped, tag = 'scoped memory for mlp_forward.1']
    #allocation10 [shape = 'u8[512]{0}', space=vmem, size = 0x400, scoped, tag = 'input window, operand 7, single buffered']
    #allocation11 [shape = 'u8[512]{0}', space=vmem, size = 0x400, scoped, tag = 'input window, operand 8, single buffered']
    #allocation12 [shape = 's32[1]{0}', space=sflag, size = 0x4, scoped, tag = 'scoped memory for mlp_forward.1']
    %17 = vsyncpa [#allocation4], 0
    %18 = vsyncpa [#allocation6], 0
    %19 = vsyncpa [#allocation9], 0
    %20 = vsyncpa [#allocation12], 0
    // Predicated region
    $region2: #{mlp_forward.1} parent=1 // pred_check
      _
    $region3: #{mlp_forward.1} parent=1 // pred_check_branch
      %22 = sbr.rel (0) target = $region5
    $region4: #{mlp_forward.1} parent=1 // pred_region
      _
    $region5: #{mlp_forward.1} parent=1 // pred_fallthru
      _
    // Predicated region
    $region6: #{mlp_forward.1} parent=1 // pred_check
      _
    $region7: #{mlp_forward.1} parent=1 // pred_check_branch
      %24 = sbr.rel (0) target = $region9
    $region8: #{mlp_forward.1} parent=1 // pred_region
      %s26 = ssub.s32 128, 128
      %27 = vsyncadd [#allocation4], %s26
      %s29 = sshll.u32 [#allocation3], 4
      %s30 = int_to_ptr.vmem [resolvable:$true] %s29
      %32 = dma.hbm_to_vmem [thread:$0]  %s1, 128, %s30, [#allocation4]
    $region9: #{mlp_forward.1} parent=1 // pred_fallthru
      _
    // Predicated region
    $region10: #{mlp_forward.1} parent=1 // pred_check
      _
    $region11: #{mlp_forward.1} parent=1 // pred_check_branch
      %34 = sbr.rel (0) target = $region13
    $region12: #{mlp_forward.1} parent=1 // pred_region
      %s36 = ssub.s32 53248, 53248
      %37 = vsyncadd [#allocation6], %s36
      %s38 = sshll.u32 [#allocation5], 4
      %s39 = int_to_ptr.vmem [resolvable:$true] %s38
      %44 = dma.hbm_to_vmem [thread:$0]  %s2, 53248, %s39, [#allocation6], 64, 64, 4
    $region13: #{mlp_forward.1} parent=1 // pred_fallthru
      _
    // Predicated region
    $region14: #{mlp_forward.1} parent=1 // pred_check
      _
    $region15: #{mlp_forward.1} parent=1 // pred_check_branch
      %46 = sbr.rel (0) target = $region17
    $region16: #{mlp_forward.1} parent=1 // pred_region
      %s48 = ssub.s32 16, 16
      %49 = vsyncadd [#allocation6], %s48
      %s51 = sshll.u32 [#allocation7], 4
      %s52 = int_to_ptr.vmem [resolvable:$true] %s51
      %54 = dma.hbm_to_vmem [thread:$0]  %s3, 16, %s52, [#allocation6]
    $region17: #{mlp_forward.1} parent=1 // pred_fallthru
      _
    // Predicated region
    $region18: #{mlp_forward.1} parent=1 // pred_check
      _
    $region19: #{mlp_forward.1} parent=1 // pred_check_branch
      %56 = sbr.rel (0) target = $region21
    $region20: #{mlp_forward.1} parent=1 // pred_region
      _
    $region21: #{mlp_forward.1} parent=1 // pred_fallthru
      _
    // Predicated region
    $region22: #{mlp_forward.1} parent=1 // pred_check
      _
    $region23: #{mlp_forward.1} parent=1 // pred_check_branch
      %58 = sbr.rel (0) target = $region25
    $region24: #{mlp_forward.1} parent=1 // pred_region
      %s60 = ssub.s32 16, 16
      %61 = vsyncadd [#allocation9], %s60
      %s63 = sshll.u32 [#allocation8], 4
      %s64 = int_to_ptr.vmem [resolvable:$true] %s63
      %66 = dma.hbm_to_vmem [thread:$0]  %s5, 16, %s64, [#allocation9]
    $region25: #{mlp_forward.1} parent=1 // pred_fallthru
      _
    // Predicated region
    $region26: #{mlp_forward.1} parent=1 // pred_check
      _
    $region27: #{mlp_forward.1} parent=1 // pred_check_branch
      %68 = sbr.rel (0) target = $region29
    $region28: #{mlp_forward.1} parent=1 // pred_region
      _
    $region29: #{mlp_forward.1} parent=1 // pred_fallthru
      _
    // Predicated region
    $region30: #{mlp_forward.1} parent=1 // pred_check
      _
    $region31: #{mlp_forward.1} parent=1 // pred_check_branch
      %70 = sbr.rel (0) target = $region33
    $region32: #{mlp_forward.1} parent=1 // pred_region
      %s72 = ssub.s32 16, 16
      %73 = vsyncadd [#allocation9], %s72
      %s75 = sshll.u32 [#allocation10], 4
      %s76 = int_to_ptr.vmem [resolvable:$true] %s75
      %78 = dma.hbm_to_vmem [thread:$0]  %s7, 16, %s76, [#allocation9]
    $region33: #{mlp_forward.1} parent=1 // pred_fallthru
      _
    // Predicated region
    $region34: #{mlp_forward.1} parent=1 // pred_check
      _
    $region35: #{mlp_forward.1} parent=1 // pred_check_branch
      %80 = sbr.rel (0) target = $region37
    $region36: #{mlp_forward.1} parent=1 // pred_region
      %s82 = ssub.s32 16, 16
      %83 = vsyncadd [#allocation12], %s82
      %s85 = sshll.u32 [#allocation11], 4
      %s86 = int_to_ptr.vmem [resolvable:$true] %s85
      %88 = dma.hbm_to_vmem [thread:$0]  %s8, 16, %s86, [#allocation12]
    $region37: #{mlp_forward.1} parent=1 // pred_fallthru
      _
    // Predicated region
    $region38: #{mlp_forward.1} parent=1 // pred_check
      _
    $region39: #{mlp_forward.1} parent=1 // pred_check_branch
      %90 = sbr.rel (0) target = $region41
    $region40: #{mlp_forward.1} parent=1 // pred_region
      _
    $region41: #{mlp_forward.1} parent=1 // pred_fallthru
      _
    // Predicated region
    $region42: #{mlp_forward.1} parent=1 // pred_check
      _
    $region43: #{mlp_forward.1} parent=1 // pred_check_branch
      %92 = sbr.rel (0) target = $region45
    $region44: #{mlp_forward.1} parent=1 // pred_region
      %93 = dma.done [#allocation4], 128
    $region45: #{mlp_forward.1} parent=1 // pred_fallthru
      _
    // Predicated region
    $region46: #{mlp_forward.1} parent=1 // pred_check
      _
    $region47: #{mlp_forward.1} parent=1 // pred_check_branch
      %95 = sbr.rel (0) target = $region49
    $region48: #{mlp_forward.1} parent=1 // pred_region
      %96 = dma.done [#allocation6], 53248
    $region49: #{mlp_forward.1} parent=1 // pred_fallthru
      _
    // Predicated region
    $region50: #{mlp_forward.1} parent=1 // pred_check
      _
    $region51: #{mlp_forward.1} parent=1 // pred_check_branch
      %98 = sbr.rel (0) target = $region53
    $region52: #{mlp_forward.1} parent=1 // pred_region
      %99 = dma.done [#allocation6], 16
    $region53: #{mlp_forward.1} parent=1 // pred_fallthru
      _
    // Predicated region
    $region54: #{mlp_forward.1} parent=1 // pred_check
      _
    $region55: #{mlp_forward.1} parent=1 // pred_check_branch
      %101 = sbr.rel (0) target = $region57
    $region56: #{mlp_forward.1} parent=1 // pred_region
      %102 = dma.done [#allocation9], 16
    $region57: #{mlp_forward.1} parent=1 // pred_fallthru
      _
    // Predicated region
    $region58: #{mlp_forward.1} parent=1 // pred_check
      _
    $region59: #{mlp_forward.1} parent=1 // pred_check_branch
      %104 = sbr.rel (0) target = $region61
    $region60: #{mlp_forward.1} parent=1 // pred_region
      %105 = dma.done [#allocation9], 16
    $region61: #{mlp_forward.1} parent=1 // pred_fallthru
      _
    // Predicated region
    $region62: #{mlp_forward.1} parent=1 // pred_check
      _
    $region63: #{mlp_forward.1} parent=1 // pred_check_branch
      %107 = sbr.rel (0) target = $region65
    $region64: #{mlp_forward.1} parent=1 // pred_region
      %108 = dma.done [#allocation12], 16
    $region65: #{mlp_forward.1} parent=1 // pred_fallthru
      _
    %v110 = vld [vmem:[%s0] sm:$0xff]
    %v111 = vld [vmem:[%s0 + $0x8] sm:$0xff]
    %v112 = vld [vmem:[%s0 + $0x10] sm:$0xff]
    %v113 = vld [vmem:[%s0 + $0x18] sm:$0xff]
    %v114 = vld [vmem:[%s0 + $0x20] sm:$0xff]
    %v115 = vld [vmem:[%s0 + $0x28] sm:$0xff]
    %v116 = vld [vmem:[%s0 + $0x30] sm:$0xff]
    %v117 = vld [vmem:[%s0 + $0x38] sm:$0xff]
    %v118 = vld [vmem:[%s0 + $0x40] sm:$0xff]
    %v119 = vld [vmem:[%s0 + $0x48] sm:$0xff]
    %v120 = vld [vmem:[%s0 + $0x50] sm:$0xff]
    %v121 = vld [vmem:[%s0 + $0x58] sm:$0xff]
    %v122 = vld [vmem:[%s0 + $0x60] sm:$0xff]
    %v123 = vld [vmem:[%s0 + $0x68] sm:$0xff]
    %v124 = vld [vmem:[%s0 + $0x70] sm:$0xff]
    %v125 = vld [vmem:[%s0 + $0x78] sm:$0xff]
    %v126 = vld [vmem:[%s0 + $0x80] sm:$0xff]
    %v127 = vld [vmem:[%s0 + $0x88] sm:$0xff]
    %v128 = vld [vmem:[%s0 + $0x90] sm:$0xff]
    %v129 = vld [vmem:[%s0 + $0x98] sm:$0xff]
    %v130 = vld [vmem:[%s0 + $0xa0] sm:$0xff]
    %v131 = vld [vmem:[%s0 + $0xa8] sm:$0xff]
    %v132 = vld [vmem:[%s0 + $0xb0] sm:$0xff]
    %v133 = vld [vmem:[%s0 + $0xb8] sm:$0xff]
    %v134 = vld [vmem:[%s0 + $0xc0] sm:$0xff]
    %v135 = vld [vmem:[%s0 + $0xc8] sm:$0xff]
    %v136 = vld [vmem:[#allocation5] sm:$0xf]
    %v137 = vld [vmem:[#allocation5 + $0x4] sm:$0xf]
    %v138 = vld [vmem:[#allocation5 + $0x8] sm:$0xf]
    %v139 = vld [vmem:[#allocation5 + $0xc] sm:$0xf]
    %v140 = vld [vmem:[#allocation5 + $0x10] sm:$0xf]
    %v141 = vld [vmem:[#allocation5 + $0x14] sm:$0xf]
    %v142 = vld [vmem:[#allocation5 + $0x18] sm:$0xf]
    %v143 = vld [vmem:[#allocation5 + $0x1c] sm:$0xf]
    %v144 = vld [vmem:[#allocation5 + $0x20] sm:$0xf]
    %v145 = vld [vmem:[#allocation5 + $0x24] sm:$0xf]
    %v146 = vld [vmem:[#allocation5 + $0x28] sm:$0xf]
    %v147 = vld [vmem:[#allocation5 + $0x2c] sm:$0xf]
    %v148 = vld [vmem:[#allocation5 + $0x30] sm:$0xf]
    %v149 = vld [vmem:[#allocation5 + $0x34] sm:$0xf]
    %v150 = vld [vmem:[#allocation5 + $0x38] sm:$0xf]
    %v151 = vld [vmem:[#allocation5 + $0x3c] sm:$0xf]
    %v152 = vld [vmem:[#allocation5 + $0x40] sm:$0xf]
    %v153 = vld [vmem:[#allocation5 + $0x44] sm:$0xf]
    %v154 = vld [vmem:[#allocation5 + $0x48] sm:$0xf]
    %v155 = vld [vmem:[#allocation5 + $0x4c] sm:$0xf]
    %v156 = vld [vmem:[#allocation5 + $0x50] sm:$0xf]
    %v157 = vld [vmem:[#allocation5 + $0x54] sm:$0xf]
    %v158 = vld [vmem:[#allocation5 + $0x58] sm:$0xf]
    %v159 = vld [vmem:[#allocation5 + $0x5c] sm:$0xf]
    %v160 = vld [vmem:[#allocation5 + $0x60] sm:$0xf]
    %v161 = vld [vmem:[#allocation5 + $0x64] sm:$0xf]
    %v162 = vld [vmem:[#allocation5 + $0x68] sm:$0xf]
    %v163 = vld [vmem:[#allocation5 + $0x6c] sm:$0xf]
    %v164 = vld [vmem:[#allocation5 + $0x70] sm:$0xf]
    %v165 = vld [vmem:[#allocation5 + $0x74] sm:$0xf]
    %v166 = vld [vmem:[#allocation5 + $0x78] sm:$0xf]
    %v167 = vld [vmem:[#allocation5 + $0x7c] sm:$0xf]
    %v168 = vld [vmem:[#allocation5 + $0x80] sm:$0xf]
    %v169 = vld [vmem:[#allocation5 + $0x84] sm:$0xf]
    %v170 = vld [vmem:[#allocation5 + $0x88] sm:$0xf]
    %v171 = vld [vmem:[#allocation5 + $0x8c] sm:$0xf]
    %v172 = vld [vmem:[#allocation5 + $0x90] sm:$0xf]
    %v173 = vld [vmem:[#allocation5 + $0x94] sm:$0xf]
    %v174 = vld [vmem:[#allocation5 + $0x98] sm:$0xf]
    %v175 = vld [vmem:[#allocation5 + $0x9c] sm:$0xf]
    %v176 = vld [vmem:[#allocation5 + $0xa0] sm:$0xf]
    %v177 = vld [vmem:[#allocation5 + $0xa4] sm:$0xf]
    %v178 = vld [vmem:[#allocation5 + $0xa8] sm:$0xf]
    %v179 = vld [vmem:[#allocation5 + $0xac] sm:$0xf]
    %v180 = vld [vmem:[#allocation5 + $0xb0] sm:$0xf]
    %v181 = vld [vmem:[#allocation5 + $0xb4] sm:$0xf]
    %v182 = vld [vmem:[#allocation5 + $0xb8] sm:$0xf]
    %v183 = vld [vmem:[#allocation5 + $0xbc] sm:$0xf]
    %v184 = vld [vmem:[#allocation5 + $0xc0] sm:$0xf]
    %v185 = vld [vmem:[#allocation5 + $0xc4] sm:$0xf]
    %v186 = vld [vmem:[#allocation5 + $0xc8] sm:$0xf]
    %v187 = vld [vmem:[#allocation5 + $0xcc] sm:$0xf]
    %v188 = vld [vmem:[#allocation5 + $0xd0] sm:$0xf]
    %v189 = vld [vmem:[#allocation5 + $0xd4] sm:$0xf]
    %v190 = vld [vmem:[#allocation5 + $0xd8] sm:$0xf]
    %v191 = vld [vmem:[#allocation5 + $0xdc] sm:$0xf]
    %v192 = vld [vmem:[#allocation5 + $0xe0] sm:$0xf]
    %v193 = vld [vmem:[#allocation5 + $0xe4] sm:$0xf]
    %v194 = vld [vmem:[#allocation5 + $0xe8] sm:$0xf]
    %v195 = vld [vmem:[#allocation5 + $0xec] sm:$0xf]
    %v196 = vld [vmem:[#allocation5 + $0xf0] sm:$0xf]
    %v197 = vld [vmem:[#allocation5 + $0xf4] sm:$0xf]
    %v198 = vld [vmem:[#allocation5 + $0xf8] sm:$0xf]
    %v199 = vld [vmem:[#allocation5 + $0xfc] sm:$0xf]
    %v200 = vld [vmem:[#allocation5 + $0x100] sm:$0xf]
    %v201 = vld [vmem:[#allocation5 + $0x104] sm:$0xf]
    %v202 = vld [vmem:[#allocation5 + $0x108] sm:$0xf]
    %v203 = vld [vmem:[#allocation5 + $0x10c] sm:$0xf]
    %v204 = vld [vmem:[#allocation5 + $0x110] sm:$0xf]
    %v205 = vld [vmem:[#allocation5 + $0x114] sm:$0xf]
    %v206 = vld [vmem:[#allocation5 + $0x118] sm:$0xf]
    %v207 = vld [vmem:[#allocation5 + $0x11c] sm:$0xf]
    %v208 = vld [vmem:[#allocation5 + $0x120] sm:$0xf]
    %v209 = vld [vmem:[#allocation5 + $0x124] sm:$0xf]
    %v210 = vld [vmem:[#allocation5 + $0x128] sm:$0xf]
    %v211 = vld [vmem:[#allocation5 + $0x12c] sm:$0xf]
    %v212 = vld [vmem:[#allocation5 + $0x130] sm:$0xf]
    %v213 = vld [vmem:[#allocation5 + $0x134] sm:$0xf]
    %v214 = vld [vmem:[#allocation5 + $0x138] sm:$0xf]
    %v215 = vld [vmem:[#allocation5 + $0x13c] sm:$0xf]
    %v216 = vld [vmem:[#allocation5 + $0x140] sm:$0xf]
    %v217 = vld [vmem:[#allocation5 + $0x144] sm:$0xf]
    %v218 = vld [vmem:[#allocation5 + $0x148] sm:$0xf]
    %v219 = vld [vmem:[#allocation5 + $0x14c] sm:$0xf]
    %v220 = vld [vmem:[#allocation5 + $0x150] sm:$0xf]
    %v221 = vld [vmem:[#allocation5 + $0x154] sm:$0xf]
    %v222 = vld [vmem:[#allocation5 + $0x158] sm:$0xf]
    %v223 = vld [vmem:[#allocation5 + $0x15c] sm:$0xf]
    %v224 = vld [vmem:[#allocation5 + $0x160] sm:$0xf]
    %v225 = vld [vmem:[#allocation5 + $0x164] sm:$0xf]
    %v226 = vld [vmem:[#allocation5 + $0x168] sm:$0xf]
    %v227 = vld [vmem:[#allocation5 + $0x16c] sm:$0xf]
    %v228 = vld [vmem:[#allocation5 + $0x170] sm:$0xf]
    %v229 = vld [vmem:[#allocation5 + $0x174] sm:$0xf]
    %v230 = vld [vmem:[#allocation5 + $0x178] sm:$0xf]
    %v231 = vld [vmem:[#allocation5 + $0x17c] sm:$0xf]
    %v232 = vld [vmem:[#allocation5 + $0x180] sm:$0xf]
    %v233 = vld [vmem:[#allocation5 + $0x184] sm:$0xf]
    %v234 = vld [vmem:[#allocation5 + $0x188] sm:$0xf]
    %v235 = vld [vmem:[#allocation5 + $0x18c] sm:$0xf]
    %v236 = vld [vmem:[#allocation5 + $0x190] sm:$0xf]
    %v237 = vld [vmem:[#allocation5 + $0x194] sm:$0xf]
    %v238 = vld [vmem:[#allocation5 + $0x198] sm:$0xf]
    %v239 = vld [vmem:[#allocation5 + $0x19c] sm:$0xf]
    %v240 = vld [vmem:[#allocation5 + $0x1a0] sm:$0xf]
    %v241 = vld [vmem:[#allocation5 + $0x1a4] sm:$0xf]
    %v242 = vld [vmem:[#allocation5 + $0x1a8] sm:$0xf]
    %v243 = vld [vmem:[#allocation5 + $0x1ac] sm:$0xf]
    %v244 = vld [vmem:[#allocation5 + $0x1b0] sm:$0xf]
    %v245 = vld [vmem:[#allocation5 + $0x1b4] sm:$0xf]
    %v246 = vld [vmem:[#allocation5 + $0x1b8] sm:$0xf]
    %v247 = vld [vmem:[#allocation5 + $0x1bc] sm:$0xf]
    %v248 = vld [vmem:[#allocation5 + $0x1c0] sm:$0xf]
    %v249 = vld [vmem:[#allocation5 + $0x1c4] sm:$0xf]
    %v250 = vld [vmem:[#allocation5 + $0x1c8] sm:$0xf]
    %v251 = vld [vmem:[#allocation5 + $0x1cc] sm:$0xf]
    %v252 = vld [vmem:[#allocation5 + $0x1d0] sm:$0xf]
    %v253 = vld [vmem:[#allocation5 + $0x1d4] sm:$0xf]
    %v254 = vld [vmem:[#allocation5 + $0x1d8] sm:$0xf]
    %v255 = vld [vmem:[#allocation5 + $0x1dc] sm:$0xf]
    %v256 = vld [vmem:[#allocation5 + $0x1e0] sm:$0xf]
    %v257 = vld [vmem:[#allocation5 + $0x1e4] sm:$0xf]
    %v258 = vld [vmem:[#allocation5 + $0x1e8] sm:$0xf]
    %v259 = vld [vmem:[#allocation5 + $0x1ec] sm:$0xf]
    %v260 = vld [vmem:[#allocation5 + $0x1f0] sm:$0xf]
    %v261 = vld [vmem:[#allocation5 + $0x1f4] sm:$0xf]
    %v262 = vld [vmem:[#allocation5 + $0x1f8] sm:$0xf]
    %v263 = vld [vmem:[#allocation5 + $0x1fc] sm:$0xf]
    %v264 = vld [vmem:[#allocation5 + $0x200] sm:$0xf]
    %v265 = vld [vmem:[#allocation5 + $0x204] sm:$0xf]
    %v266 = vld [vmem:[#allocation5 + $0x208] sm:$0xf]
    %v267 = vld [vmem:[#allocation5 + $0x20c] sm:$0xf]
    %v268 = vld [vmem:[#allocation5 + $0x210] sm:$0xf]
    %v269 = vld [vmem:[#allocation5 + $0x214] sm:$0xf]
    %v270 = vld [vmem:[#allocation5 + $0x218] sm:$0xf]
    %v271 = vld [vmem:[#allocation5 + $0x21c] sm:$0xf]
    %v272 = vld [vmem:[#allocation5 + $0x220] sm:$0xf]
    %v273 = vld [vmem:[#allocation5 + $0x224] sm:$0xf]
    %v274 = vld [vmem:[#allocation5 + $0x228] sm:$0xf]
    %v275 = vld [vmem:[#allocation5 + $0x22c] sm:$0xf]
    %v276 = vld [vmem:[#allocation5 + $0x230] sm:$0xf]
    %v277 = vld [vmem:[#allocation5 + $0x234] sm:$0xf]
    %v278 = vld [vmem:[#allocation5 + $0x238] sm:$0xf]
    %v279 = vld [vmem:[#allocation5 + $0x23c] sm:$0xf]
    %v280 = vld [vmem:[#allocation5 + $0x240] sm:$0xf]
    %v281 = vld [vmem:[#allocation5 + $0x244] sm:$0xf]
    %v282 = vld [vmem:[#allocation5 + $0x248] sm:$0xf]
    %v283 = vld [vmem:[#allocation5 + $0x24c] sm:$0xf]
    %v284 = vld [vmem:[#allocation5 + $0x250] sm:$0xf]
    %v285 = vld [vmem:[#allocation5 + $0x254] sm:$0xf]
    %v286 = vld [vmem:[#allocation5 + $0x258] sm:$0xf]
    %v287 = vld [vmem:[#allocation5 + $0x25c] sm:$0xf]
    %v288 = vld [vmem:[#allocation5 + $0x260] sm:$0xf]
    %v289 = vld [vmem:[#allocation5 + $0x264] sm:$0xf]
    %v290 = vld [vmem:[#allocation5 + $0x268] sm:$0xf]
    %v291 = vld [vmem:[#allocation5 + $0x26c] sm:$0xf]
    %v292 = vld [vmem:[#allocation5 + $0x270] sm:$0xf]
    %v293 = vld [vmem:[#allocation5 + $0x274] sm:$0xf]
    %v294 = vld [vmem:[#allocation5 + $0x278] sm:$0xf]
    %v295 = vld [vmem:[#allocation5 + $0x27c] sm:$0xf]
    %v296 = vld [vmem:[#allocation5 + $0x280] sm:$0xf]
    %v297 = vld [vmem:[#allocation5 + $0x284] sm:$0xf]
    %v298 = vld [vmem:[#allocation5 + $0x288] sm:$0xf]
    %v299 = vld [vmem:[#allocation5 + $0x28c] sm:$0xf]
    %v300 = vld [vmem:[#allocation5 + $0x290] sm:$0xf]
    %v301 = vld [vmem:[#allocation5 + $0x294] sm:$0xf]
    %v302 = vld [vmem:[#allocation5 + $0x298] sm:$0xf]
    %v303 = vld [vmem:[#allocation5 + $0x29c] sm:$0xf]
    %v304 = vld [vmem:[#allocation5 + $0x2a0] sm:$0xf]
    %v305 = vld [vmem:[#allocation5 + $0x2a4] sm:$0xf]
    %v306 = vld [vmem:[#allocation5 + $0x2a8] sm:$0xf]
    %v307 = vld [vmem:[#allocation5 + $0x2ac] sm:$0xf]
    %v308 = vld [vmem:[#allocation5 + $0x2b0] sm:$0xf]
    %v309 = vld [vmem:[#allocation5 + $0x2b4] sm:$0xf]
    %v310 = vld [vmem:[#allocation5 + $0x2b8] sm:$0xf]
    %v311 = vld [vmem:[#allocation5 + $0x2bc] sm:$0xf]
    %v312 = vld [vmem:[#allocation5 + $0x2c0] sm:$0xf]
    %v313 = vld [vmem:[#allocation5 + $0x2c4] sm:$0xf]
    %v314 = vld [vmem:[#allocation5 + $0x2c8] sm:$0xf]
    %v315 = vld [vmem:[#allocation5 + $0x2cc] sm:$0xf]
    %v316 = vld [vmem:[#allocation5 + $0x2d0] sm:$0xf]
    %v317 = vld [vmem:[#allocation5 + $0x2d4] sm:$0xf]
    %v318 = vld [vmem:[#allocation5 + $0x2d8] sm:$0xf]
    %v319 = vld [vmem:[#allocation5 + $0x2dc] sm:$0xf]
    %v320 = vld [vmem:[#allocation5 + $0x2e0] sm:$0xf]
    %v321 = vld [vmem:[#allocation5 + $0x2e4] sm:$0xf]
    %v322 = vld [vmem:[#allocation5 + $0x2e8] sm:$0xf]
    %v323 = vld [vmem:[#allocation5 + $0x2ec] sm:$0xf]
    %v324 = vld [vmem:[#allocation5 + $0x2f0] sm:$0xf]
    %v325 = vld [vmem:[#allocation5 + $0x2f4] sm:$0xf]
    %v326 = vld [vmem:[#allocation5 + $0x2f8] sm:$0xf]
    %v327 = vld [vmem:[#allocation5 + $0x2fc] sm:$0xf]
    %v328 = vld [vmem:[#allocation5 + $0x300] sm:$0xf]
    %v329 = vld [vmem:[#allocation5 + $0x304] sm:$0xf]
    %v330 = vld [vmem:[#allocation5 + $0x308] sm:$0xf]
    %v331 = vld [vmem:[#allocation5 + $0x30c] sm:$0xf]
    %v332 = vld [vmem:[#allocation5 + $0x310] sm:$0xf]
    %v333 = vld [vmem:[#allocation5 + $0x314] sm:$0xf]
    %v334 = vld [vmem:[#allocation5 + $0x318] sm:$0xf]
    %v335 = vld [vmem:[#allocation5 + $0x31c] sm:$0xf]
    %v336 = vld [vmem:[#allocation5 + $0x320] sm:$0xf]
    %v337 = vld [vmem:[#allocation5 + $0x324] sm:$0xf]
    %v338 = vld [vmem:[#allocation5 + $0x328] sm:$0xf]
    %v339 = vld [vmem:[#allocation5 + $0x32c] sm:$0xf]
    %v340 = vld [vmem:[#allocation5 + $0x330] sm:$0xf]
    %v341 = vld [vmem:[#allocation5 + $0x334] sm:$0xf]
    %v342 = vld [vmem:[#allocation5 + $0x338] sm:$0xf]
    %v343 = vld [vmem:[#allocation5 + $0x33c] sm:$0xf]
    %v344 = vld [vmem:[#allocation5 + $0x340] sm:$0xf]
    %v345 = vld [vmem:[#allocation5 + $0x344] sm:$0xf]
    %v346 = vld [vmem:[#allocation5 + $0x348] sm:$0xf]
    %v347 = vld [vmem:[#allocation5 + $0x34c] sm:$0xf]
    %v348 = vld [vmem:[#allocation5 + $0x350] sm:$0xf]
    %v349 = vld [vmem:[#allocation5 + $0x354] sm:$0xf]
    %v350 = vld [vmem:[#allocation5 + $0x358] sm:$0xf]
    %v351 = vld [vmem:[#allocation5 + $0x35c] sm:$0xf]
    %v352 = vld [vmem:[#allocation5 + $0x360] sm:$0xf]
    %v353 = vld [vmem:[#allocation5 + $0x364] sm:$0xf]
    %v354 = vld [vmem:[#allocation5 + $0x368] sm:$0xf]
    %v355 = vld [vmem:[#allocation5 + $0x36c] sm:$0xf]
    %v356 = vld [vmem:[#allocation5 + $0x370] sm:$0xf]
    %v357 = vld [vmem:[#allocation5 + $0x374] sm:$0xf]
    %v358 = vld [vmem:[#allocation5 + $0x378] sm:$0xf]
    %v359 = vld [vmem:[#allocation5 + $0x37c] sm:$0xf]
    %v360 = vld [vmem:[#allocation5 + $0x380] sm:$0xf]
    %v361 = vld [vmem:[#allocation5 + $0x384] sm:$0xf]
    %v362 = vld [vmem:[#allocation5 + $0x388] sm:$0xf]
    %v363 = vld [vmem:[#allocation5 + $0x38c] sm:$0xf]
    %v364 = vld [vmem:[#allocation5 + $0x390] sm:$0xf]
    %v365 = vld [vmem:[#allocation5 + $0x394] sm:$0xf]
    %v366 = vld [vmem:[#allocation5 + $0x398] sm:$0xf]
    %v367 = vld [vmem:[#allocation5 + $0x39c] sm:$0xf]
    %v368 = vld [vmem:[#allocation5 + $0x3a0] sm:$0xf]
    %v369 = vld [vmem:[#allocation5 + $0x3a4] sm:$0xf]
    %v370 = vld [vmem:[#allocation5 + $0x3a8] sm:$0xf]
    %v371 = vld [vmem:[#allocation5 + $0x3ac] sm:$0xf]
    %v372 = vld [vmem:[#allocation5 + $0x3b0] sm:$0xf]
    %v373 = vld [vmem:[#allocation5 + $0x3b4] sm:$0xf]
    %v374 = vld [vmem:[#allocation5 + $0x3b8] sm:$0xf]
    %v375 = vld [vmem:[#allocation5 + $0x3bc] sm:$0xf]
    %v376 = vld [vmem:[#allocation5 + $0x3c0] sm:$0xf]
    %v377 = vld [vmem:[#allocation5 + $0x3c4] sm:$0xf]
    %v378 = vld [vmem:[#allocation5 + $0x3c8] sm:$0xf]
    %v379 = vld [vmem:[#allocation5 + $0x3cc] sm:$0xf]
    %v380 = vld [vmem:[#allocation5 + $0x3d0] sm:$0xf]
    %v381 = vld [vmem:[#allocation5 + $0x3d4] sm:$0xf]
    %v382 = vld [vmem:[#allocation5 + $0x3d8] sm:$0xf]
    %v383 = vld [vmem:[#allocation5 + $0x3dc] sm:$0xf]
    %v384 = vld [vmem:[#allocation5 + $0x3e0] sm:$0xf]
    %v385 = vld [vmem:[#allocation5 + $0x3e4] sm:$0xf]
    %v386 = vld [vmem:[#allocation5 + $0x3e8] sm:$0xf]
    %v387 = vld [vmem:[#allocation5 + $0x3ec] sm:$0xf]
    %v388 = vld [vmem:[#allocation5 + $0x3f0] sm:$0xf]
    %v389 = vld [vmem:[#allocation5 + $0x3f4] sm:$0xf]
    %v390 = vld [vmem:[#allocation5 + $0x3f8] sm:$0xf]
    %v391 = vld [vmem:[#allocation5 + $0x3fc] sm:$0xf]
    %v392 = vld [vmem:[#allocation5 + $0x400] sm:$0xf]
    %v393 = vld [vmem:[#allocation5 + $0x404] sm:$0xf]
    %v394 = vld [vmem:[#allocation5 + $0x408] sm:$0xf]
    %v395 = vld [vmem:[#allocation5 + $0x40c] sm:$0xf]
    %v396 = vld [vmem:[#allocation5 + $0x410] sm:$0xf]
    %v397 = vld [vmem:[#allocation5 + $0x414] sm:$0xf]
    %v398 = vld [vmem:[#allocation5 + $0x418] sm:$0xf]
    %v399 = vld [vmem:[#allocation5 + $0x41c] sm:$0xf]
    %v400 = vld [vmem:[#allocation5 + $0x420] sm:$0xf]
    %v401 = vld [vmem:[#allocation5 + $0x424] sm:$0xf]
    %v402 = vld [vmem:[#allocation5 + $0x428] sm:$0xf]
    %v403 = vld [vmem:[#allocation5 + $0x42c] sm:$0xf]
    %v404 = vld [vmem:[#allocation5 + $0x430] sm:$0xf]
    %v405 = vld [vmem:[#allocation5 + $0x434] sm:$0xf]
    %v406 = vld [vmem:[#allocation5 + $0x438] sm:$0xf]
    %v407 = vld [vmem:[#allocation5 + $0x43c] sm:$0xf]
    %v408 = vld [vmem:[#allocation5 + $0x440] sm:$0xf]
    %v409 = vld [vmem:[#allocation5 + $0x444] sm:$0xf]
    %v410 = vld [vmem:[#allocation5 + $0x448] sm:$0xf]
    %v411 = vld [vmem:[#allocation5 + $0x44c] sm:$0xf]
    %v412 = vld [vmem:[#allocation5 + $0x450] sm:$0xf]
    %v413 = vld [vmem:[#allocation5 + $0x454] sm:$0xf]
    %v414 = vld [vmem:[#allocation5 + $0x458] sm:$0xf]
    %v415 = vld [vmem:[#allocation5 + $0x45c] sm:$0xf]
    %v416 = vld [vmem:[#allocation5 + $0x460] sm:$0xf]
    %v417 = vld [vmem:[#allocation5 + $0x464] sm:$0xf]
    %v418 = vld [vmem:[#allocation5 + $0x468] sm:$0xf]
    %v419 = vld [vmem:[#allocation5 + $0x46c] sm:$0xf]
    %v420 = vld [vmem:[#allocation5 + $0x470] sm:$0xf]
    %v421 = vld [vmem:[#allocation5 + $0x474] sm:$0xf]
    %v422 = vld [vmem:[#allocation5 + $0x478] sm:$0xf]
    %v423 = vld [vmem:[#allocation5 + $0x47c] sm:$0xf]
    %v424 = vld [vmem:[#allocation5 + $0x480] sm:$0xf]
    %v425 = vld [vmem:[#allocation5 + $0x484] sm:$0xf]
    %v426 = vld [vmem:[#allocation5 + $0x488] sm:$0xf]
    %v427 = vld [vmem:[#allocation5 + $0x48c] sm:$0xf]
    %v428 = vld [vmem:[#allocation5 + $0x490] sm:$0xf]
    %v429 = vld [vmem:[#allocation5 + $0x494] sm:$0xf]
    %v430 = vld [vmem:[#allocation5 + $0x498] sm:$0xf]
    %v431 = vld [vmem:[#allocation5 + $0x49c] sm:$0xf]
    %v432 = vld [vmem:[#allocation5 + $0x4a0] sm:$0xf]
    %v433 = vld [vmem:[#allocation5 + $0x4a4] sm:$0xf]
    %v434 = vld [vmem:[#allocation5 + $0x4a8] sm:$0xf]
    %v435 = vld [vmem:[#allocation5 + $0x4ac] sm:$0xf]
    %v436 = vld [vmem:[#allocation5 + $0x4b0] sm:$0xf]
    %v437 = vld [vmem:[#allocation5 + $0x4b4] sm:$0xf]
    %v438 = vld [vmem:[#allocation5 + $0x4b8] sm:$0xf]
    %v439 = vld [vmem:[#allocation5 + $0x4bc] sm:$0xf]
    %v440 = vld [vmem:[#allocation5 + $0x4c0] sm:$0xf]
    %v441 = vld [vmem:[#allocation5 + $0x4c4] sm:$0xf]
    %v442 = vld [vmem:[#allocation5 + $0x4c8] sm:$0xf]
    %v443 = vld [vmem:[#allocation5 + $0x4cc] sm:$0xf]
    %v444 = vld [vmem:[#allocation5 + $0x4d0] sm:$0xf]
    %v445 = vld [vmem:[#allocation5 + $0x4d4] sm:$0xf]
    %v446 = vld [vmem:[#allocation5 + $0x4d8] sm:$0xf]
    %v447 = vld [vmem:[#allocation5 + $0x4dc] sm:$0xf]
    %v448 = vld [vmem:[#allocation5 + $0x4e0] sm:$0xf]
    %v449 = vld [vmem:[#allocation5 + $0x4e4] sm:$0xf]
    %v450 = vld [vmem:[#allocation5 + $0x4e8] sm:$0xf]
    %v451 = vld [vmem:[#allocation5 + $0x4ec] sm:$0xf]
    %v452 = vld [vmem:[#allocation5 + $0x4f0] sm:$0xf]
    %v453 = vld [vmem:[#allocation5 + $0x4f4] sm:$0xf]
    %v454 = vld [vmem:[#allocation5 + $0x4f8] sm:$0xf]
    %v455 = vld [vmem:[#allocation5 + $0x4fc] sm:$0xf]
    %v456 = vld [vmem:[#allocation5 + $0x500] sm:$0xf]
    %v457 = vld [vmem:[#allocation5 + $0x504] sm:$0xf]
    %v458 = vld [vmem:[#allocation5 + $0x508] sm:$0xf]
    %v459 = vld [vmem:[#allocation5 + $0x50c] sm:$0xf]
    %v460 = vld [vmem:[#allocation5 + $0x510] sm:$0xf]
    %v461 = vld [vmem:[#allocation5 + $0x514] sm:$0xf]
    %v462 = vld [vmem:[#allocation5 + $0x518] sm:$0xf]
    %v463 = vld [vmem:[#allocation5 + $0x51c] sm:$0xf]
    %v464 = vld [vmem:[#allocation5 + $0x520] sm:$0xf]
    %v465 = vld [vmem:[#allocation5 + $0x524] sm:$0xf]
    %v466 = vld [vmem:[#allocation5 + $0x528] sm:$0xf]
    %v467 = vld [vmem:[#allocation5 + $0x52c] sm:$0xf]
    %v468 = vld [vmem:[#allocation5 + $0x530] sm:$0xf]
    %v469 = vld [vmem:[#allocation5 + $0x534] sm:$0xf]
    %v470 = vld [vmem:[#allocation5 + $0x538] sm:$0xf]
    %v471 = vld [vmem:[#allocation5 + $0x53c] sm:$0xf]
    %v472 = vld [vmem:[#allocation5 + $0x540] sm:$0xf]
    %v473 = vld [vmem:[#allocation5 + $0x544] sm:$0xf]
    %v474 = vld [vmem:[#allocation5 + $0x548] sm:$0xf]
    %v475 = vld [vmem:[#allocation5 + $0x54c] sm:$0xf]
    %v476 = vld [vmem:[#allocation5 + $0x550] sm:$0xf]
    %v477 = vld [vmem:[#allocation5 + $0x554] sm:$0xf]
    %v478 = vld [vmem:[#allocation5 + $0x558] sm:$0xf]
    %v479 = vld [vmem:[#allocation5 + $0x55c] sm:$0xf]
    %v480 = vld [vmem:[#allocation5 + $0x560] sm:$0xf]
    %v481 = vld [vmem:[#allocation5 + $0x564] sm:$0xf]
    %v482 = vld [vmem:[#allocation5 + $0x568] sm:$0xf]
    %v483 = vld [vmem:[#allocation5 + $0x56c] sm:$0xf]
    %v484 = vld [vmem:[#allocation5 + $0x570] sm:$0xf]
    %v485 = vld [vmem:[#allocation5 + $0x574] sm:$0xf]
    %v486 = vld [vmem:[#allocation5 + $0x578] sm:$0xf]
    %v487 = vld [vmem:[#allocation5 + $0x57c] sm:$0xf]
    %v488 = vld [vmem:[#allocation5 + $0x580] sm:$0xf]
    %v489 = vld [vmem:[#allocation5 + $0x584] sm:$0xf]
    %v490 = vld [vmem:[#allocation5 + $0x588] sm:$0xf]
    %v491 = vld [vmem:[#allocation5 + $0x58c] sm:$0xf]
    %v492 = vld [vmem:[#allocation5 + $0x590] sm:$0xf]
    %v493 = vld [vmem:[#allocation5 + $0x594] sm:$0xf]
    %v494 = vld [vmem:[#allocation5 + $0x598] sm:$0xf]
    %v495 = vld [vmem:[#allocation5 + $0x59c] sm:$0xf]
    %v496 = vld [vmem:[#allocation5 + $0x5a0] sm:$0xf]
    %v497 = vld [vmem:[#allocation5 + $0x5a4] sm:$0xf]
    %v498 = vld [vmem:[#allocation5 + $0x5a8] sm:$0xf]
    %v499 = vld [vmem:[#allocation5 + $0x5ac] sm:$0xf]
    %v500 = vld [vmem:[#allocation5 + $0x5b0] sm:$0xf]
    %v501 = vld [vmem:[#allocation5 + $0x5b4] sm:$0xf]
    %v502 = vld [vmem:[#allocation5 + $0x5b8] sm:$0xf]
    %v503 = vld [vmem:[#allocation5 + $0x5bc] sm:$0xf]
    %v504 = vld [vmem:[#allocation5 + $0x5c0] sm:$0xf]
    %v505 = vld [vmem:[#allocation5 + $0x5c4] sm:$0xf]
    %v506 = vld [vmem:[#allocation5 + $0x5c8] sm:$0xf]
    %v507 = vld [vmem:[#allocation5 + $0x5cc] sm:$0xf]
    %v508 = vld [vmem:[#allocation5 + $0x5d0] sm:$0xf]
    %v509 = vld [vmem:[#allocation5 + $0x5d4] sm:$0xf]
    %v510 = vld [vmem:[#allocation5 + $0x5d8] sm:$0xf]
    %v511 = vld [vmem:[#allocation5 + $0x5dc] sm:$0xf]
    %v512 = vld [vmem:[#allocation5 + $0x5e0] sm:$0xf]
    %v513 = vld [vmem:[#allocation5 + $0x5e4] sm:$0xf]
    %v514 = vld [vmem:[#allocation5 + $0x5e8] sm:$0xf]
    %v515 = vld [vmem:[#allocation5 + $0x5ec] sm:$0xf]
    %v516 = vld [vmem:[#allocation5 + $0x5f0] sm:$0xf]
    %v517 = vld [vmem:[#allocation5 + $0x5f4] sm:$0xf]
    %v518 = vld [vmem:[#allocation5 + $0x5f8] sm:$0xf]
    %v519 = vld [vmem:[#allocation5 + $0x5fc] sm:$0xf]
    %v520 = vld [vmem:[#allocation5 + $0x600] sm:$0xf]
    %v521 = vld [vmem:[#allocation5 + $0x604] sm:$0xf]
    %v522 = vld [vmem:[#allocation5 + $0x608] sm:$0xf]
    %v523 = vld [vmem:[#allocation5 + $0x60c] sm:$0xf]
    %v524 = vld [vmem:[#allocation5 + $0x610] sm:$0xf]
    %v525 = vld [vmem:[#allocation5 + $0x614] sm:$0xf]
    %v526 = vld [vmem:[#allocation5 + $0x618] sm:$0xf]
    %v527 = vld [vmem:[#allocation5 + $0x61c] sm:$0xf]
    %v528 = vld [vmem:[#allocation5 + $0x620] sm:$0xf]
    %v529 = vld [vmem:[#allocation5 + $0x624] sm:$0xf]
    %v530 = vld [vmem:[#allocation5 + $0x628] sm:$0xf]
    %v531 = vld [vmem:[#allocation5 + $0x62c] sm:$0xf]
    %v532 = vld [vmem:[#allocation5 + $0x630] sm:$0xf]
    %v533 = vld [vmem:[#allocation5 + $0x634] sm:$0xf]
    %v534 = vld [vmem:[#allocation5 + $0x638] sm:$0xf]
    %v535 = vld [vmem:[#allocation5 + $0x63c] sm:$0xf]
    %v536 = vld [vmem:[#allocation5 + $0x640] sm:$0xf]
    %v537 = vld [vmem:[#allocation5 + $0x644] sm:$0xf]
    %v538 = vld [vmem:[#allocation5 + $0x648] sm:$0xf]
    %v539 = vld [vmem:[#allocation5 + $0x64c] sm:$0xf]
    %v540 = vld [vmem:[#allocation5 + $0x650] sm:$0xf]
    %v541 = vld [vmem:[#allocation5 + $0x654] sm:$0xf]
    %v542 = vld [vmem:[#allocation5 + $0x658] sm:$0xf]
    %v543 = vld [vmem:[#allocation5 + $0x65c] sm:$0xf]
    %v544 = vld [vmem:[#allocation5 + $0x660] sm:$0xf]
    %v545 = vld [vmem:[#allocation5 + $0x664] sm:$0xf]
    %v546 = vld [vmem:[#allocation5 + $0x668] sm:$0xf]
    %v547 = vld [vmem:[#allocation5 + $0x66c] sm:$0xf]
    %v548 = vld [vmem:[#allocation5 + $0x670] sm:$0xf]
    %v549 = vld [vmem:[#allocation5 + $0x674] sm:$0xf]
    %v550 = vld [vmem:[#allocation5 + $0x678] sm:$0xf]
    %v551 = vld [vmem:[#allocation5 + $0x67c] sm:$0xf]
    %v552 = vld [vmem:[#allocation5 + $0x680] sm:$0xf]
    %v553 = vld [vmem:[#allocation5 + $0x684] sm:$0xf]
    %v554 = vld [vmem:[#allocation5 + $0x688] sm:$0xf]
    %v555 = vld [vmem:[#allocation5 + $0x68c] sm:$0xf]
    %v556 = vld [vmem:[#allocation5 + $0x690] sm:$0xf]
    %v557 = vld [vmem:[#allocation5 + $0x694] sm:$0xf]
    %v558 = vld [vmem:[#allocation5 + $0x698] sm:$0xf]
    %v559 = vld [vmem:[#allocation5 + $0x69c] sm:$0xf]
    %v560 = vld [vmem:[#allocation5 + $0x6a0] sm:$0xf]
    %v561 = vld [vmem:[#allocation5 + $0x6a4] sm:$0xf]
    %v562 = vld [vmem:[#allocation5 + $0x6a8] sm:$0xf]
    %v563 = vld [vmem:[#allocation5 + $0x6ac] sm:$0xf]
    %v564 = vld [vmem:[#allocation5 + $0x6b0] sm:$0xf]
    %v565 = vld [vmem:[#allocation5 + $0x6b4] sm:$0xf]
    %v566 = vld [vmem:[#allocation5 + $0x6b8] sm:$0xf]
    %v567 = vld [vmem:[#allocation5 + $0x6bc] sm:$0xf]
    %v568 = vld [vmem:[#allocation5 + $0x6c0] sm:$0xf]
    %v569 = vld [vmem:[#allocation5 + $0x6c4] sm:$0xf]
    %v570 = vld [vmem:[#allocation5 + $0x6c8] sm:$0xf]
    %v571 = vld [vmem:[#allocation5 + $0x6cc] sm:$0xf]
    %v572 = vld [vmem:[#allocation5 + $0x6d0] sm:$0xf]
    %v573 = vld [vmem:[#allocation5 + $0x6d4] sm:$0xf]
    %v574 = vld [vmem:[#allocation5 + $0x6d8] sm:$0xf]
    %v575 = vld [vmem:[#allocation5 + $0x6dc] sm:$0xf]
    %v576 = vld [vmem:[#allocation5 + $0x6e0] sm:$0xf]
    %v577 = vld [vmem:[#allocation5 + $0x6e4] sm:$0xf]
    %v578 = vld [vmem:[#allocation5 + $0x6e8] sm:$0xf]
    %v579 = vld [vmem:[#allocation5 + $0x6ec] sm:$0xf]
    %v580 = vld [vmem:[#allocation5 + $0x6f0] sm:$0xf]
    %v581 = vld [vmem:[#allocation5 + $0x6f4] sm:$0xf]
    %v582 = vld [vmem:[#allocation5 + $0x6f8] sm:$0xf]
    %v583 = vld [vmem:[#allocation5 + $0x6fc] sm:$0xf]
    %v584 = vld [vmem:[#allocation5 + $0x700] sm:$0xf]
    %v585 = vld [vmem:[#allocation5 + $0x704] sm:$0xf]
    %v586 = vld [vmem:[#allocation5 + $0x708] sm:$0xf]
    %v587 = vld [vmem:[#allocation5 + $0x70c] sm:$0xf]
    %v588 = vld [vmem:[#allocation5 + $0x710] sm:$0xf]
    %v589 = vld [vmem:[#allocation5 + $0x714] sm:$0xf]
    %v590 = vld [vmem:[#allocation5 + $0x718] sm:$0xf]
    %v591 = vld [vmem:[#allocation5 + $0x71c] sm:$0xf]
    %v592 = vld [vmem:[#allocation5 + $0x720] sm:$0xf]
    %v593 = vld [vmem:[#allocation5 + $0x724] sm:$0xf]
    %v594 = vld [vmem:[#allocation5 + $0x728] sm:$0xf]
    %v595 = vld [vmem:[#allocation5 + $0x72c] sm:$0xf]
    %v596 = vld [vmem:[#allocation5 + $0x730] sm:$0xf]
    %v597 = vld [vmem:[#allocation5 + $0x734] sm:$0xf]
    %v598 = vld [vmem:[#allocation5 + $0x738] sm:$0xf]
    %v599 = vld [vmem:[#allocation5 + $0x73c] sm:$0xf]
    %v600 = vld [vmem:[#allocation5 + $0x740] sm:$0xf]
    %v601 = vld [vmem:[#allocation5 + $0x744] sm:$0xf]
    %v602 = vld [vmem:[#allocation5 + $0x748] sm:$0xf]
    %v603 = vld [vmem:[#allocation5 + $0x74c] sm:$0xf]
    %v604 = vld [vmem:[#allocation5 + $0x750] sm:$0xf]
    %v605 = vld [vmem:[#allocation5 + $0x754] sm:$0xf]
    %v606 = vld [vmem:[#allocation5 + $0x758] sm:$0xf]
    %v607 = vld [vmem:[#allocation5 + $0x75c] sm:$0xf]
    %v608 = vld [vmem:[#allocation5 + $0x760] sm:$0xf]
    %v609 = vld [vmem:[#allocation5 + $0x764] sm:$0xf]
    %v610 = vld [vmem:[#allocation5 + $0x768] sm:$0xf]
    %v611 = vld [vmem:[#allocation5 + $0x76c] sm:$0xf]
    %v612 = vld [vmem:[#allocation5 + $0x770] sm:$0xf]
    %v613 = vld [vmem:[#allocation5 + $0x774] sm:$0xf]
    %v614 = vld [vmem:[#allocation5 + $0x778] sm:$0xf]
    %v615 = vld [vmem:[#allocation5 + $0x77c] sm:$0xf]
    %v616 = vld [vmem:[#allocation5 + $0x780] sm:$0xf]
    %v617 = vld [vmem:[#allocation5 + $0x784] sm:$0xf]
    %v618 = vld [vmem:[#allocation5 + $0x788] sm:$0xf]
    %v619 = vld [vmem:[#allocation5 + $0x78c] sm:$0xf]
    %v620 = vld [vmem:[#allocation5 + $0x790] sm:$0xf]
    %v621 = vld [vmem:[#allocation5 + $0x794] sm:$0xf]
    %v622 = vld [vmem:[#allocation5 + $0x798] sm:$0xf]
    %v623 = vld [vmem:[#allocation5 + $0x79c] sm:$0xf]
    %v624 = vld [vmem:[#allocation5 + $0x7a0] sm:$0xf]
    %v625 = vld [vmem:[#allocation5 + $0x7a4] sm:$0xf]
    %v626 = vld [vmem:[#allocation5 + $0x7a8] sm:$0xf]
    %v627 = vld [vmem:[#allocation5 + $0x7ac] sm:$0xf]
    %v628 = vld [vmem:[#allocation5 + $0x7b0] sm:$0xf]
    %v629 = vld [vmem:[#allocation5 + $0x7b4] sm:$0xf]
    %v630 = vld [vmem:[#allocation5 + $0x7b8] sm:$0xf]
    %v631 = vld [vmem:[#allocation5 + $0x7bc] sm:$0xf]
    %v632 = vld [vmem:[#allocation5 + $0x7c0] sm:$0xf]
    %v633 = vld [vmem:[#allocation5 + $0x7c4] sm:$0xf]
    %v634 = vld [vmem:[#allocation5 + $0x7c8] sm:$0xf]
    %v635 = vld [vmem:[#allocation5 + $0x7cc] sm:$0xf]
    %v636 = vld [vmem:[#allocation5 + $0x7d0] sm:$0xf]
    %v637 = vld [vmem:[#allocation5 + $0x7d4] sm:$0xf]
    %v638 = vld [vmem:[#allocation5 + $0x7d8] sm:$0xf]
    %v639 = vld [vmem:[#allocation5 + $0x7dc] sm:$0xf]
    %v640 = vld [vmem:[#allocation5 + $0x7e0] sm:$0xf]
    %v641 = vld [vmem:[#allocation5 + $0x7e4] sm:$0xf]
    %v642 = vld [vmem:[#allocation5 + $0x7e8] sm:$0xf]
    %v643 = vld [vmem:[#allocation5 + $0x7ec] sm:$0xf]
    %v644 = vld [vmem:[#allocation5 + $0x7f0] sm:$0xf]
    %v645 = vld [vmem:[#allocation5 + $0x7f4] sm:$0xf]
    %v646 = vld [vmem:[#allocation5 + $0x7f8] sm:$0xf]
    %v647 = vld [vmem:[#allocation5 + $0x7fc] sm:$0xf]
    %v648 = vld [vmem:[#allocation5 + $0x800] sm:$0xf]
    %v649 = vld [vmem:[#allocation5 + $0x804] sm:$0xf]
    %v650 = vld [vmem:[#allocation5 + $0x808] sm:$0xf]
    %v651 = vld [vmem:[#allocation5 + $0x80c] sm:$0xf]
    %v652 = vld [vmem:[#allocation5 + $0x810] sm:$0xf]
    %v653 = vld [vmem:[#allocation5 + $0x814] sm:$0xf]
    %v654 = vld [vmem:[#allocation5 + $0x818] sm:$0xf]
    %v655 = vld [vmem:[#allocation5 + $0x81c] sm:$0xf]
    %v656 = vld [vmem:[#allocation5 + $0x820] sm:$0xf]
    %v657 = vld [vmem:[#allocation5 + $0x824] sm:$0xf]
    %v658 = vld [vmem:[#allocation5 + $0x828] sm:$0xf]
    %v659 = vld [vmem:[#allocation5 + $0x82c] sm:$0xf]
    %v660 = vld [vmem:[#allocation5 + $0x830] sm:$0xf]
    %v661 = vld [vmem:[#allocation5 + $0x834] sm:$0xf]
    %v662 = vld [vmem:[#allocation5 + $0x838] sm:$0xf]
    %v663 = vld [vmem:[#allocation5 + $0x83c] sm:$0xf]
    %v664 = vld [vmem:[#allocation5 + $0x840] sm:$0xf]
    %v665 = vld [vmem:[#allocation5 + $0x844] sm:$0xf]
    %v666 = vld [vmem:[#allocation5 + $0x848] sm:$0xf]
    %v667 = vld [vmem:[#allocation5 + $0x84c] sm:$0xf]
    %v668 = vld [vmem:[#allocation5 + $0x850] sm:$0xf]
    %v669 = vld [vmem:[#allocation5 + $0x854] sm:$0xf]
    %v670 = vld [vmem:[#allocation5 + $0x858] sm:$0xf]
    %v671 = vld [vmem:[#allocation5 + $0x85c] sm:$0xf]
    %v672 = vld [vmem:[#allocation5 + $0x860] sm:$0xf]
    %v673 = vld [vmem:[#allocation5 + $0x864] sm:$0xf]
    %v674 = vld [vmem:[#allocation5 + $0x868] sm:$0xf]
    %v675 = vld [vmem:[#allocation5 + $0x86c] sm:$0xf]
    %v676 = vld [vmem:[#allocation5 + $0x870] sm:$0xf]
    %v677 = vld [vmem:[#allocation5 + $0x874] sm:$0xf]
    %v678 = vld [vmem:[#allocation5 + $0x878] sm:$0xf]
    %v679 = vld [vmem:[#allocation5 + $0x87c] sm:$0xf]
    %v680 = vld [vmem:[#allocation5 + $0x880] sm:$0xf]
    %v681 = vld [vmem:[#allocation5 + $0x884] sm:$0xf]
    %v682 = vld [vmem:[#allocation5 + $0x888] sm:$0xf]
    %v683 = vld [vmem:[#allocation5 + $0x88c] sm:$0xf]
    %v684 = vld [vmem:[#allocation5 + $0x890] sm:$0xf]
    %v685 = vld [vmem:[#allocation5 + $0x894] sm:$0xf]
    %v686 = vld [vmem:[#allocation5 + $0x898] sm:$0xf]
    %v687 = vld [vmem:[#allocation5 + $0x89c] sm:$0xf]
    %v688 = vld [vmem:[#allocation5 + $0x8a0] sm:$0xf]
    %v689 = vld [vmem:[#allocation5 + $0x8a4] sm:$0xf]
    %v690 = vld [vmem:[#allocation5 + $0x8a8] sm:$0xf]
    %v691 = vld [vmem:[#allocation5 + $0x8ac] sm:$0xf]
    %v692 = vld [vmem:[#allocation5 + $0x8b0] sm:$0xf]
    %v693 = vld [vmem:[#allocation5 + $0x8b4] sm:$0xf]
    %v694 = vld [vmem:[#allocation5 + $0x8b8] sm:$0xf]
    %v695 = vld [vmem:[#allocation5 + $0x8bc] sm:$0xf]
    %v696 = vld [vmem:[#allocation5 + $0x8c0] sm:$0xf]
    %v697 = vld [vmem:[#allocation5 + $0x8c4] sm:$0xf]
    %v698 = vld [vmem:[#allocation5 + $0x8c8] sm:$0xf]
    %v699 = vld [vmem:[#allocation5 + $0x8cc] sm:$0xf]
    %v700 = vld [vmem:[#allocation5 + $0x8d0] sm:$0xf]
    %v701 = vld [vmem:[#allocation5 + $0x8d4] sm:$0xf]
    %v702 = vld [vmem:[#allocation5 + $0x8d8] sm:$0xf]
    %v703 = vld [vmem:[#allocation5 + $0x8dc] sm:$0xf]
    %v704 = vld [vmem:[#allocation5 + $0x8e0] sm:$0xf]
    %v705 = vld [vmem:[#allocation5 + $0x8e4] sm:$0xf]
    %v706 = vld [vmem:[#allocation5 + $0x8e8] sm:$0xf]
    %v707 = vld [vmem:[#allocation5 + $0x8ec] sm:$0xf]
    %v708 = vld [vmem:[#allocation5 + $0x8f0] sm:$0xf]
    %v709 = vld [vmem:[#allocation5 + $0x8f4] sm:$0xf]
    %v710 = vld [vmem:[#allocation5 + $0x8f8] sm:$0xf]
    %v711 = vld [vmem:[#allocation5 + $0x8fc] sm:$0xf]
    %v712 = vld [vmem:[#allocation5 + $0x900] sm:$0xf]
    %v713 = vld [vmem:[#allocation5 + $0x904] sm:$0xf]
    %v714 = vld [vmem:[#allocation5 + $0x908] sm:$0xf]
    %v715 = vld [vmem:[#allocation5 + $0x90c] sm:$0xf]
    %v716 = vld [vmem:[#allocation5 + $0x910] sm:$0xf]
    %v717 = vld [vmem:[#allocation5 + $0x914] sm:$0xf]
    %v718 = vld [vmem:[#allocation5 + $0x918] sm:$0xf]
    %v719 = vld [vmem:[#allocation5 + $0x91c] sm:$0xf]
    %v720 = vld [vmem:[#allocation5 + $0x920] sm:$0xf]
    %v721 = vld [vmem:[#allocation5 + $0x924] sm:$0xf]
    %v722 = vld [vmem:[#allocation5 + $0x928] sm:$0xf]
    %v723 = vld [vmem:[#allocation5 + $0x92c] sm:$0xf]
    %v724 = vld [vmem:[#allocation5 + $0x930] sm:$0xf]
    %v725 = vld [vmem:[#allocation5 + $0x934] sm:$0xf]
    %v726 = vld [vmem:[#allocation5 + $0x938] sm:$0xf]
    %v727 = vld [vmem:[#allocation5 + $0x93c] sm:$0xf]
    %v728 = vld [vmem:[#allocation5 + $0x940] sm:$0xf]
    %v729 = vld [vmem:[#allocation5 + $0x944] sm:$0xf]
    %v730 = vld [vmem:[#allocation5 + $0x948] sm:$0xf]
    %v731 = vld [vmem:[#allocation5 + $0x94c] sm:$0xf]
    %v732 = vld [vmem:[#allocation5 + $0x950] sm:$0xf]
    %v733 = vld [vmem:[#allocation5 + $0x954] sm:$0xf]
    %v734 = vld [vmem:[#allocation5 + $0x958] sm:$0xf]
    %v735 = vld [vmem:[#allocation5 + $0x95c] sm:$0xf]
    %v736 = vld [vmem:[#allocation5 + $0x960] sm:$0xf]
    %v737 = vld [vmem:[#allocation5 + $0x964] sm:$0xf]
    %v738 = vld [vmem:[#allocation5 + $0x968] sm:$0xf]
    %v739 = vld [vmem:[#allocation5 + $0x96c] sm:$0xf]
    %v740 = vld [vmem:[#allocation5 + $0x970] sm:$0xf]
    %v741 = vld [vmem:[#allocation5 + $0x974] sm:$0xf]
    %v742 = vld [vmem:[#allocation5 + $0x978] sm:$0xf]
    %v743 = vld [vmem:[#allocation5 + $0x97c] sm:$0xf]
    %v744 = vld [vmem:[#allocation5 + $0x980] sm:$0xf]
    %v745 = vld [vmem:[#allocation5 + $0x984] sm:$0xf]
    %v746 = vld [vmem:[#allocation5 + $0x988] sm:$0xf]
    %v747 = vld [vmem:[#allocation5 + $0x98c] sm:$0xf]
    %v748 = vld [vmem:[#allocation5 + $0x990] sm:$0xf]
    %v749 = vld [vmem:[#allocation5 + $0x994] sm:$0xf]
    %v750 = vld [vmem:[#allocation5 + $0x998] sm:$0xf]
    %v751 = vld [vmem:[#allocation5 + $0x99c] sm:$0xf]
    %v752 = vld [vmem:[#allocation5 + $0x9a0] sm:$0xf]
    %v753 = vld [vmem:[#allocation5 + $0x9a4] sm:$0xf]
    %v754 = vld [vmem:[#allocation5 + $0x9a8] sm:$0xf]
    %v755 = vld [vmem:[#allocation5 + $0x9ac] sm:$0xf]
    %v756 = vld [vmem:[#allocation5 + $0x9b0] sm:$0xf]
    %v757 = vld [vmem:[#allocation5 + $0x9b4] sm:$0xf]
    %v758 = vld [vmem:[#allocation5 + $0x9b8] sm:$0xf]
    %v759 = vld [vmem:[#allocation5 + $0x9bc] sm:$0xf]
    %v760 = vld [vmem:[#allocation5 + $0x9c0] sm:$0xf]
    %v761 = vld [vmem:[#allocation5 + $0x9c4] sm:$0xf]
    %v762 = vld [vmem:[#allocation5 + $0x9c8] sm:$0xf]
    %v763 = vld [vmem:[#allocation5 + $0x9cc] sm:$0xf]
    %v764 = vld [vmem:[#allocation5 + $0x9d0] sm:$0xf]
    %v765 = vld [vmem:[#allocation5 + $0x9d4] sm:$0xf]
    %v766 = vld [vmem:[#allocation5 + $0x9d8] sm:$0xf]
    %v767 = vld [vmem:[#allocation5 + $0x9dc] sm:$0xf]
    %v768 = vld [vmem:[#allocation5 + $0x9e0] sm:$0xf]
    %v769 = vld [vmem:[#allocation5 + $0x9e4] sm:$0xf]
    %v770 = vld [vmem:[#allocation5 + $0x9e8] sm:$0xf]
    %v771 = vld [vmem:[#allocation5 + $0x9ec] sm:$0xf]
    %v772 = vld [vmem:[#allocation5 + $0x9f0] sm:$0xf]
    %v773 = vld [vmem:[#allocation5 + $0x9f4] sm:$0xf]
    %v774 = vld [vmem:[#allocation5 + $0x9f8] sm:$0xf]
    %v775 = vld [vmem:[#allocation5 + $0x9fc] sm:$0xf]
    %v776 = vld [vmem:[#allocation5 + $0xa00] sm:$0xf]
    %v777 = vld [vmem:[#allocation5 + $0xa04] sm:$0xf]
    %v778 = vld [vmem:[#allocation5 + $0xa08] sm:$0xf]
    %v779 = vld [vmem:[#allocation5 + $0xa0c] sm:$0xf]
    %v780 = vld [vmem:[#allocation5 + $0xa10] sm:$0xf]
    %v781 = vld [vmem:[#allocation5 + $0xa14] sm:$0xf]
    %v782 = vld [vmem:[#allocation5 + $0xa18] sm:$0xf]
    %v783 = vld [vmem:[#allocation5 + $0xa1c] sm:$0xf]
    %v784 = vld [vmem:[#allocation5 + $0xa20] sm:$0xf]
    %v785 = vld [vmem:[#allocation5 + $0xa24] sm:$0xf]
    %v786 = vld [vmem:[#allocation5 + $0xa28] sm:$0xf]
    %v787 = vld [vmem:[#allocation5 + $0xa2c] sm:$0xf]
    %v788 = vld [vmem:[#allocation5 + $0xa30] sm:$0xf]
    %v789 = vld [vmem:[#allocation5 + $0xa34] sm:$0xf]
    %v790 = vld [vmem:[#allocation5 + $0xa38] sm:$0xf]
    %v791 = vld [vmem:[#allocation5 + $0xa3c] sm:$0xf]
    %v792 = vld [vmem:[#allocation5 + $0xa40] sm:$0xf]
    %v793 = vld [vmem:[#allocation5 + $0xa44] sm:$0xf]
    %v794 = vld [vmem:[#allocation5 + $0xa48] sm:$0xf]
    %v795 = vld [vmem:[#allocation5 + $0xa4c] sm:$0xf]
    %v796 = vld [vmem:[#allocation5 + $0xa50] sm:$0xf]
    %v797 = vld [vmem:[#allocation5 + $0xa54] sm:$0xf]
    %v798 = vld [vmem:[#allocation5 + $0xa58] sm:$0xf]
    %v799 = vld [vmem:[#allocation5 + $0xa5c] sm:$0xf]
    %v800 = vld [vmem:[#allocation5 + $0xa60] sm:$0xf]
    %v801 = vld [vmem:[#allocation5 + $0xa64] sm:$0xf]
    %v802 = vld [vmem:[#allocation5 + $0xa68] sm:$0xf]
    %v803 = vld [vmem:[#allocation5 + $0xa6c] sm:$0xf]
    %v804 = vld [vmem:[#allocation5 + $0xa70] sm:$0xf]
    %v805 = vld [vmem:[#allocation5 + $0xa74] sm:$0xf]
    %v806 = vld [vmem:[#allocation5 + $0xa78] sm:$0xf]
    %v807 = vld [vmem:[#allocation5 + $0xa7c] sm:$0xf]
    %v808 = vld [vmem:[#allocation5 + $0xa80] sm:$0xf]
    %v809 = vld [vmem:[#allocation5 + $0xa84] sm:$0xf]
    %v810 = vld [vmem:[#allocation5 + $0xa88] sm:$0xf]
    %v811 = vld [vmem:[#allocation5 + $0xa8c] sm:$0xf]
    %v812 = vld [vmem:[#allocation5 + $0xa90] sm:$0xf]
    %v813 = vld [vmem:[#allocation5 + $0xa94] sm:$0xf]
    %v814 = vld [vmem:[#allocation5 + $0xa98] sm:$0xf]
    %v815 = vld [vmem:[#allocation5 + $0xa9c] sm:$0xf]
    %v816 = vld [vmem:[#allocation5 + $0xaa0] sm:$0xf]
    %v817 = vld [vmem:[#allocation5 + $0xaa4] sm:$0xf]
    %v818 = vld [vmem:[#allocation5 + $0xaa8] sm:$0xf]
    %v819 = vld [vmem:[#allocation5 + $0xaac] sm:$0xf]
    %v820 = vld [vmem:[#allocation5 + $0xab0] sm:$0xf]
    %v821 = vld [vmem:[#allocation5 + $0xab4] sm:$0xf]
    %v822 = vld [vmem:[#allocation5 + $0xab8] sm:$0xf]
    %v823 = vld [vmem:[#allocation5 + $0xabc] sm:$0xf]
    %v824 = vld [vmem:[#allocation5 + $0xac0] sm:$0xf]
    %v825 = vld [vmem:[#allocation5 + $0xac4] sm:$0xf]
    %v826 = vld [vmem:[#allocation5 + $0xac8] sm:$0xf]
    %v827 = vld [vmem:[#allocation5 + $0xacc] sm:$0xf]
    %v828 = vld [vmem:[#allocation5 + $0xad0] sm:$0xf]
    %v829 = vld [vmem:[#allocation5 + $0xad4] sm:$0xf]
    %v830 = vld [vmem:[#allocation5 + $0xad8] sm:$0xf]
    %v831 = vld [vmem:[#allocation5 + $0xadc] sm:$0xf]
    %v832 = vld [vmem:[#allocation5 + $0xae0] sm:$0xf]
    %v833 = vld [vmem:[#allocation5 + $0xae4] sm:$0xf]
    %v834 = vld [vmem:[#allocation5 + $0xae8] sm:$0xf]
    %v835 = vld [vmem:[#allocation5 + $0xaec] sm:$0xf]
    %v836 = vld [vmem:[#allocation5 + $0xaf0] sm:$0xf]
    %v837 = vld [vmem:[#allocation5 + $0xaf4] sm:$0xf]
    %v838 = vld [vmem:[#allocation5 + $0xaf8] sm:$0xf]
    %v839 = vld [vmem:[#allocation5 + $0xafc] sm:$0xf]
    %v840 = vld [vmem:[#allocation5 + $0xb00] sm:$0xf]
    %v841 = vld [vmem:[#allocation5 + $0xb04] sm:$0xf]
    %v842 = vld [vmem:[#allocation5 + $0xb08] sm:$0xf]
    %v843 = vld [vmem:[#allocation5 + $0xb0c] sm:$0xf]
    %v844 = vld [vmem:[#allocation5 + $0xb10] sm:$0xf]
    %v845 = vld [vmem:[#allocation5 + $0xb14] sm:$0xf]
    %v846 = vld [vmem:[#allocation5 + $0xb18] sm:$0xf]
    %v847 = vld [vmem:[#allocation5 + $0xb1c] sm:$0xf]
    %v848 = vld [vmem:[#allocation5 + $0xb20] sm:$0xf]
    %v849 = vld [vmem:[#allocation5 + $0xb24] sm:$0xf]
    %v850 = vld [vmem:[#allocation5 + $0xb28] sm:$0xf]
    %v851 = vld [vmem:[#allocation5 + $0xb2c] sm:$0xf]
    %v852 = vld [vmem:[#allocation5 + $0xb30] sm:$0xf]
    %v853 = vld [vmem:[#allocation5 + $0xb34] sm:$0xf]
    %v854 = vld [vmem:[#allocation5 + $0xb38] sm:$0xf]
    %v855 = vld [vmem:[#allocation5 + $0xb3c] sm:$0xf]
    %v856 = vld [vmem:[#allocation5 + $0xb40] sm:$0xf]
    %v857 = vld [vmem:[#allocation5 + $0xb44] sm:$0xf]
    %v858 = vld [vmem:[#allocation5 + $0xb48] sm:$0xf]
    %v859 = vld [vmem:[#allocation5 + $0xb4c] sm:$0xf]
    %v860 = vld [vmem:[#allocation5 + $0xb50] sm:$0xf]
    %v861 = vld [vmem:[#allocation5 + $0xb54] sm:$0xf]
    %v862 = vld [vmem:[#allocation5 + $0xb58] sm:$0xf]
    %v863 = vld [vmem:[#allocation5 + $0xb5c] sm:$0xf]
    %v864 = vld [vmem:[#allocation5 + $0xb60] sm:$0xf]
    %v865 = vld [vmem:[#allocation5 + $0xb64] sm:$0xf]
    %v866 = vld [vmem:[#allocation5 + $0xb68] sm:$0xf]
    %v867 = vld [vmem:[#allocation5 + $0xb6c] sm:$0xf]
    %v868 = vld [vmem:[#allocation5 + $0xb70] sm:$0xf]
    %v869 = vld [vmem:[#allocation5 + $0xb74] sm:$0xf]
    %v870 = vld [vmem:[#allocation5 + $0xb78] sm:$0xf]
    %v871 = vld [vmem:[#allocation5 + $0xb7c] sm:$0xf]
    %v872 = vld [vmem:[#allocation5 + $0xb80] sm:$0xf]
    %v873 = vld [vmem:[#allocation5 + $0xb84] sm:$0xf]
    %v874 = vld [vmem:[#allocation5 + $0xb88] sm:$0xf]
    %v875 = vld [vmem:[#allocation5 + $0xb8c] sm:$0xf]
    %v876 = vld [vmem:[#allocation5 + $0xb90] sm:$0xf]
    %v877 = vld [vmem:[#allocation5 + $0xb94] sm:$0xf]
    %v878 = vld [vmem:[#allocation5 + $0xb98] sm:$0xf]
    %v879 = vld [vmem:[#allocation5 + $0xb9c] sm:$0xf]
    %v880 = vld [vmem:[#allocation5 + $0xba0] sm:$0xf]
    %v881 = vld [vmem:[#allocation5 + $0xba4] sm:$0xf]
    %v882 = vld [vmem:[#allocation5 + $0xba8] sm:$0xf]
    %v883 = vld [vmem:[#allocation5 + $0xbac] sm:$0xf]
    %v884 = vld [vmem:[#allocation5 + $0xbb0] sm:$0xf]
    %v885 = vld [vmem:[#allocation5 + $0xbb4] sm:$0xf]
    %v886 = vld [vmem:[#allocation5 + $0xbb8] sm:$0xf]
    %v887 = vld [vmem:[#allocation5 + $0xbbc] sm:$0xf]
    %v888 = vld [vmem:[#allocation5 + $0xbc0] sm:$0xf]
    %v889 = vld [vmem:[#allocation5 + $0xbc4] sm:$0xf]
    %v890 = vld [vmem:[#allocation5 + $0xbc8] sm:$0xf]
    %v891 = vld [vmem:[#allocation5 + $0xbcc] sm:$0xf]
    %v892 = vld [vmem:[#allocation5 + $0xbd0] sm:$0xf]
    %v893 = vld [vmem:[#allocation5 + $0xbd4] sm:$0xf]
    %v894 = vld [vmem:[#allocation5 + $0xbd8] sm:$0xf]
    %v895 = vld [vmem:[#allocation5 + $0xbdc] sm:$0xf]
    %v896 = vld [vmem:[#allocation5 + $0xbe0] sm:$0xf]
    %v897 = vld [vmem:[#allocation5 + $0xbe4] sm:$0xf]
    %v898 = vld [vmem:[#allocation5 + $0xbe8] sm:$0xf]
    %v899 = vld [vmem:[#allocation5 + $0xbec] sm:$0xf]
    %v900 = vld [vmem:[#allocation5 + $0xbf0] sm:$0xf]
    %v901 = vld [vmem:[#allocation5 + $0xbf4] sm:$0xf]
    %v902 = vld [vmem:[#allocation5 + $0xbf8] sm:$0xf]
    %v903 = vld [vmem:[#allocation5 + $0xbfc] sm:$0xf]
    %v904 = vld [vmem:[#allocation5 + $0xc00] sm:$0xf]
    %v905 = vld [vmem:[#allocation5 + $0xc04] sm:$0xf]
    %v906 = vld [vmem:[#allocation5 + $0xc08] sm:$0xf]
    %v907 = vld [vmem:[#allocation5 + $0xc0c] sm:$0xf]
    %v908 = vld [vmem:[#allocation5 + $0xc10] sm:$0xf]
    %v909 = vld [vmem:[#allocation5 + $0xc14] sm:$0xf]
    %v910 = vld [vmem:[#allocation5 + $0xc18] sm:$0xf]
    %v911 = vld [vmem:[#allocation5 + $0xc1c] sm:$0xf]
    %v912 = vld [vmem:[#allocation5 + $0xc20] sm:$0xf]
    %v913 = vld [vmem:[#allocation5 + $0xc24] sm:$0xf]
    %v914 = vld [vmem:[#allocation5 + $0xc28] sm:$0xf]
    %v915 = vld [vmem:[#allocation5 + $0xc2c] sm:$0xf]
    %v916 = vld [vmem:[#allocation5 + $0xc30] sm:$0xf]
    %v917 = vld [vmem:[#allocation5 + $0xc34] sm:$0xf]
    %v918 = vld [vmem:[#allocation5 + $0xc38] sm:$0xf]
    %v919 = vld [vmem:[#allocation5 + $0xc3c] sm:$0xf]
    %v920 = vld [vmem:[#allocation5 + $0xc40] sm:$0xf]
    %v921 = vld [vmem:[#allocation5 + $0xc44] sm:$0xf]
    %v922 = vld [vmem:[#allocation5 + $0xc48] sm:$0xf]
    %v923 = vld [vmem:[#allocation5 + $0xc4c] sm:$0xf]
    %v924 = vld [vmem:[#allocation5 + $0xc50] sm:$0xf]
    %v925 = vld [vmem:[#allocation5 + $0xc54] sm:$0xf]
    %v926 = vld [vmem:[#allocation5 + $0xc58] sm:$0xf]
    %v927 = vld [vmem:[#allocation5 + $0xc5c] sm:$0xf]
    %v928 = vld [vmem:[#allocation5 + $0xc60] sm:$0xf]
    %v929 = vld [vmem:[#allocation5 + $0xc64] sm:$0xf]
    %v930 = vld [vmem:[#allocation5 + $0xc68] sm:$0xf]
    %v931 = vld [vmem:[#allocation5 + $0xc6c] sm:$0xf]
    %v932 = vld [vmem:[#allocation5 + $0xc70] sm:$0xf]
    %v933 = vld [vmem:[#allocation5 + $0xc74] sm:$0xf]
    %v934 = vld [vmem:[#allocation5 + $0xc78] sm:$0xf]
    %v935 = vld [vmem:[#allocation5 + $0xc7c] sm:$0xf]
    %v936 = vld [vmem:[#allocation5 + $0xc80] sm:$0xf]
    %v937 = vld [vmem:[#allocation5 + $0xc84] sm:$0xf]
    %v938 = vld [vmem:[#allocation5 + $0xc88] sm:$0xf]
    %v939 = vld [vmem:[#allocation5 + $0xc8c] sm:$0xf]
    %v940 = vld [vmem:[#allocation5 + $0xc90] sm:$0xf]
    %v941 = vld [vmem:[#allocation5 + $0xc94] sm:$0xf]
    %v942 = vld [vmem:[#allocation5 + $0xc98] sm:$0xf]
    %v943 = vld [vmem:[#allocation5 + $0xc9c] sm:$0xf]
    %v944 = vld [vmem:[#allocation5 + $0xca0] sm:$0xf]
    %v945 = vld [vmem:[#allocation5 + $0xca4] sm:$0xf]
    %v946 = vld [vmem:[#allocation5 + $0xca8] sm:$0xf]
    %v947 = vld [vmem:[#allocation5 + $0xcac] sm:$0xf]
    %v948 = vld [vmem:[#allocation5 + $0xcb0] sm:$0xf]
    %v949 = vld [vmem:[#allocation5 + $0xcb4] sm:$0xf]
    %v950 = vld [vmem:[#allocation5 + $0xcb8] sm:$0xf]
    %v951 = vld [vmem:[#allocation5 + $0xcbc] sm:$0xf]
    %v952 = vld [vmem:[#allocation5 + $0xcc0] sm:$0xf]
    %v953 = vld [vmem:[#allocation5 + $0xcc4] sm:$0xf]
    %v954 = vld [vmem:[#allocation5 + $0xcc8] sm:$0xf]
    %v955 = vld [vmem:[#allocation5 + $0xccc] sm:$0xf]
    %v956 = vld [vmem:[#allocation5 + $0xcd0] sm:$0xf]
    %v957 = vld [vmem:[#allocation5 + $0xcd4] sm:$0xf]
    %v958 = vld [vmem:[#allocation5 + $0xcd8] sm:$0xf]
    %v959 = vld [vmem:[#allocation5 + $0xcdc] sm:$0xf]
    %v960 = vld [vmem:[#allocation5 + $0xce0] sm:$0xf]
    %v961 = vld [vmem:[#allocation5 + $0xce4] sm:$0xf]
    %v962 = vld [vmem:[#allocation5 + $0xce8] sm:$0xf]
    %v963 = vld [vmem:[#allocation5 + $0xcec] sm:$0xf]
    %v964 = vld [vmem:[#allocation5 + $0xcf0] sm:$0xf]
    %v965 = vld [vmem:[#allocation5 + $0xcf4] sm:$0xf]
    %v966 = vld [vmem:[#allocation5 + $0xcf8] sm:$0xf]
    %v967 = vld [vmem:[#allocation5 + $0xcfc] sm:$0xf]
    %v968 = vld [vmem:[#allocation7] sm:$0x1]
    %v970 = vlaneseq
    %v971 = vshrl.u32 %v970, 7
    %v972 = vsub.s32 0, %v971
    %v973 = vrot.slane %v968, %v972
    %v1001 = vunpack.c.l.b16 %v110
    %v1002 = vunpack.c.h.b16 %v110
    %v1003 = vunpack.c.l.b16 %v111
    %v1004 = vunpack.c.h.b16 %v111
    %v1005 = vunpack.c.l.b16 %v112
    %v1006 = vunpack.c.h.b16 %v112
    %v1007 = vunpack.c.l.b16 %v113
    %v1008 = vunpack.c.h.b16 %v113
    %v1009 = vunpack.c.l.b16 %v114
    %v1010 = vunpack.c.h.b16 %v114
    %v1011 = vunpack.c.l.b16 %v115
    %v1012 = vunpack.c.h.b16 %v115
    %v1013 = vunpack.c.l.b16 %v116
    %v1014 = vunpack.c.h.b16 %v116
    %v1015 = vunpack.c.l.b16 %v117
    %v1016 = vunpack.c.h.b16 %v117
    %v1017 = vunpack.c.l.b16 %v118
    %v1018 = vunpack.c.h.b16 %v118
    %v1019 = vunpack.c.l.b16 %v119
    %v1020 = vunpack.c.h.b16 %v119
    %v1021 = vunpack.c.l.b16 %v120
    %v1022 = vunpack.c.h.b16 %v120
    %v1023 = vunpack.c.l.b16 %v121
    %v1024 = vunpack.c.h.b16 %v121
    %v1025 = vunpack.c.l.b16 %v122
    %v1026 = vunpack.c.h.b16 %v122
    %v1027 = vunpack.c.l.b16 %v123
    %v1028 = vunpack.c.h.b16 %v123
    %v1029 = vunpack.c.l.b16 %v124
    %v1030 = vunpack.c.h.b16 %v124
    %v1031 = vunpack.c.l.b16 %v125
    %v1032 = vunpack.c.h.b16 %v125
    %v1033 = vunpack.c.l.b16 %v126
    %v1034 = vunpack.c.h.b16 %v126
    %v1035 = vunpack.c.l.b16 %v127
    %v1036 = vunpack.c.h.b16 %v127
    %v1037 = vunpack.c.l.b16 %v128
    %v1038 = vunpack.c.h.b16 %v128
    %v1039 = vunpack.c.l.b16 %v129
    %v1040 = vunpack.c.h.b16 %v129
    %v1041 = vunpack.c.l.b16 %v130
    %v1042 = vunpack.c.h.b16 %v130
    %v1043 = vunpack.c.l.b16 %v131
    %v1044 = vunpack.c.h.b16 %v131
    %v1045 = vunpack.c.l.b16 %v132
    %v1046 = vunpack.c.h.b16 %v132
    %v1047 = vunpack.c.l.b16 %v133
    %v1048 = vunpack.c.h.b16 %v133
    %v1049 = vunpack.c.l.b16 %v134
    %v1050 = vunpack.c.h.b16 %v134
    %v1051 = vunpack.c.l.b16 %v135
    %v1052 = vunpack.c.h.b16 %v135
    %v1053 = vpack.c.b16 %v1001, %v1001
    %v1054 = vpack.c.b16 %v1002, %v1002
    %v1055 = vpack.c.b16 %v1003, %v1003
    %v1056 = vpack.c.b16 %v1004, %v1004
    %v1057 = vpack.c.b16 %v1005, %v1005
    %v1058 = vpack.c.b16 %v1006, %v1006
    %v1059 = vpack.c.b16 %v1007, %v1007
    %v1060 = vpack.c.b16 %v1008, %v1008
    %v1061 = vpack.c.b16 %v1009, %v1009
    %v1062 = vpack.c.b16 %v1010, %v1010
    %v1063 = vpack.c.b16 %v1011, %v1011
    %v1064 = vpack.c.b16 %v1012, %v1012
    %v1065 = vpack.c.b16 %v1013, %v1013
    %v1066 = vpack.c.b16 %v1014, %v1014
    %v1067 = vpack.c.b16 %v1015, %v1015
    %v1068 = vpack.c.b16 %v1016, %v1016
    %v1069 = vpack.c.b16 %v1017, %v1017
    %v1070 = vpack.c.b16 %v1018, %v1018
    %v1071 = vpack.c.b16 %v1019, %v1019
    %v1072 = vpack.c.b16 %v1020, %v1020
    %v1073 = vpack.c.b16 %v1021, %v1021
    %v1074 = vpack.c.b16 %v1022, %v1022
    %v1075 = vpack.c.b16 %v1023, %v1023
    %v1076 = vpack.c.b16 %v1024, %v1024
    %v1077 = vpack.c.b16 %v1025, %v1025
    %v1078 = vpack.c.b16 %v1026, %v1026
    %v1079 = vpack.c.b16 %v1027, %v1027
    %v1080 = vpack.c.b16 %v1028, %v1028
    %v1081 = vpack.c.b16 %v1029, %v1029
    %v1082 = vpack.c.b16 %v1030, %v1030
    %v1083 = vpack.c.b16 %v1031, %v1031
    %v1084 = vpack.c.b16 %v1032, %v1032
    %v1085 = vpack.c.b16 %v1033, %v1033
    %v1086 = vpack.c.b16 %v1034, %v1034
    %v1087 = vpack.c.b16 %v1035, %v1035
    %v1088 = vpack.c.b16 %v1036, %v1036
    %v1089 = vpack.c.b16 %v1037, %v1037
    %v1090 = vpack.c.b16 %v1038, %v1038
    %v1091 = vpack.c.b16 %v1039, %v1039
    %v1092 = vpack.c.b16 %v1040, %v1040
    %v1093 = vpack.c.b16 %v1041, %v1041
    %v1094 = vpack.c.b16 %v1042, %v1042
    %v1095 = vpack.c.b16 %v1043, %v1043
    %v1096 = vpack.c.b16 %v1044, %v1044
    %v1097 = vpack.c.b16 %v1045, %v1045
    %v1098 = vpack.c.b16 %v1046, %v1046
    %v1099 = vpack.c.b16 %v1047, %v1047
    %v1100 = vpack.c.b16 %v1048, %v1048
    %v1101 = vpack.c.b16 %v1049, %v1049
    %v1102 = vpack.c.b16 %v1050, %v1050
    %v1103 = vpack.c.b16 %v1051, %v1051
    %v1104 = vpack.c.b16 %v1052, %v1052
    %v1989 = vunpack.c.l.b16 %v136
    %v1990 = vunpack.c.l.b16 %v137
    %v1991 = vunpack.c.l.b16 %v138
    %v1992 = vunpack.c.l.b16 %v139
    %v1993 = vunpack.c.l.b16 %v140
    %v1994 = vunpack.c.l.b16 %v141
    %v1995 = vunpack.c.l.b16 %v142
    %v1996 = vunpack.c.l.b16 %v143
    %v1997 = vunpack.c.l.b16 %v144
    %v1998 = vunpack.c.l.b16 %v145
    %v1999 = vunpack.c.l.b16 %v146
    %v2000 = vunpack.c.l.b16 %v147
    %v2001 = vunpack.c.l.b16 %v148
    %v2002 = vunpack.c.l.b16 %v149
    %v2003 = vunpack.c.l.b16 %v150
    %v2004 = vunpack.c.l.b16 %v151
    %v2005 = vunpack.c.l.b16 %v152
    %v2006 = vunpack.c.l.b16 %v153
    %v2007 = vunpack.c.l.b16 %v154
    %v2008 = vunpack.c.l.b16 %v155
    %v2009 = vunpack.c.l.b16 %v156
    %v2010 = vunpack.c.l.b16 %v157
    %v2011 = vunpack.c.l.b16 %v158
    %v2012 = vunpack.c.l.b16 %v159
    %v2013 = vunpack.c.l.b16 %v160
    %v2014 = vunpack.c.l.b16 %v161
    %v2015 = vunpack.c.l.b16 %v162
    %v2016 = vunpack.c.l.b16 %v163
    %v2017 = vunpack.c.l.b16 %v164
    %v2018 = vunpack.c.l.b16 %v165
    %v2019 = vunpack.c.l.b16 %v166
    %v2020 = vunpack.c.l.b16 %v167
    %v2021 = vunpack.c.l.b16 %v168
    %v2022 = vunpack.c.l.b16 %v169
    %v2023 = vunpack.c.l.b16 %v170
    %v2024 = vunpack.c.l.b16 %v171
    %v2025 = vunpack.c.l.b16 %v172
    %v2026 = vunpack.c.l.b16 %v173
    %v2027 = vunpack.c.l.b16 %v174
    %v2028 = vunpack.c.l.b16 %v175
    %v2029 = vunpack.c.l.b16 %v176
    %v2030 = vunpack.c.l.b16 %v177
    %v2031 = vunpack.c.l.b16 %v178
    %v2032 = vunpack.c.l.b16 %v179
    %v2033 = vunpack.c.l.b16 %v180
    %v2034 = vunpack.c.l.b16 %v181
    %v2035 = vunpack.c.l.b16 %v182
    %v2036 = vunpack.c.l.b16 %v183
    %v2037 = vunpack.c.l.b16 %v184
    %v2038 = vunpack.c.l.b16 %v185
    %v2039 = vunpack.c.l.b16 %v186
    %v2040 = vunpack.c.l.b16 %v187
    %v2041 = vunpack.c.l.b16 %v188
    %v2042 = vunpack.c.l.b16 %v189
    %v2043 = vunpack.c.l.b16 %v190
    %v2044 = vunpack.c.l.b16 %v191
    %v2045 = vunpack.c.l.b16 %v192
    %v2046 = vunpack.c.l.b16 %v193
    %v2047 = vunpack.c.l.b16 %v194
    %v2048 = vunpack.c.l.b16 %v195
    %v2049 = vunpack.c.l.b16 %v196
    %v2050 = vunpack.c.l.b16 %v197
    %v2051 = vunpack.c.l.b16 %v198
    %v2052 = vunpack.c.l.b16 %v199
    %v2053 = vunpack.c.l.b16 %v200
    %v2054 = vunpack.c.l.b16 %v201
    %v2055 = vunpack.c.l.b16 %v202
    %v2056 = vunpack.c.l.b16 %v203
    %v2057 = vunpack.c.l.b16 %v204
    %v2058 = vunpack.c.l.b16 %v205
    %v2059 = vunpack.c.l.b16 %v206
    %v2060 = vunpack.c.l.b16 %v207
    %v2061 = vunpack.c.l.b16 %v208
    %v2062 = vunpack.c.l.b16 %v209
    %v2063 = vunpack.c.l.b16 %v210
    %v2064 = vunpack.c.l.b16 %v211
    %v2065 = vunpack.c.l.b16 %v212
    %v2066 = vunpack.c.l.b16 %v213
    %v2067 = vunpack.c.l.b16 %v214
    %v2068 = vunpack.c.l.b16 %v215
    %v2069 = vunpack.c.l.b16 %v216
    %v2070 = vunpack.c.l.b16 %v217
    %v2071 = vunpack.c.l.b16 %v218
    %v2072 = vunpack.c.l.b16 %v219
    %v2073 = vunpack.c.l.b16 %v220
    %v2074 = vunpack.c.l.b16 %v221
    %v2075 = vunpack.c.l.b16 %v222
    %v2076 = vunpack.c.l.b16 %v223
    %v2077 = vunpack.c.l.b16 %v224
    %v2078 = vunpack.c.l.b16 %v225
    %v2079 = vunpack.c.l.b16 %v226
    %v2080 = vunpack.c.l.b16 %v227
    %v2081 = vunpack.c.l.b16 %v228
    %v2082 = vunpack.c.l.b16 %v229
    %v2083 = vunpack.c.l.b16 %v230
    %v2084 = vunpack.c.l.b16 %v231
    %v2085 = vunpack.c.l.b16 %v232
    %v2086 = vunpack.c.l.b16 %v233
    %v2087 = vunpack.c.l.b16 %v234
    %v2088 = vunpack.c.l.b16 %v235
    %v2089 = vunpack.c.l.b16 %v236
    %v2090 = vunpack.c.l.b16 %v237
    %v2091 = vunpack.c.l.b16 %v238
    %v2092 = vunpack.c.l.b16 %v239
    %v2093 = vunpack.c.l.b16 %v240
    %v2094 = vunpack.c.l.b16 %v241
    %v2095 = vunpack.c.l.b16 %v242
    %v2096 = vunpack.c.l.b16 %v243
    %v2097 = vunpack.c.l.b16 %v244
    %v2098 = vunpack.c.l.b16 %v245
    %v2099 = vunpack.c.l.b16 %v246
    %v2100 = vunpack.c.l.b16 %v247
    %v2101 = vunpack.c.l.b16 %v248
    %v2102 = vunpack.c.l.b16 %v249
    %v2103 = vunpack.c.l.b16 %v250
    %v2104 = vunpack.c.l.b16 %v251
    %v2105 = vunpack.c.l.b16 %v252
    %v2106 = vunpack.c.l.b16 %v253
    %v2107 = vunpack.c.l.b16 %v254
    %v2108 = vunpack.c.l.b16 %v255
    %v2109 = vunpack.c.l.b16 %v256
    %v2110 = vunpack.c.l.b16 %v257
    %v2111 = vunpack.c.l.b16 %v258
    %v2112 = vunpack.c.l.b16 %v259
    %v2113 = vunpack.c.l.b16 %v260
    %v2114 = vunpack.c.l.b16 %v261
    %v2115 = vunpack.c.l.b16 %v262
    %v2116 = vunpack.c.l.b16 %v263
    %v2117 = vunpack.c.l.b16 %v264
    %v2118 = vunpack.c.l.b16 %v265
    %v2119 = vunpack.c.l.b16 %v266
    %v2120 = vunpack.c.l.b16 %v267
    %v2121 = vunpack.c.l.b16 %v268
    %v2122 = vunpack.c.l.b16 %v269
    %v2123 = vunpack.c.l.b16 %v270
    %v2124 = vunpack.c.l.b16 %v271
    %v2125 = vunpack.c.l.b16 %v272
    %v2126 = vunpack.c.l.b16 %v273
    %v2127 = vunpack.c.l.b16 %v274
    %v2128 = vunpack.c.l.b16 %v275
    %v2129 = vunpack.c.l.b16 %v276
    %v2130 = vunpack.c.l.b16 %v277
    %v2131 = vunpack.c.l.b16 %v278
    %v2132 = vunpack.c.l.b16 %v279
    %v2133 = vunpack.c.l.b16 %v280
    %v2134 = vunpack.c.l.b16 %v281
    %v2135 = vunpack.c.l.b16 %v282
    %v2136 = vunpack.c.l.b16 %v283
    %v2137 = vunpack.c.l.b16 %v284
    %v2138 = vunpack.c.l.b16 %v285
    %v2139 = vunpack.c.l.b16 %v286
    %v2140 = vunpack.c.l.b16 %v287
    %v2141 = vunpack.c.l.b16 %v288
    %v2142 = vunpack.c.l.b16 %v289
    %v2143 = vunpack.c.l.b16 %v290
    %v2144 = vunpack.c.l.b16 %v291
    %v2145 = vunpack.c.l.b16 %v292
    %v2146 = vunpack.c.l.b16 %v293
    %v2147 = vunpack.c.l.b16 %v294
    %v2148 = vunpack.c.l.b16 %v295
    %v2149 = vunpack.c.l.b16 %v296
    %v2150 = vunpack.c.l.b16 %v297
    %v2151 = vunpack.c.l.b16 %v298
    %v2152 = vunpack.c.l.b16 %v299
    %v2153 = vunpack.c.l.b16 %v300
    %v2154 = vunpack.c.l.b16 %v301
    %v2155 = vunpack.c.l.b16 %v302
    %v2156 = vunpack.c.l.b16 %v303
    %v2157 = vunpack.c.l.b16 %v304
    %v2158 = vunpack.c.l.b16 %v305
    %v2159 = vunpack.c.l.b16 %v306
    %v2160 = vunpack.c.l.b16 %v307
    %v2161 = vunpack.c.l.b16 %v308
    %v2162 = vunpack.c.l.b16 %v309
    %v2163 = vunpack.c.l.b16 %v310
    %v2164 = vunpack.c.l.b16 %v311
    %v2165 = vunpack.c.l.b16 %v312
    %v2166 = vunpack.c.l.b16 %v313
    %v2167 = vunpack.c.l.b16 %v314
    %v2168 = vunpack.c.l.b16 %v315
    %v2169 = vunpack.c.l.b16 %v316
    %v2170 = vunpack.c.l.b16 %v317
    %v2171 = vunpack.c.l.b16 %v318
    %v2172 = vunpack.c.l.b16 %v319
    %v2173 = vunpack.c.l.b16 %v320
    %v2174 = vunpack.c.l.b16 %v321
    %v2175 = vunpack.c.l.b16 %v322
    %v2176 = vunpack.c.l.b16 %v323
    %v2177 = vunpack.c.l.b16 %v324
    %v2178 = vunpack.c.l.b16 %v325
    %v2179 = vunpack.c.l.b16 %v326
    %v2180 = vunpack.c.l.b16 %v327
    %v2181 = vunpack.c.l.b16 %v328
    %v2182 = vunpack.c.l.b16 %v329
    %v2183 = vunpack.c.l.b16 %v330
    %v2184 = vunpack.c.l.b16 %v331
    %v2185 = vunpack.c.l.b16 %v332
    %v2186 = vunpack.c.l.b16 %v333
    %v2187 = vunpack.c.l.b16 %v334
    %v2188 = vunpack.c.l.b16 %v335
    %v2189 = vunpack.c.l.b16 %v336
    %v2190 = vunpack.c.l.b16 %v337
    %v2191 = vunpack.c.l.b16 %v338
    %v2192 = vunpack.c.l.b16 %v339
    %v2193 = vunpack.c.l.b16 %v340
    %v2194 = vunpack.c.l.b16 %v341
    %v2195 = vunpack.c.l.b16 %v342
    %v2196 = vunpack.c.l.b16 %v343
    %v2197 = vunpack.c.l.b16 %v344
    %v2198 = vunpack.c.l.b16 %v345
    %v2199 = vunpack.c.l.b16 %v346
    %v2200 = vunpack.c.l.b16 %v347
    %v2201 = vunpack.c.l.b16 %v348
    %v2202 = vunpack.c.l.b16 %v349
    %v2203 = vunpack.c.l.b16 %v350
    %v2204 = vunpack.c.l.b16 %v351
    %v2205 = vunpack.c.l.b16 %v352
    %v2206 = vunpack.c.l.b16 %v353
    %v2207 = vunpack.c.l.b16 %v354
    %v2208 = vunpack.c.l.b16 %v355
    %v2209 = vunpack.c.l.b16 %v356
    %v2210 = vunpack.c.l.b16 %v357
    %v2211 = vunpack.c.l.b16 %v358
    %v2212 = vunpack.c.l.b16 %v359
    %v2213 = vunpack.c.l.b16 %v360
    %v2214 = vunpack.c.l.b16 %v361
    %v2215 = vunpack.c.l.b16 %v362
    %v2216 = vunpack.c.l.b16 %v363
    %v2217 = vunpack.c.l.b16 %v364
    %v2218 = vunpack.c.l.b16 %v365
    %v2219 = vunpack.c.l.b16 %v366
    %v2220 = vunpack.c.l.b16 %v367
    %v2221 = vunpack.c.l.b16 %v368
    %v2222 = vunpack.c.l.b16 %v369
    %v2223 = vunpack.c.l.b16 %v370
    %v2224 = vunpack.c.l.b16 %v371
    %v2225 = vunpack.c.l.b16 %v372
    %v2226 = vunpack.c.l.b16 %v373
    %v2227 = vunpack.c.l.b16 %v374
    %v2228 = vunpack.c.l.b16 %v375
    %v2229 = vunpack.c.l.b16 %v376
    %v2230 = vunpack.c.l.b16 %v377
    %v2231 = vunpack.c.l.b16 %v378
    %v2232 = vunpack.c.l.b16 %v379
    %v2233 = vunpack.c.l.b16 %v380
    %v2234 = vunpack.c.l.b16 %v381
    %v2235 = vunpack.c.l.b16 %v382
    %v2236 = vunpack.c.l.b16 %v383
    %v2237 = vunpack.c.l.b16 %v384
    %v2238 = vunpack.c.l.b16 %v385
    %v2239 = vunpack.c.l.b16 %v386
    %v2240 = vunpack.c.l.b16 %v387
    %v2241 = vunpack.c.l.b16 %v388
    %v2242 = vunpack.c.l.b16 %v389
    %v2243 = vunpack.c.l.b16 %v390
    %v2244 = vunpack.c.l.b16 %v391
    %v2245 = vunpack.c.l.b16 %v392
    %v2246 = vunpack.c.l.b16 %v393
    %v2247 = vunpack.c.l.b16 %v394
    %v2248 = vunpack.c.l.b16 %v395
    %v2249 = vunpack.c.l.b16 %v396
    %v2250 = vunpack.c.l.b16 %v397
    %v2251 = vunpack.c.l.b16 %v398
    %v2252 = vunpack.c.l.b16 %v399
    %v2253 = vunpack.c.l.b16 %v400
    %v2254 = vunpack.c.l.b16 %v401
    %v2255 = vunpack.c.l.b16 %v402
    %v2256 = vunpack.c.l.b16 %v403
    %v2257 = vunpack.c.l.b16 %v404
    %v2258 = vunpack.c.l.b16 %v405
    %v2259 = vunpack.c.l.b16 %v406
    %v2260 = vunpack.c.l.b16 %v407
    %v2261 = vunpack.c.l.b16 %v408
    %v2262 = vunpack.c.l.b16 %v409
    %v2263 = vunpack.c.l.b16 %v410
    %v2264 = vunpack.c.l.b16 %v411
    %v2265 = vunpack.c.l.b16 %v412
    %v2266 = vunpack.c.l.b16 %v413
    %v2267 = vunpack.c.l.b16 %v414
    %v2268 = vunpack.c.l.b16 %v415
    %v2269 = vunpack.c.l.b16 %v416
    %v2270 = vunpack.c.l.b16 %v417
    %v2271 = vunpack.c.l.b16 %v418
    %v2272 = vunpack.c.l.b16 %v419
    %v2273 = vunpack.c.l.b16 %v420
    %v2274 = vunpack.c.l.b16 %v421
    %v2275 = vunpack.c.l.b16 %v422
    %v2276 = vunpack.c.l.b16 %v423
    %v2277 = vunpack.c.l.b16 %v424
    %v2278 = vunpack.c.l.b16 %v425
    %v2279 = vunpack.c.l.b16 %v426
    %v2280 = vunpack.c.l.b16 %v427
    %v2281 = vunpack.c.l.b16 %v428
    %v2282 = vunpack.c.l.b16 %v429
    %v2283 = vunpack.c.l.b16 %v430
    %v2284 = vunpack.c.l.b16 %v431
    %v2285 = vunpack.c.l.b16 %v432
    %v2286 = vunpack.c.l.b16 %v433
    %v2287 = vunpack.c.l.b16 %v434
    %v2288 = vunpack.c.l.b16 %v435
    %v2289 = vunpack.c.l.b16 %v436
    %v2290 = vunpack.c.l.b16 %v437
    %v2291 = vunpack.c.l.b16 %v438
    %v2292 = vunpack.c.l.b16 %v439
    %v2293 = vunpack.c.l.b16 %v440
    %v2294 = vunpack.c.l.b16 %v441
    %v2295 = vunpack.c.l.b16 %v442
    %v2296 = vunpack.c.l.b16 %v443
    %v2297 = vunpack.c.l.b16 %v444
    %v2298 = vunpack.c.l.b16 %v445
    %v2299 = vunpack.c.l.b16 %v446
    %v2300 = vunpack.c.l.b16 %v447
    %v2301 = vunpack.c.l.b16 %v448
    %v2302 = vunpack.c.l.b16 %v449
    %v2303 = vunpack.c.l.b16 %v450
    %v2304 = vunpack.c.l.b16 %v451
    %v2305 = vunpack.c.l.b16 %v452
    %v2306 = vunpack.c.l.b16 %v453
    %v2307 = vunpack.c.l.b16 %v454
    %v2308 = vunpack.c.l.b16 %v455
    %v2309 = vunpack.c.l.b16 %v456
    %v2310 = vunpack.c.l.b16 %v457
    %v2311 = vunpack.c.l.b16 %v458
    %v2312 = vunpack.c.l.b16 %v459
    %v2313 = vunpack.c.l.b16 %v460
    %v2314 = vunpack.c.l.b16 %v461
    %v2315 = vunpack.c.l.b16 %v462
    %v2316 = vunpack.c.l.b16 %v463
    %v2317 = vunpack.c.l.b16 %v464
    %v2318 = vunpack.c.l.b16 %v465
    %v2319 = vunpack.c.l.b16 %v466
    %v2320 = vunpack.c.l.b16 %v467
    %v2321 = vunpack.c.l.b16 %v468
    %v2322 = vunpack.c.l.b16 %v469
    %v2323 = vunpack.c.l.b16 %v470
    %v2324 = vunpack.c.l.b16 %v471
    %v2325 = vunpack.c.l.b16 %v472
    %v2326 = vunpack.c.l.b16 %v473
    %v2327 = vunpack.c.l.b16 %v474
    %v2328 = vunpack.c.l.b16 %v475
    %v2329 = vunpack.c.l.b16 %v476
    %v2330 = vunpack.c.l.b16 %v477
    %v2331 = vunpack.c.l.b16 %v478
    %v2332 = vunpack.c.l.b16 %v479
    %v2333 = vunpack.c.l.b16 %v480
    %v2334 = vunpack.c.l.b16 %v481
    %v2335 = vunpack.c.l.b16 %v482
    %v2336 = vunpack.c.l.b16 %v483
    %v2337 = vunpack.c.l.b16 %v484
    %v2338 = vunpack.c.l.b16 %v485
    %v2339 = vunpack.c.l.b16 %v486
    %v2340 = vunpack.c.l.b16 %v487
    %v2341 = vunpack.c.l.b16 %v488
    %v2342 = vunpack.c.l.b16 %v489
    %v2343 = vunpack.c.l.b16 %v490
    %v2344 = vunpack.c.l.b16 %v491
    %v2345 = vunpack.c.l.b16 %v492
    %v2346 = vunpack.c.l.b16 %v493
    %v2347 = vunpack.c.l.b16 %v494
    %v2348 = vunpack.c.l.b16 %v495
    %v2349 = vunpack.c.l.b16 %v496
    %v2350 = vunpack.c.l.b16 %v497
    %v2351 = vunpack.c.l.b16 %v498
    %v2352 = vunpack.c.l.b16 %v499
    %v2353 = vunpack.c.l.b16 %v500
    %v2354 = vunpack.c.l.b16 %v501
    %v2355 = vunpack.c.l.b16 %v502
    %v2356 = vunpack.c.l.b16 %v503
    %v2357 = vunpack.c.l.b16 %v504
    %v2358 = vunpack.c.l.b16 %v505
    %v2359 = vunpack.c.l.b16 %v506
    %v2360 = vunpack.c.l.b16 %v507
    %v2361 = vunpack.c.l.b16 %v508
    %v2362 = vunpack.c.l.b16 %v509
    %v2363 = vunpack.c.l.b16 %v510
    %v2364 = vunpack.c.l.b16 %v511
    %v2365 = vunpack.c.l.b16 %v512
    %v2366 = vunpack.c.l.b16 %v513
    %v2367 = vunpack.c.l.b16 %v514
    %v2368 = vunpack.c.l.b16 %v515
    %v2369 = vunpack.c.l.b16 %v516
    %v2370 = vunpack.c.l.b16 %v517
    %v2371 = vunpack.c.l.b16 %v518
    %v2372 = vunpack.c.l.b16 %v519
    %v2373 = vunpack.c.l.b16 %v520
    %v2374 = vunpack.c.l.b16 %v521
    %v2375 = vunpack.c.l.b16 %v522
    %v2376 = vunpack.c.l.b16 %v523
    %v2377 = vunpack.c.l.b16 %v524
    %v2378 = vunpack.c.l.b16 %v525
    %v2379 = vunpack.c.l.b16 %v526
    %v2380 = vunpack.c.l.b16 %v527
    %v2381 = vunpack.c.l.b16 %v528
    %v2382 = vunpack.c.l.b16 %v529
    %v2383 = vunpack.c.l.b16 %v530
    %v2384 = vunpack.c.l.b16 %v531
    %v2385 = vunpack.c.l.b16 %v532
    %v2386 = vunpack.c.l.b16 %v533
    %v2387 = vunpack.c.l.b16 %v534
    %v2388 = vunpack.c.l.b16 %v535
    %v2389 = vunpack.c.l.b16 %v536
    %v2390 = vunpack.c.l.b16 %v537
    %v2391 = vunpack.c.l.b16 %v538
    %v2392 = vunpack.c.l.b16 %v539
    %v2393 = vunpack.c.l.b16 %v540
    %v2394 = vunpack.c.l.b16 %v541
    %v2395 = vunpack.c.l.b16 %v542
    %v2396 = vunpack.c.l.b16 %v543
    %v2397 = vunpack.c.l.b16 %v544
    %v2398 = vunpack.c.l.b16 %v545
    %v2399 = vunpack.c.l.b16 %v546
    %v2400 = vunpack.c.l.b16 %v547
    %v2401 = vunpack.c.l.b16 %v548
    %v2402 = vunpack.c.l.b16 %v549
    %v2403 = vunpack.c.l.b16 %v550
    %v2404 = vunpack.c.l.b16 %v551
    %v2405 = vunpack.c.l.b16 %v552
    %v2406 = vunpack.c.l.b16 %v553
    %v2407 = vunpack.c.l.b16 %v554
    %v2408 = vunpack.c.l.b16 %v555
    %v2409 = vunpack.c.l.b16 %v556
    %v2410 = vunpack.c.l.b16 %v557
    %v2411 = vunpack.c.l.b16 %v558
    %v2412 = vunpack.c.l.b16 %v559
    %v2413 = vunpack.c.l.b16 %v560
    %v2414 = vunpack.c.l.b16 %v561
    %v2415 = vunpack.c.l.b16 %v562
    %v2416 = vunpack.c.l.b16 %v563
    %v2417 = vunpack.c.l.b16 %v564
    %v2418 = vunpack.c.l.b16 %v565
    %v2419 = vunpack.c.l.b16 %v566
    %v2420 = vunpack.c.l.b16 %v567
    %v2421 = vunpack.c.l.b16 %v568
    %v2422 = vunpack.c.l.b16 %v569
    %v2423 = vunpack.c.l.b16 %v570
    %v2424 = vunpack.c.l.b16 %v571
    %v2425 = vunpack.c.l.b16 %v572
    %v2426 = vunpack.c.l.b16 %v573
    %v2427 = vunpack.c.l.b16 %v574
    %v2428 = vunpack.c.l.b16 %v575
    %v2429 = vunpack.c.l.b16 %v576
    %v2430 = vunpack.c.l.b16 %v577
    %v2431 = vunpack.c.l.b16 %v578
    %v2432 = vunpack.c.l.b16 %v579
    %v2433 = vunpack.c.l.b16 %v580
    %v2434 = vunpack.c.l.b16 %v581
    %v2435 = vunpack.c.l.b16 %v582
    %v2436 = vunpack.c.l.b16 %v583
    %v2437 = vunpack.c.l.b16 %v584
    %v2438 = vunpack.c.l.b16 %v585
    %v2439 = vunpack.c.l.b16 %v586
    %v2440 = vunpack.c.l.b16 %v587
    %v2441 = vunpack.c.l.b16 %v588
    %v2442 = vunpack.c.l.b16 %v589
    %v2443 = vunpack.c.l.b16 %v590
    %v2444 = vunpack.c.l.b16 %v591
    %v2445 = vunpack.c.l.b16 %v592
    %v2446 = vunpack.c.l.b16 %v593
    %v2447 = vunpack.c.l.b16 %v594
    %v2448 = vunpack.c.l.b16 %v595
    %v2449 = vunpack.c.l.b16 %v596
    %v2450 = vunpack.c.l.b16 %v597
    %v2451 = vunpack.c.l.b16 %v598
    %v2452 = vunpack.c.l.b16 %v599
    %v2453 = vunpack.c.l.b16 %v600
    %v2454 = vunpack.c.l.b16 %v601
    %v2455 = vunpack.c.l.b16 %v602
    %v2456 = vunpack.c.l.b16 %v603
    %v2457 = vunpack.c.l.b16 %v604
    %v2458 = vunpack.c.l.b16 %v605
    %v2459 = vunpack.c.l.b16 %v606
    %v2460 = vunpack.c.l.b16 %v607
    %v2461 = vunpack.c.l.b16 %v608
    %v2462 = vunpack.c.l.b16 %v609
    %v2463 = vunpack.c.l.b16 %v610
    %v2464 = vunpack.c.l.b16 %v611
    %v2465 = vunpack.c.l.b16 %v612
    %v2466 = vunpack.c.l.b16 %v613
    %v2467 = vunpack.c.l.b16 %v614
    %v2468 = vunpack.c.l.b16 %v615
    %v2469 = vunpack.c.l.b16 %v616
    %v2470 = vunpack.c.l.b16 %v617
    %v2471 = vunpack.c.l.b16 %v618
    %v2472 = vunpack.c.l.b16 %v619
    %v2473 = vunpack.c.l.b16 %v620
    %v2474 = vunpack.c.l.b16 %v621
    %v2475 = vunpack.c.l.b16 %v622
    %v2476 = vunpack.c.l.b16 %v623
    %v2477 = vunpack.c.l.b16 %v624
    %v2478 = vunpack.c.l.b16 %v625
    %v2479 = vunpack.c.l.b16 %v626
    %v2480 = vunpack.c.l.b16 %v627
    %v2481 = vunpack.c.l.b16 %v628
    %v2482 = vunpack.c.l.b16 %v629
    %v2483 = vunpack.c.l.b16 %v630
    %v2484 = vunpack.c.l.b16 %v631
    %v2485 = vunpack.c.l.b16 %v632
    %v2486 = vunpack.c.l.b16 %v633
    %v2487 = vunpack.c.l.b16 %v634
    %v2488 = vunpack.c.l.b16 %v635
    %v2489 = vunpack.c.l.b16 %v636
    %v2490 = vunpack.c.l.b16 %v637
    %v2491 = vunpack.c.l.b16 %v638
    %v2492 = vunpack.c.l.b16 %v639
    %v2493 = vunpack.c.l.b16 %v640
    %v2494 = vunpack.c.l.b16 %v641
    %v2495 = vunpack.c.l.b16 %v642
    %v2496 = vunpack.c.l.b16 %v643
    %v2497 = vunpack.c.l.b16 %v644
    %v2498 = vunpack.c.l.b16 %v645
    %v2499 = vunpack.c.l.b16 %v646
    %v2500 = vunpack.c.l.b16 %v647
    %v2501 = vunpack.c.l.b16 %v648
    %v2502 = vunpack.c.l.b16 %v649
    %v2503 = vunpack.c.l.b16 %v650
    %v2504 = vunpack.c.l.b16 %v651
    %v2505 = vunpack.c.l.b16 %v652
    %v2506 = vunpack.c.l.b16 %v653
    %v2507 = vunpack.c.l.b16 %v654
    %v2508 = vunpack.c.l.b16 %v655
    %v2509 = vunpack.c.l.b16 %v656
    %v2510 = vunpack.c.l.b16 %v657
    %v2511 = vunpack.c.l.b16 %v658
    %v2512 = vunpack.c.l.b16 %v659
    %v2513 = vunpack.c.l.b16 %v660
    %v2514 = vunpack.c.l.b16 %v661
    %v2515 = vunpack.c.l.b16 %v662
    %v2516 = vunpack.c.l.b16 %v663
    %v2517 = vunpack.c.l.b16 %v664
    %v2518 = vunpack.c.l.b16 %v665
    %v2519 = vunpack.c.l.b16 %v666
    %v2520 = vunpack.c.l.b16 %v667
    %v2521 = vunpack.c.l.b16 %v668
    %v2522 = vunpack.c.l.b16 %v669
    %v2523 = vunpack.c.l.b16 %v670
    %v2524 = vunpack.c.l.b16 %v671
    %v2525 = vunpack.c.l.b16 %v672
    %v2526 = vunpack.c.l.b16 %v673
    %v2527 = vunpack.c.l.b16 %v674
    %v2528 = vunpack.c.l.b16 %v675
    %v2529 = vunpack.c.l.b16 %v676
    %v2530 = vunpack.c.l.b16 %v677
    %v2531 = vunpack.c.l.b16 %v678
    %v2532 = vunpack.c.l.b16 %v679
    %v2533 = vunpack.c.l.b16 %v680
    %v2534 = vunpack.c.l.b16 %v681
    %v2535 = vunpack.c.l.b16 %v682
    %v2536 = vunpack.c.l.b16 %v683
    %v2537 = vunpack.c.l.b16 %v684
    %v2538 = vunpack.c.l.b16 %v685
    %v2539 = vunpack.c.l.b16 %v686
    %v2540 = vunpack.c.l.b16 %v687
    %v2541 = vunpack.c.l.b16 %v688
    %v2542 = vunpack.c.l.b16 %v689
    %v2543 = vunpack.c.l.b16 %v690
    %v2544 = vunpack.c.l.b16 %v691
    %v2545 = vunpack.c.l.b16 %v692
    %v2546 = vunpack.c.l.b16 %v693
    %v2547 = vunpack.c.l.b16 %v694
    %v2548 = vunpack.c.l.b16 %v695
    %v2549 = vunpack.c.l.b16 %v696
    %v2550 = vunpack.c.l.b16 %v697
    %v2551 = vunpack.c.l.b16 %v698
    %v2552 = vunpack.c.l.b16 %v699
    %v2553 = vunpack.c.l.b16 %v700
    %v2554 = vunpack.c.l.b16 %v701
    %v2555 = vunpack.c.l.b16 %v702
    %v2556 = vunpack.c.l.b16 %v703
    %v2557 = vunpack.c.l.b16 %v704
    %v2558 = vunpack.c.l.b16 %v705
    %v2559 = vunpack.c.l.b16 %v706
    %v2560 = vunpack.c.l.b16 %v707
    %v2561 = vunpack.c.l.b16 %v708
    %v2562 = vunpack.c.l.b16 %v709
    %v2563 = vunpack.c.l.b16 %v710
    %v2564 = vunpack.c.l.b16 %v711
    %v2565 = vunpack.c.l.b16 %v712
    %v2566 = vunpack.c.l.b16 %v713
    %v2567 = vunpack.c.l.b16 %v714
    %v2568 = vunpack.c.l.b16 %v715
    %v2569 = vunpack.c.l.b16 %v716
    %v2570 = vunpack.c.l.b16 %v717
    %v2571 = vunpack.c.l.b16 %v718
    %v2572 = vunpack.c.l.b16 %v719
    %v2573 = vunpack.c.l.b16 %v720
    %v2574 = vunpack.c.l.b16 %v721
    %v2575 = vunpack.c.l.b16 %v722
    %v2576 = vunpack.c.l.b16 %v723
    %v2577 = vunpack.c.l.b16 %v724
    %v2578 = vunpack.c.l.b16 %v725
    %v2579 = vunpack.c.l.b16 %v726
    %v2580 = vunpack.c.l.b16 %v727
    %v2581 = vunpack.c.l.b16 %v728
    %v2582 = vunpack.c.l.b16 %v729
    %v2583 = vunpack.c.l.b16 %v730
    %v2584 = vunpack.c.l.b16 %v731
    %v2585 = vunpack.c.l.b16 %v732
    %v2586 = vunpack.c.l.b16 %v733
    %v2587 = vunpack.c.l.b16 %v734
    %v2588 = vunpack.c.l.b16 %v735
    %v2589 = vunpack.c.l.b16 %v736
    %v2590 = vunpack.c.l.b16 %v737
    %v2591 = vunpack.c.l.b16 %v738
    %v2592 = vunpack.c.l.b16 %v739
    %v2593 = vunpack.c.l.b16 %v740
    %v2594 = vunpack.c.l.b16 %v741
    %v2595 = vunpack.c.l.b16 %v742
    %v2596 = vunpack.c.l.b16 %v743
    %v2597 = vunpack.c.l.b16 %v744
    %v2598 = vunpack.c.l.b16 %v745
    %v2599 = vunpack.c.l.b16 %v746
    %v2600 = vunpack.c.l.b16 %v747
    %v2601 = vunpack.c.l.b16 %v748
    %v2602 = vunpack.c.l.b16 %v749
    %v2603 = vunpack.c.l.b16 %v750
    %v2604 = vunpack.c.l.b16 %v751
    %v2605 = vunpack.c.l.b16 %v752
    %v2606 = vunpack.c.l.b16 %v753
    %v2607 = vunpack.c.l.b16 %v754
    %v2608 = vunpack.c.l.b16 %v755
    %v2609 = vunpack.c.l.b16 %v756
    %v2610 = vunpack.c.l.b16 %v757
    %v2611 = vunpack.c.l.b16 %v758
    %v2612 = vunpack.c.l.b16 %v759
    %v2613 = vunpack.c.l.b16 %v760
    %v2614 = vunpack.c.l.b16 %v761
    %v2615 = vunpack.c.l.b16 %v762
    %v2616 = vunpack.c.l.b16 %v763
    %v2617 = vunpack.c.l.b16 %v764
    %v2618 = vunpack.c.l.b16 %v765
    %v2619 = vunpack.c.l.b16 %v766
    %v2620 = vunpack.c.l.b16 %v767
    %v2621 = vunpack.c.l.b16 %v768
    %v2622 = vunpack.c.l.b16 %v769
    %v2623 = vunpack.c.l.b16 %v770
    %v2624 = vunpack.c.l.b16 %v771
    %v2625 = vunpack.c.l.b16 %v772
    %v2626 = vunpack.c.l.b16 %v773
    %v2627 = vunpack.c.l.b16 %v774
    %v2628 = vunpack.c.l.b16 %v775
    %v2629 = vunpack.c.l.b16 %v776
    %v2630 = vunpack.c.l.b16 %v777
    %v2631 = vunpack.c.l.b16 %v778
    %v2632 = vunpack.c.l.b16 %v779
    %v2633 = vunpack.c.l.b16 %v780
    %v2634 = vunpack.c.l.b16 %v781
    %v2635 = vunpack.c.l.b16 %v782
    %v2636 = vunpack.c.l.b16 %v783
    %v2637 = vunpack.c.l.b16 %v784
    %v2638 = vunpack.c.l.b16 %v785
    %v2639 = vunpack.c.l.b16 %v786
    %v2640 = vunpack.c.l.b16 %v787
    %v2641 = vunpack.c.l.b16 %v788
    %v2642 = vunpack.c.l.b16 %v789
    %v2643 = vunpack.c.l.b16 %v790
    %v2644 = vunpack.c.l.b16 %v791
    %v2645 = vunpack.c.l.b16 %v792
    %v2646 = vunpack.c.l.b16 %v793
    %v2647 = vunpack.c.l.b16 %v794
    %v2648 = vunpack.c.l.b16 %v795
    %v2649 = vunpack.c.l.b16 %v796
    %v2650 = vunpack.c.l.b16 %v797
    %v2651 = vunpack.c.l.b16 %v798
    %v2652 = vunpack.c.l.b16 %v799
    %v2653 = vunpack.c.l.b16 %v800
    %v2654 = vunpack.c.l.b16 %v801
    %v2655 = vunpack.c.l.b16 %v802
    %v2656 = vunpack.c.l.b16 %v803
    %v2657 = vunpack.c.l.b16 %v804
    %v2658 = vunpack.c.l.b16 %v805
    %v2659 = vunpack.c.l.b16 %v806
    %v2660 = vunpack.c.l.b16 %v807
    %v2661 = vunpack.c.l.b16 %v808
    %v2662 = vunpack.c.l.b16 %v809
    %v2663 = vunpack.c.l.b16 %v810
    %v2664 = vunpack.c.l.b16 %v811
    %v2665 = vunpack.c.l.b16 %v812
    %v2666 = vunpack.c.l.b16 %v813
    %v2667 = vunpack.c.l.b16 %v814
    %v2668 = vunpack.c.l.b16 %v815
    %v2669 = vunpack.c.l.b16 %v816
    %v2670 = vunpack.c.l.b16 %v817
    %v2671 = vunpack.c.l.b16 %v818
    %v2672 = vunpack.c.l.b16 %v819
    %v2673 = vunpack.c.l.b16 %v820
    %v2674 = vunpack.c.l.b16 %v821
    %v2675 = vunpack.c.l.b16 %v822
    %v2676 = vunpack.c.l.b16 %v823
    %v2677 = vunpack.c.l.b16 %v824
    %v2678 = vunpack.c.l.b16 %v825
    %v2679 = vunpack.c.l.b16 %v826
    %v2680 = vunpack.c.l.b16 %v827
    %v2681 = vunpack.c.l.b16 %v828
    %v2682 = vunpack.c.l.b16 %v829
    %v2683 = vunpack.c.l.b16 %v830
    %v2684 = vunpack.c.l.b16 %v831
    %v2685 = vunpack.c.l.b16 %v832
    %v2686 = vunpack.c.l.b16 %v833
    %v2687 = vunpack.c.l.b16 %v834
    %v2688 = vunpack.c.l.b16 %v835
    %v2689 = vunpack.c.l.b16 %v836
    %v2690 = vunpack.c.l.b16 %v837
    %v2691 = vunpack.c.l.b16 %v838
    %v2692 = vunpack.c.l.b16 %v839
    %v2693 = vunpack.c.l.b16 %v840
    %v2694 = vunpack.c.l.b16 %v841
    %v2695 = vunpack.c.l.b16 %v842
    %v2696 = vunpack.c.l.b16 %v843
    %v2697 = vunpack.c.l.b16 %v844
    %v2698 = vunpack.c.l.b16 %v845
    %v2699 = vunpack.c.l.b16 %v846
    %v2700 = vunpack.c.l.b16 %v847
    %v2701 = vunpack.c.l.b16 %v848
    %v2702 = vunpack.c.l.b16 %v849
    %v2703 = vunpack.c.l.b16 %v850
    %v2704 = vunpack.c.l.b16 %v851
    %v2705 = vunpack.c.l.b16 %v852
    %v2706 = vunpack.c.l.b16 %v853
    %v2707 = vunpack.c.l.b16 %v854
    %v2708 = vunpack.c.l.b16 %v855
    %v2709 = vunpack.c.l.b16 %v856
    %v2710 = vunpack.c.l.b16 %v857
    %v2711 = vunpack.c.l.b16 %v858
    %v2712 = vunpack.c.l.b16 %v859
    %v2713 = vunpack.c.l.b16 %v860
    %v2714 = vunpack.c.l.b16 %v861
    %v2715 = vunpack.c.l.b16 %v862
    %v2716 = vunpack.c.l.b16 %v863
    %v2717 = vunpack.c.l.b16 %v864
    %v2718 = vunpack.c.l.b16 %v865
    %v2719 = vunpack.c.l.b16 %v866
    %v2720 = vunpack.c.l.b16 %v867
    %v2721 = vunpack.c.l.b16 %v868
    %v2722 = vunpack.c.l.b16 %v869
    %v2723 = vunpack.c.l.b16 %v870
    %v2724 = vunpack.c.l.b16 %v871
    %v2725 = vunpack.c.l.b16 %v872
    %v2726 = vunpack.c.l.b16 %v873
    %v2727 = vunpack.c.l.b16 %v874
    %v2728 = vunpack.c.l.b16 %v875
    %v2729 = vunpack.c.l.b16 %v876
    %v2730 = vunpack.c.l.b16 %v877
    %v2731 = vunpack.c.l.b16 %v878
    %v2732 = vunpack.c.l.b16 %v879
    %v2733 = vunpack.c.l.b16 %v880
    %v2734 = vunpack.c.l.b16 %v881
    %v2735 = vunpack.c.l.b16 %v882
    %v2736 = vunpack.c.l.b16 %v883
    %v2737 = vunpack.c.l.b16 %v884
    %v2738 = vunpack.c.l.b16 %v885
    %v2739 = vunpack.c.l.b16 %v886
    %v2740 = vunpack.c.l.b16 %v887
    %v2741 = vunpack.c.l.b16 %v888
    %v2742 = vunpack.c.l.b16 %v889
    %v2743 = vunpack.c.l.b16 %v890
    %v2744 = vunpack.c.l.b16 %v891
    %v2745 = vunpack.c.l.b16 %v892
    %v2746 = vunpack.c.l.b16 %v893
    %v2747 = vunpack.c.l.b16 %v894
    %v2748 = vunpack.c.l.b16 %v895
    %v2749 = vunpack.c.l.b16 %v896
    %v2750 = vunpack.c.l.b16 %v897
    %v2751 = vunpack.c.l.b16 %v898
    %v2752 = vunpack.c.l.b16 %v899
    %v2753 = vunpack.c.l.b16 %v900
    %v2754 = vunpack.c.l.b16 %v901
    %v2755 = vunpack.c.l.b16 %v902
    %v2756 = vunpack.c.l.b16 %v903
    %v2757 = vunpack.c.l.b16 %v904
    %v2758 = vunpack.c.l.b16 %v905
    %v2759 = vunpack.c.l.b16 %v906
    %v2760 = vunpack.c.l.b16 %v907
    %v2761 = vunpack.c.l.b16 %v908
    %v2762 = vunpack.c.l.b16 %v909
    %v2763 = vunpack.c.l.b16 %v910
    %v2764 = vunpack.c.l.b16 %v911
    %v2765 = vunpack.c.l.b16 %v912
    %v2766 = vunpack.c.l.b16 %v913
    %v2767 = vunpack.c.l.b16 %v914
    %v2768 = vunpack.c.l.b16 %v915
    %v2769 = vunpack.c.l.b16 %v916
    %v2770 = vunpack.c.l.b16 %v917
    %v2771 = vunpack.c.l.b16 %v918
    %v2772 = vunpack.c.l.b16 %v919
    %v2773 = vunpack.c.l.b16 %v920
    %v2774 = vunpack.c.l.b16 %v921
    %v2775 = vunpack.c.l.b16 %v922
    %v2776 = vunpack.c.l.b16 %v923
    %v2777 = vunpack.c.l.b16 %v924
    %v2778 = vunpack.c.l.b16 %v925
    %v2779 = vunpack.c.l.b16 %v926
    %v2780 = vunpack.c.l.b16 %v927
    %v2781 = vunpack.c.l.b16 %v928
    %v2782 = vunpack.c.l.b16 %v929
    %v2783 = vunpack.c.l.b16 %v930
    %v2784 = vunpack.c.l.b16 %v931
    %v2785 = vunpack.c.l.b16 %v932
    %v2786 = vunpack.c.l.b16 %v933
    %v2787 = vunpack.c.l.b16 %v934
    %v2788 = vunpack.c.l.b16 %v935
    %v2789 = vunpack.c.l.b16 %v936
    %v2790 = vunpack.c.l.b16 %v937
    %v2791 = vunpack.c.l.b16 %v938
    %v2792 = vunpack.c.l.b16 %v939
    %v2793 = vunpack.c.l.b16 %v940
    %v2794 = vunpack.c.l.b16 %v941
    %v2795 = vunpack.c.l.b16 %v942
    %v2796 = vunpack.c.l.b16 %v943
    %v2797 = vunpack.c.l.b16 %v944
    %v2798 = vunpack.c.l.b16 %v945
    %v2799 = vunpack.c.l.b16 %v946
    %v2800 = vunpack.c.l.b16 %v947
    %v2801 = vunpack.c.l.b16 %v948
    %v2802 = vunpack.c.l.b16 %v949
    %v2803 = vunpack.c.l.b16 %v950
    %v2804 = vunpack.c.l.b16 %v951
    %v2805 = vunpack.c.l.b16 %v952
    %v2806 = vunpack.c.l.b16 %v953
    %v2807 = vunpack.c.l.b16 %v954
    %v2808 = vunpack.c.l.b16 %v955
    %v2809 = vunpack.c.l.b16 %v956
    %v2810 = vunpack.c.l.b16 %v957
    %v2811 = vunpack.c.l.b16 %v958
    %v2812 = vunpack.c.l.b16 %v959
    %v2813 = vunpack.c.l.b16 %v960
    %v2814 = vunpack.c.l.b16 %v961
    %v2815 = vunpack.c.l.b16 %v962
    %v2816 = vunpack.c.l.b16 %v963
    %v2817 = vunpack.c.l.b16 %v964
    %v2818 = vunpack.c.l.b16 %v965
    %v2819 = vunpack.c.l.b16 %v966
    %v2820 = vunpack.c.l.b16 %v967
    %v2821 = vpack.c.b16 %v1990, %v1989
    %v2822 = vpack.c.b16 %v1992, %v1991
    %v2823 = vpack.c.b16 %v1994, %v1993
    %v2824 = vpack.c.b16 %v1996, %v1995
    %v2825 = vpack.c.b16 %v1998, %v1997
    %v2826 = vpack.c.b16 %v2000, %v1999
    %v2827 = vpack.c.b16 %v2002, %v2001
    %v2828 = vpack.c.b16 %v2004, %v2003
    %v2829 = vpack.c.b16 %v2006, %v2005
    %v2830 = vpack.c.b16 %v2008, %v2007
    %v2831 = vpack.c.b16 %v2010, %v2009
    %v2832 = vpack.c.b16 %v2012, %v2011
    %v2833 = vpack.c.b16 %v2014, %v2013
    %v2834 = vpack.c.b16 %v2016, %v2015
    %v2835 = vpack.c.b16 %v2018, %v2017
    %v2836 = vpack.c.b16 %v2020, %v2019
    %v2837 = vpack.c.b16 %v2022, %v2021
    %v2838 = vpack.c.b16 %v2024, %v2023
    %v2839 = vpack.c.b16 %v2026, %v2025
    %v2840 = vpack.c.b16 %v2028, %v2027
    %v2841 = vpack.c.b16 %v2030, %v2029
    %v2842 = vpack.c.b16 %v2032, %v2031
    %v2843 = vpack.c.b16 %v2034, %v2033
    %v2844 = vpack.c.b16 %v2036, %v2035
    %v2845 = vpack.c.b16 %v2038, %v2037
    %v2846 = vpack.c.b16 %v2040, %v2039
    %v2847 = vpack.c.b16 %v2042, %v2041
    %v2848 = vpack.c.b16 %v2044, %v2043
    %v2849 = vpack.c.b16 %v2046, %v2045
    %v2850 = vpack.c.b16 %v2048, %v2047
    %v2851 = vpack.c.b16 %v2050, %v2049
    %v2852 = vpack.c.b16 %v2052, %v2051
    %v2853 = vpack.c.b16 %v2054, %v2053
    %v2854 = vpack.c.b16 %v2056, %v2055
    %v2855 = vpack.c.b16 %v2058, %v2057
    %v2856 = vpack.c.b16 %v2060, %v2059
    %v2857 = vpack.c.b16 %v2062, %v2061
    %v2858 = vpack.c.b16 %v2064, %v2063
    %v2859 = vpack.c.b16 %v2066, %v2065
    %v2860 = vpack.c.b16 %v2068, %v2067
    %v2861 = vpack.c.b16 %v2070, %v2069
    %v2862 = vpack.c.b16 %v2072, %v2071
    %v2863 = vpack.c.b16 %v2074, %v2073
    %v2864 = vpack.c.b16 %v2076, %v2075
    %v2865 = vpack.c.b16 %v2078, %v2077
    %v2866 = vpack.c.b16 %v2080, %v2079
    %v2867 = vpack.c.b16 %v2082, %v2081
    %v2868 = vpack.c.b16 %v2084, %v2083
    %v2869 = vpack.c.b16 %v2086, %v2085
    %v2870 = vpack.c.b16 %v2088, %v2087
    %v2871 = vpack.c.b16 %v2090, %v2089
    %v2872 = vpack.c.b16 %v2092, %v2091
    %v2873 = vpack.c.b16 %v2094, %v2093
    %v2874 = vpack.c.b16 %v2096, %v2095
    %v2875 = vpack.c.b16 %v2098, %v2097
    %v2876 = vpack.c.b16 %v2100, %v2099
    %v2877 = vpack.c.b16 %v2102, %v2101
    %v2878 = vpack.c.b16 %v2104, %v2103
    %v2879 = vpack.c.b16 %v2106, %v2105
    %v2880 = vpack.c.b16 %v2108, %v2107
    %v2881 = vpack.c.b16 %v2110, %v2109
    %v2882 = vpack.c.b16 %v2112, %v2111
    %v2883 = vpack.c.b16 %v2114, %v2113
    %v2884 = vpack.c.b16 %v2116, %v2115
    %v2885 = vpack.c.b16 %v2118, %v2117
    %v2886 = vpack.c.b16 %v2120, %v2119
    %v2887 = vpack.c.b16 %v2122, %v2121
    %v2888 = vpack.c.b16 %v2124, %v2123
    %v2889 = vpack.c.b16 %v2126, %v2125
    %v2890 = vpack.c.b16 %v2128, %v2127
    %v2891 = vpack.c.b16 %v2130, %v2129
    %v2892 = vpack.c.b16 %v2132, %v2131
    %v2893 = vpack.c.b16 %v2134, %v2133
    %v2894 = vpack.c.b16 %v2136, %v2135
    %v2895 = vpack.c.b16 %v2138, %v2137
    %v2896 = vpack.c.b16 %v2140, %v2139
    %v2897 = vpack.c.b16 %v2142, %v2141
    %v2898 = vpack.c.b16 %v2144, %v2143
    %v2899 = vpack.c.b16 %v2146, %v2145
    %v2900 = vpack.c.b16 %v2148, %v2147
    %v2901 = vpack.c.b16 %v2150, %v2149
    %v2902 = vpack.c.b16 %v2152, %v2151
    %v2903 = vpack.c.b16 %v2154, %v2153
    %v2904 = vpack.c.b16 %v2156, %v2155
    %v2905 = vpack.c.b16 %v2158, %v2157
    %v2906 = vpack.c.b16 %v2160, %v2159
    %v2907 = vpack.c.b16 %v2162, %v2161
    %v2908 = vpack.c.b16 %v2164, %v2163
    %v2909 = vpack.c.b16 %v2166, %v2165
    %v2910 = vpack.c.b16 %v2168, %v2167
    %v2911 = vpack.c.b16 %v2170, %v2169
    %v2912 = vpack.c.b16 %v2172, %v2171
    %v2913 = vpack.c.b16 %v2174, %v2173
    %v2914 = vpack.c.b16 %v2176, %v2175
    %v2915 = vpack.c.b16 %v2178, %v2177
    %v2916 = vpack.c.b16 %v2180, %v2179
    %v2917 = vpack.c.b16 %v2182, %v2181
    %v2918 = vpack.c.b16 %v2184, %v2183
    %v2919 = vpack.c.b16 %v2186, %v2185
    %v2920 = vpack.c.b16 %v2188, %v2187
    %v2921 = vpack.c.b16 %v2190, %v2189
    %v2922 = vpack.c.b16 %v2192, %v2191
    %v2923 = vpack.c.b16 %v2194, %v2193
    %v2924 = vpack.c.b16 %v2196, %v2195
    %v2925 = vpack.c.b16 %v2198, %v2197
    %v2926 = vpack.c.b16 %v2200, %v2199
    %v2927 = vpack.c.b16 %v2202, %v2201
    %v2928 = vpack.c.b16 %v2204, %v2203
    %v2929 = vpack.c.b16 %v2206, %v2205
    %v2930 = vpack.c.b16 %v2208, %v2207
    %v2931 = vpack.c.b16 %v2210, %v2209
    %v2932 = vpack.c.b16 %v2212, %v2211
    %v2933 = vpack.c.b16 %v2214, %v2213
    %v2934 = vpack.c.b16 %v2216, %v2215
    %v2935 = vpack.c.b16 %v2218, %v2217
    %v2936 = vpack.c.b16 %v2220, %v2219
    %v2937 = vpack.c.b16 %v2222, %v2221
    %v2938 = vpack.c.b16 %v2224, %v2223
    %v2939 = vpack.c.b16 %v2226, %v2225
    %v2940 = vpack.c.b16 %v2228, %v2227
    %v2941 = vpack.c.b16 %v2230, %v2229
    %v2942 = vpack.c.b16 %v2232, %v2231
    %v2943 = vpack.c.b16 %v2234, %v2233
    %v2944 = vpack.c.b16 %v2236, %v2235
    %v2945 = vpack.c.b16 %v2238, %v2237
    %v2946 = vpack.c.b16 %v2240, %v2239
    %v2947 = vpack.c.b16 %v2242, %v2241
    %v2948 = vpack.c.b16 %v2244, %v2243
    %v2949 = vpack.c.b16 %v2246, %v2245
    %v2950 = vpack.c.b16 %v2248, %v2247
    %v2951 = vpack.c.b16 %v2250, %v2249
    %v2952 = vpack.c.b16 %v2252, %v2251
    %v2953 = vpack.c.b16 %v2254, %v2253
    %v2954 = vpack.c.b16 %v2256, %v2255
    %v2955 = vpack.c.b16 %v2258, %v2257
    %v2956 = vpack.c.b16 %v2260, %v2259
    %v2957 = vpack.c.b16 %v2262, %v2261
    %v2958 = vpack.c.b16 %v2264, %v2263
    %v2959 = vpack.c.b16 %v2266, %v2265
    %v2960 = vpack.c.b16 %v2268, %v2267
    %v2961 = vpack.c.b16 %v2270, %v2269
    %v2962 = vpack.c.b16 %v2272, %v2271
    %v2963 = vpack.c.b16 %v2274, %v2273
    %v2964 = vpack.c.b16 %v2276, %v2275
    %v2965 = vpack.c.b16 %v2278, %v2277
    %v2966 = vpack.c.b16 %v2280, %v2279
    %v2967 = vpack.c.b16 %v2282, %v2281
    %v2968 = vpack.c.b16 %v2284, %v2283
    %v2969 = vpack.c.b16 %v2286, %v2285
    %v2970 = vpack.c.b16 %v2288, %v2287
    %v2971 = vpack.c.b16 %v2290, %v2289
    %v2972 = vpack.c.b16 %v2292, %v2291
    %v2973 = vpack.c.b16 %v2294, %v2293
    %v2974 = vpack.c.b16 %v2296, %v2295
    %v2975 = vpack.c.b16 %v2298, %v2297
    %v2976 = vpack.c.b16 %v2300, %v2299
    %v2977 = vpack.c.b16 %v2302, %v2301
    %v2978 = vpack.c.b16 %v2304, %v2303
    %v2979 = vpack.c.b16 %v2306, %v2305
    %v2980 = vpack.c.b16 %v2308, %v2307
    %v2981 = vpack.c.b16 %v2310, %v2309
    %v2982 = vpack.c.b16 %v2312, %v2311
    %v2983 = vpack.c.b16 %v2314, %v2313
    %v2984 = vpack.c.b16 %v2316, %v2315
    %v2985 = vpack.c.b16 %v2318, %v2317
    %v2986 = vpack.c.b16 %v2320, %v2319
    %v2987 = vpack.c.b16 %v2322, %v2321
    %v2988 = vpack.c.b16 %v2324, %v2323
    %v2989 = vpack.c.b16 %v2326, %v2325
    %v2990 = vpack.c.b16 %v2328, %v2327
    %v2991 = vpack.c.b16 %v2330, %v2329
    %v2992 = vpack.c.b16 %v2332, %v2331
    %v2993 = vpack.c.b16 %v2334, %v2333
    %v2994 = vpack.c.b16 %v2336, %v2335
    %v2995 = vpack.c.b16 %v2338, %v2337
    %v2996 = vpack.c.b16 %v2340, %v2339
    %v2997 = vpack.c.b16 %v2342, %v2341
    %v2998 = vpack.c.b16 %v2344, %v2343
    %v2999 = vpack.c.b16 %v2346, %v2345
    %v3000 = vpack.c.b16 %v2348, %v2347
    %v3001 = vpack.c.b16 %v2350, %v2349
    %v3002 = vpack.c.b16 %v2352, %v2351
    %v3003 = vpack.c.b16 %v2354, %v2353
    %v3004 = vpack.c.b16 %v2356, %v2355
    %v3005 = vpack.c.b16 %v2358, %v2357
    %v3006 = vpack.c.b16 %v2360, %v2359
    %v3007 = vpack.c.b16 %v2362, %v2361
    %v3008 = vpack.c.b16 %v2364, %v2363
    %v3009 = vpack.c.b16 %v2366, %v2365
    %v3010 = vpack.c.b16 %v2368, %v2367
    %v3011 = vpack.c.b16 %v2370, %v2369
    %v3012 = vpack.c.b16 %v2372, %v2371
    %v3013 = vpack.c.b16 %v2374, %v2373
    %v3014 = vpack.c.b16 %v2376, %v2375
    %v3015 = vpack.c.b16 %v2378, %v2377
    %v3016 = vpack.c.b16 %v2380, %v2379
    %v3017 = vpack.c.b16 %v2382, %v2381
    %v3018 = vpack.c.b16 %v2384, %v2383
    %v3019 = vpack.c.b16 %v2386, %v2385
    %v3020 = vpack.c.b16 %v2388, %v2387
    %v3021 = vpack.c.b16 %v2390, %v2389
    %v3022 = vpack.c.b16 %v2392, %v2391
    %v3023 = vpack.c.b16 %v2394, %v2393
    %v3024 = vpack.c.b16 %v2396, %v2395
    %v3025 = vpack.c.b16 %v2398, %v2397
    %v3026 = vpack.c.b16 %v2400, %v2399
    %v3027 = vpack.c.b16 %v2402, %v2401
    %v3028 = vpack.c.b16 %v2404, %v2403
    %v3029 = vpack.c.b16 %v2406, %v2405
    %v3030 = vpack.c.b16 %v2408, %v2407
    %v3031 = vpack.c.b16 %v2410, %v2409
    %v3032 = vpack.c.b16 %v2412, %v2411
    %v3033 = vpack.c.b16 %v2414, %v2413
    %v3034 = vpack.c.b16 %v2416, %v2415
    %v3035 = vpack.c.b16 %v2418, %v2417
    %v3036 = vpack.c.b16 %v2420, %v2419
    %v3037 = vpack.c.b16 %v2422, %v2421
    %v3038 = vpack.c.b16 %v2424, %v2423
    %v3039 = vpack.c.b16 %v2426, %v2425
    %v3040 = vpack.c.b16 %v2428, %v2427
    %v3041 = vpack.c.b16 %v2430, %v2429
    %v3042 = vpack.c.b16 %v2432, %v2431
    %v3043 = vpack.c.b16 %v2434, %v2433
    %v3044 = vpack.c.b16 %v2436, %v2435
    %v3045 = vpack.c.b16 %v2438, %v2437
    %v3046 = vpack.c.b16 %v2440, %v2439
    %v3047 = vpack.c.b16 %v2442, %v2441
    %v3048 = vpack.c.b16 %v2444, %v2443
    %v3049 = vpack.c.b16 %v2446, %v2445
    %v3050 = vpack.c.b16 %v2448, %v2447
    %v3051 = vpack.c.b16 %v2450, %v2449
    %v3052 = vpack.c.b16 %v2452, %v2451
    %v3053 = vpack.c.b16 %v2454, %v2453
    %v3054 = vpack.c.b16 %v2456, %v2455
    %v3055 = vpack.c.b16 %v2458, %v2457
    %v3056 = vpack.c.b16 %v2460, %v2459
    %v3057 = vpack.c.b16 %v2462, %v2461
    %v3058 = vpack.c.b16 %v2464, %v2463
    %v3059 = vpack.c.b16 %v2466, %v2465
    %v3060 = vpack.c.b16 %v2468, %v2467
    %v3061 = vpack.c.b16 %v2470, %v2469
    %v3062 = vpack.c.b16 %v2472, %v2471
    %v3063 = vpack.c.b16 %v2474, %v2473
    %v3064 = vpack.c.b16 %v2476, %v2475
    %v3065 = vpack.c.b16 %v2478, %v2477
    %v3066 = vpack.c.b16 %v2480, %v2479
    %v3067 = vpack.c.b16 %v2482, %v2481
    %v3068 = vpack.c.b16 %v2484, %v2483
    %v3069 = vpack.c.b16 %v2486, %v2485
    %v3070 = vpack.c.b16 %v2488, %v2487
    %v3071 = vpack.c.b16 %v2490, %v2489
    %v3072 = vpack.c.b16 %v2492, %v2491
    %v3073 = vpack.c.b16 %v2494, %v2493
    %v3074 = vpack.c.b16 %v2496, %v2495
    %v3075 = vpack.c.b16 %v2498, %v2497
    %v3076 = vpack.c.b16 %v2500, %v2499
    %v3077 = vpack.c.b16 %v2502, %v2501
    %v3078 = vpack.c.b16 %v2504, %v2503
    %v3079 = vpack.c.b16 %v2506, %v2505
    %v3080 = vpack.c.b16 %v2508, %v2507
    %v3081 = vpack.c.b16 %v2510, %v2509
    %v3082 = vpack.c.b16 %v2512, %v2511
    %v3083 = vpack.c.b16 %v2514, %v2513
    %v3084 = vpack.c.b16 %v2516, %v2515
    %v3085 = vpack.c.b16 %v2518, %v2517
    %v3086 = vpack.c.b16 %v2520, %v2519
    %v3087 = vpack.c.b16 %v2522, %v2521
    %v3088 = vpack.c.b16 %v2524, %v2523
    %v3089 = vpack.c.b16 %v2526, %v2525
    %v3090 = vpack.c.b16 %v2528, %v2527
    %v3091 = vpack.c.b16 %v2530, %v2529
    %v3092 = vpack.c.b16 %v2532, %v2531
    %v3093 = vpack.c.b16 %v2534, %v2533
    %v3094 = vpack.c.b16 %v2536, %v2535
    %v3095 = vpack.c.b16 %v2538, %v2537
    %v3096 = vpack.c.b16 %v2540, %v2539
    %v3097 = vpack.c.b16 %v2542, %v2541
    %v3098 = vpack.c.b16 %v2544, %v2543
    %v3099 = vpack.c.b16 %v2546, %v2545
    %v3100 = vpack.c.b16 %v2548, %v2547
    %v3101 = vpack.c.b16 %v2550, %v2549
    %v3102 = vpack.c.b16 %v2552, %v2551
    %v3103 = vpack.c.b16 %v2554, %v2553
    %v3104 = vpack.c.b16 %v2556, %v2555
    %v3105 = vpack.c.b16 %v2558, %v2557
    %v3106 = vpack.c.b16 %v2560, %v2559
    %v3107 = vpack.c.b16 %v2562, %v2561
    %v3108 = vpack.c.b16 %v2564, %v2563
    %v3109 = vpack.c.b16 %v2566, %v2565
    %v3110 = vpack.c.b16 %v2568, %v2567
    %v3111 = vpack.c.b16 %v2570, %v2569
    %v3112 = vpack.c.b16 %v2572, %v2571
    %v3113 = vpack.c.b16 %v2574, %v2573
    %v3114 = vpack.c.b16 %v2576, %v2575
    %v3115 = vpack.c.b16 %v2578, %v2577
    %v3116 = vpack.c.b16 %v2580, %v2579
    %v3117 = vpack.c.b16 %v2582, %v2581
    %v3118 = vpack.c.b16 %v2584, %v2583
    %v3119 = vpack.c.b16 %v2586, %v2585
    %v3120 = vpack.c.b16 %v2588, %v2587
    %v3121 = vpack.c.b16 %v2590, %v2589
    %v3122 = vpack.c.b16 %v2592, %v2591
    %v3123 = vpack.c.b16 %v2594, %v2593
    %v3124 = vpack.c.b16 %v2596, %v2595
    %v3125 = vpack.c.b16 %v2598, %v2597
    %v3126 = vpack.c.b16 %v2600, %v2599
    %v3127 = vpack.c.b16 %v2602, %v2601
    %v3128 = vpack.c.b16 %v2604, %v2603
    %v3129 = vpack.c.b16 %v2606, %v2605
    %v3130 = vpack.c.b16 %v2608, %v2607
    %v3131 = vpack.c.b16 %v2610, %v2609
    %v3132 = vpack.c.b16 %v2612, %v2611
    %v3133 = vpack.c.b16 %v2614, %v2613
    %v3134 = vpack.c.b16 %v2616, %v2615
    %v3135 = vpack.c.b16 %v2618, %v2617
    %v3136 = vpack.c.b16 %v2620, %v2619
    %v3137 = vpack.c.b16 %v2622, %v2621
    %v3138 = vpack.c.b16 %v2624, %v2623
    %v3139 = vpack.c.b16 %v2626, %v2625
    %v3140 = vpack.c.b16 %v2628, %v2627
    %v3141 = vpack.c.b16 %v2630, %v2629
    %v3142 = vpack.c.b16 %v2632, %v2631
    %v3143 = vpack.c.b16 %v2634, %v2633
    %v3144 = vpack.c.b16 %v2636, %v2635
    %v3145 = vpack.c.b16 %v2638, %v2637
    %v3146 = vpack.c.b16 %v2640, %v2639
    %v3147 = vpack.c.b16 %v2642, %v2641
    %v3148 = vpack.c.b16 %v2644, %v2643
    %v3149 = vpack.c.b16 %v2646, %v2645
    %v3150 = vpack.c.b16 %v2648, %v2647
    %v3151 = vpack.c.b16 %v2650, %v2649
    %v3152 = vpack.c.b16 %v2652, %v2651
    %v3153 = vpack.c.b16 %v2654, %v2653
    %v3154 = vpack.c.b16 %v2656, %v2655
    %v3155 = vpack.c.b16 %v2658, %v2657
    %v3156 = vpack.c.b16 %v2660, %v2659
    %v3157 = vpack.c.b16 %v2662, %v2661
    %v3158 = vpack.c.b16 %v2664, %v2663
    %v3159 = vpack.c.b16 %v2666, %v2665
    %v3160 = vpack.c.b16 %v2668, %v2667
    %v3161 = vpack.c.b16 %v2670, %v2669
    %v3162 = vpack.c.b16 %v2672, %v2671
    %v3163 = vpack.c.b16 %v2674, %v2673
    %v3164 = vpack.c.b16 %v2676, %v2675
    %v3165 = vpack.c.b16 %v2678, %v2677
    %v3166 = vpack.c.b16 %v2680, %v2679
    %v3167 = vpack.c.b16 %v2682, %v2681
    %v3168 = vpack.c.b16 %v2684, %v2683
    %v3169 = vpack.c.b16 %v2686, %v2685
    %v3170 = vpack.c.b16 %v2688, %v2687
    %v3171 = vpack.c.b16 %v2690, %v2689
    %v3172 = vpack.c.b16 %v2692, %v2691
    %v3173 = vpack.c.b16 %v2694, %v2693
    %v3174 = vpack.c.b16 %v2696, %v2695
    %v3175 = vpack.c.b16 %v2698, %v2697
    %v3176 = vpack.c.b16 %v2700, %v2699
    %v3177 = vpack.c.b16 %v2702, %v2701
    %v3178 = vpack.c.b16 %v2704, %v2703
    %v3179 = vpack.c.b16 %v2706, %v2705
    %v3180 = vpack.c.b16 %v2708, %v2707
    %v3181 = vpack.c.b16 %v2710, %v2709
    %v3182 = vpack.c.b16 %v2712, %v2711
    %v3183 = vpack.c.b16 %v2714, %v2713
    %v3184 = vpack.c.b16 %v2716, %v2715
    %v3185 = vpack.c.b16 %v2718, %v2717
    %v3186 = vpack.c.b16 %v2720, %v2719
    %v3187 = vpack.c.b16 %v2722, %v2721
    %v3188 = vpack.c.b16 %v2724, %v2723
    %v3189 = vpack.c.b16 %v2726, %v2725
    %v3190 = vpack.c.b16 %v2728, %v2727
    %v3191 = vpack.c.b16 %v2730, %v2729
    %v3192 = vpack.c.b16 %v2732, %v2731
    %v3193 = vpack.c.b16 %v2734, %v2733
    %v3194 = vpack.c.b16 %v2736, %v2735
    %v3195 = vpack.c.b16 %v2738, %v2737
    %v3196 = vpack.c.b16 %v2740, %v2739
    %v3197 = vpack.c.b16 %v2742, %v2741
    %v3198 = vpack.c.b16 %v2744, %v2743
    %v3199 = vpack.c.b16 %v2746, %v2745
    %v3200 = vpack.c.b16 %v2748, %v2747
    %v3201 = vpack.c.b16 %v2750, %v2749
    %v3202 = vpack.c.b16 %v2752, %v2751
    %v3203 = vpack.c.b16 %v2754, %v2753
    %v3204 = vpack.c.b16 %v2756, %v2755
    %v3205 = vpack.c.b16 %v2758, %v2757
    %v3206 = vpack.c.b16 %v2760, %v2759
    %v3207 = vpack.c.b16 %v2762, %v2761
    %v3208 = vpack.c.b16 %v2764, %v2763
    %v3209 = vpack.c.b16 %v2766, %v2765
    %v3210 = vpack.c.b16 %v2768, %v2767
    %v3211 = vpack.c.b16 %v2770, %v2769
    %v3212 = vpack.c.b16 %v2772, %v2771
    %v3213 = vpack.c.b16 %v2774, %v2773
    %v3214 = vpack.c.b16 %v2776, %v2775
    %v3215 = vpack.c.b16 %v2778, %v2777
    %v3216 = vpack.c.b16 %v2780, %v2779
    %v3217 = vpack.c.b16 %v2782, %v2781
    %v3218 = vpack.c.b16 %v2784, %v2783
    %v3219 = vpack.c.b16 %v2786, %v2785
    %v3220 = vpack.c.b16 %v2788, %v2787
    %v3221 = vpack.c.b16 %v2790, %v2789
    %v3222 = vpack.c.b16 %v2792, %v2791
    %v3223 = vpack.c.b16 %v2794, %v2793
    %v3224 = vpack.c.b16 %v2796, %v2795
    %v3225 = vpack.c.b16 %v2798, %v2797
    %v3226 = vpack.c.b16 %v2800, %v2799
    %v3227 = vpack.c.b16 %v2802, %v2801
    %v3228 = vpack.c.b16 %v2804, %v2803
    %v3229 = vpack.c.b16 %v2806, %v2805
    %v3230 = vpack.c.b16 %v2808, %v2807
    %v3231 = vpack.c.b16 %v2810, %v2809
    %v3232 = vpack.c.b16 %v2812, %v2811
    %v3233 = vpack.c.b16 %v2814, %v2813
    %v3234 = vpack.c.b16 %v2816, %v2815
    %v3235 = vpack.c.b16 %v2818, %v2817
    %v3236 = vpack.c.b16 %v2820, %v2819
    %3653 = vmatprep.subr.bf16.mxu0 0
    %3654 = vmatpush1.bf16.msra.mxu0 %v2821
    %3655 = vmatprep.subr.bf16.mxu0 0
    %3656 = vmatpush1.bf16.msra.mxu0 %v2822
    %3657 = vmatprep.subr.bf16.mxu0 0
    %3658 = vmatpush1.bf16.msra.mxu0 %v2823
    %3659 = vmatprep.subr.bf16.mxu0 0
    %3660 = vmatpush1.bf16.msra.mxu0 %v2824
    %3661 = vmatprep.subr.bf16.mxu0 0
    %3662 = vmatpush1.bf16.msra.mxu0 %v2825
    %3663 = vmatprep.subr.bf16.mxu0 0
    %3664 = vmatpush1.bf16.msra.mxu0 %v2826
    %3665 = vmatprep.subr.bf16.mxu0 0
    %3666 = vmatpush1.bf16.msra.mxu0 %v2827
    %3667 = vmatprep.subr.bf16.mxu0 0
    %3668 = vmatpush1.bf16.msra.mxu0 %v2828
    %3669 = vmatprep.subr.bf16.mxu0 0
    %3670 = vmatpush1.bf16.msra.mxu0 %v2829
    %3671 = vmatprep.subr.bf16.mxu0 0
    %3672 = vmatpush1.bf16.msra.mxu0 %v2830
    %3673 = vmatprep.subr.bf16.mxu0 0
    %3674 = vmatpush1.bf16.msra.mxu0 %v2831
    %3675 = vmatprep.subr.bf16.mxu0 0
    %3676 = vmatpush1.bf16.msra.mxu0 %v2832
    %3677 = vmatprep.subr.bf16.mxu0 0
    %3678 = vmatpush1.bf16.msra.mxu0 %v2833
    %3679 = vmatprep.subr.bf16.mxu0 0
    %3680 = vmatpush1.bf16.msra.mxu0 %v2834
    %3681 = vmatprep.subr.bf16.mxu0 0
    %3682 = vmatpush1.bf16.msra.mxu0 %v2835
    %3683 = vmatprep.subr.bf16.mxu0 0
    %3684 = vmatpush1.bf16.msra.mxu0 %v2836
    %3685 = vmatprep.mubr.bf16.mxu0 %v1054
    %3686 = vmatmul.mubr.bf16.gmra.mrb[0].mxu0 %v1053
    %v3687 = vpop.f32.mrb[0].mxu0
    %v3688 = vadd.f32 %v973, %v3687
    %v3689 = vpop.f32.mrb[0].mxu0
    %v3690 = vpop.f32.mrb[0].mxu0
    %v3691 = vpop.f32.mrb[0].mxu0
    %3692 = vdwg.mxu0
    %3693 = vmatprep.subr.bf16.mxu0 0
    %3694 = vmatpush1.bf16.msra.mxu0 %v2837
    %3695 = vmatprep.subr.bf16.mxu0 0
    %3696 = vmatpush1.bf16.msra.mxu0 %v2838
    %3697 = vmatprep.subr.bf16.mxu0 0
    %3698 = vmatpush1.bf16.msra.mxu0 %v2839
    %3699 = vmatprep.subr.bf16.mxu0 0
    %3700 = vmatpush1.bf16.msra.mxu0 %v2840
    %3701 = vmatprep.subr.bf16.mxu0 0
    %3702 = vmatpush1.bf16.msra.mxu0 %v2841
    %3703 = vmatprep.subr.bf16.mxu0 0
    %3704 = vmatpush1.bf16.msra.mxu0 %v2842
    %3705 = vmatprep.subr.bf16.mxu0 0
    %3706 = vmatpush1.bf16.msra.mxu0 %v2843
    %3707 = vmatprep.subr.bf16.mxu0 0
    %3708 = vmatpush1.bf16.msra.mxu0 %v2844
    %3709 = vmatprep.subr.bf16.mxu0 0
    %3710 = vmatpush1.bf16.msra.mxu0 %v2845
    %3711 = vmatprep.subr.bf16.mxu0 0
    %3712 = vmatpush1.bf16.msra.mxu0 %v2846
    %3713 = vmatprep.subr.bf16.mxu0 0
    %3714 = vmatpush1.bf16.msra.mxu0 %v2847
    %3715 = vmatprep.subr.bf16.mxu0 0
    %3716 = vmatpush1.bf16.msra.mxu0 %v2848
    %3717 = vmatprep.subr.bf16.mxu0 0
    %3718 = vmatpush1.bf16.msra.mxu0 %v2849
    %3719 = vmatprep.subr.bf16.mxu0 0
    %3720 = vmatpush1.bf16.msra.mxu0 %v2850
    %3721 = vmatprep.subr.bf16.mxu0 0
    %3722 = vmatpush1.bf16.msra.mxu0 %v2851
    %3723 = vmatprep.subr.bf16.mxu0 0
    %3724 = vmatpush1.bf16.msra.mxu0 %v2852
    %3725 = vmatprep.mubr.bf16.mxu0 %v1056
    %3726 = vmatmul.mubr.bf16.gmra.mrb[0].mxu0 %v1055
    %v3727 = vpop.f32.mrb[0].mxu0
    %v3728 = vadd.f32 %v3688, %v3727
    %v3729 = vpop.f32.mrb[0].mxu0
    %v3730 = vpop.f32.mrb[0].mxu0
    %v3731 = vpop.f32.mrb[0].mxu0
    %3732 = vdwg.mxu0
    %3733 = vmatprep.subr.bf16.mxu0 0
    %3734 = vmatpush1.bf16.msra.mxu0 %v2853
    %3735 = vmatprep.subr.bf16.mxu0 0
    %3736 = vmatpush1.bf16.msra.mxu0 %v2854
    %3737 = vmatprep.subr.bf16.mxu0 0
    %3738 = vmatpush1.bf16.msra.mxu0 %v2855
    %3739 = vmatprep.subr.bf16.mxu0 0
    %3740 = vmatpush1.bf16.msra.mxu0 %v2856
    %3741 = vmatprep.subr.bf16.mxu0 0
    %3742 = vmatpush1.bf16.msra.mxu0 %v2857
    %3743 = vmatprep.subr.bf16.mxu0 0
    %3744 = vmatpush1.bf16.msra.mxu0 %v2858
    %3745 = vmatprep.subr.bf16.mxu0 0
    %3746 = vmatpush1.bf16.msra.mxu0 %v2859
    %3747 = vmatprep.subr.bf16.mxu0 0
    %3748 = vmatpush1.bf16.msra.mxu0 %v2860
    %3749 = vmatprep.subr.bf16.mxu0 0
    %3750 = vmatpush1.bf16.msra.mxu0 %v2861
    %3751 = vmatprep.subr.bf16.mxu0 0
    %3752 = vmatpush1.bf16.msra.mxu0 %v2862
    %3753 = vmatprep.subr.bf16.mxu0 0
    %3754 = vmatpush1.bf16.msra.mxu0 %v2863
    %3755 = vmatprep.subr.bf16.mxu0 0
    %3756 = vmatpush1.bf16.msra.mxu0 %v2864
    %3757 = vmatprep.subr.bf16.mxu0 0
    %3758 = vmatpush1.bf16.msra.mxu0 %v2865
    %3759 = vmatprep.subr.bf16.mxu0 0
    %3760 = vmatpush1.bf16.msra.mxu0 %v2866
    %3761 = vmatprep.subr.bf16.mxu0 0
    %3762 = vmatpush1.bf16.msra.mxu0 %v2867
    %3763 = vmatprep.subr.bf16.mxu0 0
    %3764 = vmatpush1.bf16.msra.mxu0 %v2868
    %3765 = vmatprep.mubr.bf16.mxu0 %v1058
    %3766 = vmatmul.mubr.bf16.gmra.mrb[0].mxu0 %v1057
    %v3767 = vpop.f32.mrb[0].mxu0
    %v3768 = vadd.f32 %v3728, %v3767
    %v3769 = vpop.f32.mrb[0].mxu0
    %v3770 = vpop.f32.mrb[0].mxu0
    %v3771 = vpop.f32.mrb[0].mxu0
    %3772 = vdwg.mxu0
    %3773 = vmatprep.subr.bf16.mxu0 0
    %3774 = vmatpush1.bf16.msra.mxu0 %v2869
    %3775 = vmatprep.subr.bf16.mxu0 0
    %3776 = vmatpush1.bf16.msra.mxu0 %v2870
    %3777 = vmatprep.subr.bf16.mxu0 0
    %3778 = vmatpush1.bf16.msra.mxu0 %v2871
    %3779 = vmatprep.subr.bf16.mxu0 0
    %3780 = vmatpush1.bf16.msra.mxu0 %v2872
    %3781 = vmatprep.subr.bf16.mxu0 0
    %3782 = vmatpush1.bf16.msra.mxu0 %v2873
    %3783 = vmatprep.subr.bf16.mxu0 0
    %3784 = vmatpush1.bf16.msra.mxu0 %v2874
    %3785 = vmatprep.subr.bf16.mxu0 0
    %3786 = vmatpush1.bf16.msra.mxu0 %v2875
    %3787 = vmatprep.subr.bf16.mxu0 0
    %3788 = vmatpush1.bf16.msra.mxu0 %v2876
    %3789 = vmatprep.subr.bf16.mxu0 0
    %3790 = vmatpush1.bf16.msra.mxu0 %v2877
    %3791 = vmatprep.subr.bf16.mxu0 0
    %3792 = vmatpush1.bf16.msra.mxu0 %v2878
    %3793 = vmatprep.subr.bf16.mxu0 0
    %3794 = vmatpush1.bf16.msra.mxu0 %v2879
    %3795 = vmatprep.subr.bf16.mxu0 0
    %3796 = vmatpush1.bf16.msra.mxu0 %v2880
    %3797 = vmatprep.subr.bf16.mxu0 0
    %3798 = vmatpush1.bf16.msra.mxu0 %v2881
    %3799 = vmatprep.subr.bf16.mxu0 0
    %3800 = vmatpush1.bf16.msra.mxu0 %v2882
    %3801 = vmatprep.subr.bf16.mxu0 0
    %3802 = vmatpush1.bf16.msra.mxu0 %v2883
    %3803 = vmatprep.subr.bf16.mxu0 0
    %3804 = vmatpush1.bf16.msra.mxu0 %v2884
    %3805 = vmatprep.mubr.bf16.mxu0 %v1060
    %3806 = vmatmul.mubr.bf16.gmra.mrb[0].mxu0 %v1059
    %v3807 = vpop.f32.mrb[0].mxu0
    %v3808 = vadd.f32 %v3768, %v3807
    %v3809 = vpop.f32.mrb[0].mxu0
    %v3810 = vpop.f32.mrb[0].mxu0
    %v3811 = vpop.f32.mrb[0].mxu0
    %3812 = vdwg.mxu0
    %3813 = vmatprep.subr.bf16.mxu0 0
    %3814 = vmatpush1.bf16.msra.mxu0 %v2885
    %3815 = vmatprep.subr.bf16.mxu0 0
    %3816 = vmatpush1.bf16.msra.mxu0 %v2886
    %3817 = vmatprep.subr.bf16.mxu0 0
    %3818 = vmatpush1.bf16.msra.mxu0 %v2887
    %3819 = vmatprep.subr.bf16.mxu0 0
    %3820 = vmatpush1.bf16.msra.mxu0 %v2888
    %3821 = vmatprep.subr.bf16.mxu0 0
    %3822 = vmatpush1.bf16.msra.mxu0 %v2889
    %3823 = vmatprep.subr.bf16.mxu0 0
    %3824 = vmatpush1.bf16.msra.mxu0 %v2890
    %3825 = vmatprep.subr.bf16.mxu0 0
    %3826 = vmatpush1.bf16.msra.mxu0 %v2891
    %3827 = vmatprep.subr.bf16.mxu0 0
    %3828 = vmatpush1.bf16.msra.mxu0 %v2892
    %3829 = vmatprep.subr.bf16.mxu0 0
    %3830 = vmatpush1.bf16.msra.mxu0 %v2893
    %3831 = vmatprep.subr.bf16.mxu0 0
    %3832 = vmatpush1.bf16.msra.mxu0 %v2894
    %3833 = vmatprep.subr.bf16.mxu0 0
    %3834 = vmatpush1.bf16.msra.mxu0 %v2895
    %3835 = vmatprep.subr.bf16.mxu0 0
    %3836 = vmatpush1.bf16.msra.mxu0 %v2896
    %3837 = vmatprep.subr.bf16.mxu0 0
    %3838 = vmatpush1.bf16.msra.mxu0 %v2897
    %3839 = vmatprep.subr.bf16.mxu0 0
    %3840 = vmatpush1.bf16.msra.mxu0 %v2898
    %3841 = vmatprep.subr.bf16.mxu0 0
    %3842 = vmatpush1.bf16.msra.mxu0 %v2899
    %3843 = vmatprep.subr.bf16.mxu0 0
    %3844 = vmatpush1.bf16.msra.mxu0 %v2900
    %3845 = vmatprep.mubr.bf16.mxu0 %v1062
    %3846 = vmatmul.mubr.bf16.gmra.mrb[0].mxu0 %v1061
    %v3847 = vpop.f32.mrb[0].mxu0
    %v3848 = vadd.f32 %v3808, %v3847
    %v3849 = vpop.f32.mrb[0].mxu0
    %v3850 = vpop.f32.mrb[0].mxu0
    %v3851 = vpop.f32.mrb[0].mxu0
    %3852 = vdwg.mxu0
    %3853 = vmatprep.subr.bf16.mxu0 0
    %3854 = vmatpush1.bf16.msra.mxu0 %v2901
    %3855 = vmatprep.subr.bf16.mxu0 0
    %3856 = vmatpush1.bf16.msra.mxu0 %v2902
    %3857 = vmatprep.subr.bf16.mxu0 0
    %3858 = vmatpush1.bf16.msra.mxu0 %v2903
    %3859 = vmatprep.subr.bf16.mxu0 0
    %3860 = vmatpush1.bf16.msra.mxu0 %v2904
    %3861 = vmatprep.subr.bf16.mxu0 0
    %3862 = vmatpush1.bf16.msra.mxu0 %v2905
    %3863 = vmatprep.subr.bf16.mxu0 0
    %3864 = vmatpush1.bf16.msra.mxu0 %v2906
    %3865 = vmatprep.subr.bf16.mxu0 0
    %3866 = vmatpush1.bf16.msra.mxu0 %v2907
    %3867 = vmatprep.subr.bf16.mxu0 0
    %3868 = vmatpush1.bf16.msra.mxu0 %v2908
    %3869 = vmatprep.subr.bf16.mxu0 0
    %3870 = vmatpush1.bf16.msra.mxu0 %v2909
    %3871 = vmatprep.subr.bf16.mxu0 0
    %3872 = vmatpush1.bf16.msra.mxu0 %v2910
    %3873 = vmatprep.subr.bf16.mxu0 0
    %3874 = vmatpush1.bf16.msra.mxu0 %v2911
    %3875 = vmatprep.subr.bf16.mxu0 0
    %3876 = vmatpush1.bf16.msra.mxu0 %v2912
    %3877 = vmatprep.subr.bf16.mxu0 0
    %3878 = vmatpush1.bf16.msra.mxu0 %v2913
    %3879 = vmatprep.subr.bf16.mxu0 0
    %3880 = vmatpush1.bf16.msra.mxu0 %v2914
    %3881 = vmatprep.subr.bf16.mxu0 0
    %3882 = vmatpush1.bf16.msra.mxu0 %v2915
    %3883 = vmatprep.subr.bf16.mxu0 0
    %3884 = vmatpush1.bf16.msra.mxu0 %v2916
    %3885 = vmatprep.mubr.bf16.mxu0 %v1064
    %3886 = vmatmul.mubr.bf16.gmra.mrb[0].mxu0 %v1063
    %v3887 = vpop.f32.mrb[0].mxu0
    %v3888 = vadd.f32 %v3848, %v3887
    %v3889 = vpop.f32.mrb[0].mxu0
    %v3890 = vpop.f32.mrb[0].mxu0
    %v3891 = vpop.f32.mrb[0].mxu0
    %3892 = vdwg.mxu0
    %3893 = vmatprep.subr.bf16.mxu0 0
    %3894 = vmatpush1.bf16.msra.mxu0 %v2917
    %3895 = vmatprep.subr.bf16.mxu0 0
    %3896 = vmatpush1.bf16.msra.mxu0 %v2918
    %3897 = vmatprep.subr.bf16.mxu0 0
    %3898 = vmatpush1.bf16.msra.mxu0 %v2919
    %3899 = vmatprep.subr.bf16.mxu0 0
    %3900 = vmatpush1.bf16.msra.mxu0 %v2920
    %3901 = vmatprep.subr.bf16.mxu0 0
    %3902 = vmatpush1.bf16.msra.mxu0 %v2921
    %3903 = vmatprep.subr.bf16.mxu0 0
    %3904 = vmatpush1.bf16.msra.mxu0 %v2922
    %3905 = vmatprep.subr.bf16.mxu0 0
    %3906 = vmatpush1.bf16.msra.mxu0 %v2923
    %3907 = vmatprep.subr.bf16.mxu0 0
    %3908 = vmatpush1.bf16.msra.mxu0 %v2924
    %3909 = vmatprep.subr.bf16.mxu0 0
    %3910 = vmatpush1.bf16.msra.mxu0 %v2925
    %3911 = vmatprep.subr.bf16.mxu0 0
    %3912 = vmatpush1.bf16.msra.mxu0 %v2926
    %3913 = vmatprep.subr.bf16.mxu0 0
    %3914 = vmatpush1.bf16.msra.mxu0 %v2927
    %3915 = vmatprep.subr.bf16.mxu0 0
    %3916 = vmatpush1.bf16.msra.mxu0 %v2928
    %3917 = vmatprep.subr.bf16.mxu0 0
    %3918 = vmatpush1.bf16.msra.mxu0 %v2929
    %3919 = vmatprep.subr.bf16.mxu0 0
    %3920 = vmatpush1.bf16.msra.mxu0 %v2930
    %3921 = vmatprep.subr.bf16.mxu0 0
    %3922 = vmatpush1.bf16.msra.mxu0 %v2931
    %3923 = vmatprep.subr.bf16.mxu0 0
    %3924 = vmatpush1.bf16.msra.mxu0 %v2932
    %3925 = vmatprep.mubr.bf16.mxu0 %v1066
    %3926 = vmatmul.mubr.bf16.gmra.mrb[0].mxu0 %v1065
    %v3927 = vpop.f32.mrb[0].mxu0
    %v3928 = vadd.f32 %v3888, %v3927
    %v3929 = vpop.f32.mrb[0].mxu0
    %v3930 = vpop.f32.mrb[0].mxu0
    %v3931 = vpop.f32.mrb[0].mxu0
    %3932 = vdwg.mxu0
    %3933 = vmatprep.subr.bf16.mxu0 0
    %3934 = vmatpush1.bf16.msra.mxu0 %v2933
    %3935 = vmatprep.subr.bf16.mxu0 0
    %3936 = vmatpush1.bf16.msra.mxu0 %v2934
    %3937 = vmatprep.subr.bf16.mxu0 0
    %3938 = vmatpush1.bf16.msra.mxu0 %v2935
    %3939 = vmatprep.subr.bf16.mxu0 0
    %3940 = vmatpush1.bf16.msra.mxu0 %v2936
    %3941 = vmatprep.subr.bf16.mxu0 0
    %3942 = vmatpush1.bf16.msra.mxu0 %v2937
    %3943 = vmatprep.subr.bf16.mxu0 0
    %3944 = vmatpush1.bf16.msra.mxu0 %v2938
    %3945 = vmatprep.subr.bf16.mxu0 0
    %3946 = vmatpush1.bf16.msra.mxu0 %v2939
    %3947 = vmatprep.subr.bf16.mxu0 0
    %3948 = vmatpush1.bf16.msra.mxu0 %v2940
    %3949 = vmatprep.subr.bf16.mxu0 0
    %3950 = vmatpush1.bf16.msra.mxu0 %v2941
    %3951 = vmatprep.subr.bf16.mxu0 0
    %3952 = vmatpush1.bf16.msra.mxu0 %v2942
    %3953 = vmatprep.subr.bf16.mxu0 0
    %3954 = vmatpush1.bf16.msra.mxu0 %v2943
    %3955 = vmatprep.subr.bf16.mxu0 0
    %3956 = vmatpush1.bf16.msra.mxu0 %v2944
    %3957 = vmatprep.subr.bf16.mxu0 0
    %3958 = vmatpush1.bf16.msra.mxu0 %v2945
    %3959 = vmatprep.subr.bf16.mxu0 0
    %3960 = vmatpush1.bf16.msra.mxu0 %v2946
    %3961 = vmatprep.subr.bf16.mxu0 0
    %3962 = vmatpush1.bf16.msra.mxu0 %v2947
    %3963 = vmatprep.subr.bf16.mxu0 0
    %3964 = vmatpush1.bf16.msra.mxu0 %v2948
    %3965 = vmatprep.mubr.bf16.mxu0 %v1068
    %3966 = vmatmul.mubr.bf16.gmra.mrb[0].mxu0 %v1067
    %v3967 = vpop.f32.mrb[0].mxu0
    %v3968 = vadd.f32 %v3928, %v3967
    %v3969 = vpop.f32.mrb[0].mxu0
    %v3970 = vpop.f32.mrb[0].mxu0
    %v3971 = vpop.f32.mrb[0].mxu0
    %3972 = vdwg.mxu0
    %3973 = vmatprep.subr.bf16.mxu0 0
    %3974 = vmatpush1.bf16.msra.mxu0 %v2949
    %3975 = vmatprep.subr.bf16.mxu0 0
    %3976 = vmatpush1.bf16.msra.mxu0 %v2950
    %3977 = vmatprep.subr.bf16.mxu0 0
    %3978 = vmatpush1.bf16.msra.mxu0 %v2951
    %3979 = vmatprep.subr.bf16.mxu0 0
    %3980 = vmatpush1.bf16.msra.mxu0 %v2952
    %3981 = vmatprep.subr.bf16.mxu0 0
    %3982 = vmatpush1.bf16.msra.mxu0 %v2953
    %3983 = vmatprep.subr.bf16.mxu0 0
    %3984 = vmatpush1.bf16.msra.mxu0 %v2954
    %3985 = vmatprep.subr.bf16.mxu0 0
    %3986 = vmatpush1.bf16.msra.mxu0 %v2955
    %3987 = vmatprep.subr.bf16.mxu0 0
    %3988 = vmatpush1.bf16.msra.mxu0 %v2956
    %3989 = vmatprep.subr.bf16.mxu0 0
    %3990 = vmatpush1.bf16.msra.mxu0 %v2957
    %3991 = vmatprep.subr.bf16.mxu0 0
    %3992 = vmatpush1.bf16.msra.mxu0 %v2958
    %3993 = vmatprep.subr.bf16.mxu0 0
    %3994 = vmatpush1.bf16.msra.mxu0 %v2959
    %3995 = vmatprep.subr.bf16.mxu0 0
    %3996 = vmatpush1.bf16.msra.mxu0 %v2960
    %3997 = vmatprep.subr.bf16.mxu0 0
    %3998 = vmatpush1.bf16.msra.mxu0 %v2961
    %3999 = vmatprep.subr.bf16.mxu0 0
    %4000 = vmatpush1.bf16.msra.mxu0 %v2962
    %4001 = vmatprep.subr.bf16.mxu0 0
    %4002 = vmatpush1.bf16.msra.mxu0 %v2963
    %4003 = vmatprep.subr.bf16.mxu0 0
    %4004 = vmatpush1.bf16.msra.mxu0 %v2964
    %4005 = vmatprep.mubr.bf16.mxu0 %v1070
    %4006 = vmatmul.mubr.bf16.gmra.mrb[0].mxu0 %v1069
    %v4007 = vpop.f32.mrb[0].mxu0
    %v4008 = vadd.f32 %v3968, %v4007
    %v4009 = vpop.f32.mrb[0].mxu0
    %v4010 = vpop.f32.mrb[0].mxu0
    %v4011 = vpop.f32.mrb[0].mxu0
    %4012 = vdwg.mxu0
    %4013 = vmatprep.subr.bf16.mxu0 0
    %4014 = vmatpush1.bf16.msra.mxu0 %v2965
    %4015 = vmatprep.subr.bf16.mxu0 0
    %4016 = vmatpush1.bf16.msra.mxu0 %v2966
    %4017 = vmatprep.subr.bf16.mxu0 0
    %4018 = vmatpush1.bf16.msra.mxu0 %v2967
    %4019 = vmatprep.subr.bf16.mxu0 0
    %4020 = vmatpush1.bf16.msra.mxu0 %v2968
    %4021 = vmatprep.subr.bf16.mxu0 0
    %4022 = vmatpush1.bf16.msra.mxu0 %v2969
    %4023 = vmatprep.subr.bf16.mxu0 0
    %4024 = vmatpush1.bf16.msra.mxu0 %v2970
    %4025 = vmatprep.subr.bf16.mxu0 0
    %4026 = vmatpush1.bf16.msra.mxu0 %v2971
    %4027 = vmatprep.subr.bf16.mxu0 0
    %4028 = vmatpush1.bf16.msra.mxu0 %v2972
    %4029 = vmatprep.subr.bf16.mxu0 0
    %4030 = vmatpush1.bf16.msra.mxu0 %v2973
    %4031 = vmatprep.subr.bf16.mxu0 0
    %4032 = vmatpush1.bf16.msra.mxu0 %v2974
    %4033 = vmatprep.subr.bf16.mxu0 0
    %4034 = vmatpush1.bf16.msra.mxu0 %v2975
    %4035 = vmatprep.subr.bf16.mxu0 0
    %4036 = vmatpush1.bf16.msra.mxu0 %v2976
    %4037 = vmatprep.subr.bf16.mxu0 0
    %4038 = vmatpush1.bf16.msra.mxu0 %v2977
    %4039 = vmatprep.subr.bf16.mxu0 0
    %4040 = vmatpush1.bf16.msra.mxu0 %v2978
    %4041 = vmatprep.subr.bf16.mxu0 0
    %4042 = vmatpush1.bf16.msra.mxu0 %v2979
    %4043 = vmatprep.subr.bf16.mxu0 0
    %4044 = vmatpush1.bf16.msra.mxu0 %v2980
    %4045 = vmatprep.mubr.bf16.mxu0 %v1072
    %4046 = vmatmul.mubr.bf16.gmra.mrb[0].mxu0 %v1071
    %v4047 = vpop.f32.mrb[0].mxu0
    %v4048 = vadd.f32 %v4008, %v4047
    %v4049 = vpop.f32.mrb[0].mxu0
    %v4050 = vpop.f32.mrb[0].mxu0
    %v4051 = vpop.f32.mrb[0].mxu0
    %4052 = vdwg.mxu0
    %4053 = vmatprep.subr.bf16.mxu0 0
    %4054 = vmatpush1.bf16.msra.mxu0 %v2981
    %4055 = vmatprep.subr.bf16.mxu0 0
    %4056 = vmatpush1.bf16.msra.mxu0 %v2982
    %4057 = vmatprep.subr.bf16.mxu0 0
    %4058 = vmatpush1.bf16.msra.mxu0 %v2983
    %4059 = vmatprep.subr.bf16.mxu0 0
    %4060 = vmatpush1.bf16.msra.mxu0 %v2984
    %4061 = vmatprep.subr.bf16.mxu0 0
    %4062 = vmatpush1.bf16.msra.mxu0 %v2985
    %4063 = vmatprep.subr.bf16.mxu0 0
    %4064 = vmatpush1.bf16.msra.mxu0 %v2986
    %4065 = vmatprep.subr.bf16.mxu0 0
    %4066 = vmatpush1.bf16.msra.mxu0 %v2987
    %4067 = vmatprep.subr.bf16.mxu0 0
    %4068 = vmatpush1.bf16.msra.mxu0 %v2988
    %4069 = vmatprep.subr.bf16.mxu0 0
    %4070 = vmatpush1.bf16.msra.mxu0 %v2989
    %4071 = vmatprep.subr.bf16.mxu0 0
    %4072 = vmatpush1.bf16.msra.mxu0 %v2990
    %4073 = vmatprep.subr.bf16.mxu0 0
    %4074 = vmatpush1.bf16.msra.mxu0 %v2991
    %4075 = vmatprep.subr.bf16.mxu0 0
    %4076 = vmatpush1.bf16.msra.mxu0 %v2992
    %4077 = vmatprep.subr.bf16.mxu0 0
    %4078 = vmatpush1.bf16.msra.mxu0 %v2993
    %4079 = vmatprep.subr.bf16.mxu0 0
    %4080 = vmatpush1.bf16.msra.mxu0 %v2994
    %4081 = vmatprep.subr.bf16.mxu0 0
    %4082 = vmatpush1.bf16.msra.mxu0 %v2995
    %4083 = vmatprep.subr.bf16.mxu0 0
    %4084 = vmatpush1.bf16.msra.mxu0 %v2996
    %4085 = vmatprep.mubr.bf16.mxu0 %v1074
    %4086 = vmatmul.mubr.bf16.gmra.mrb[0].mxu0 %v1073
    %v4087 = vpop.f32.mrb[0].mxu0
    %v4088 = vadd.f32 %v4048, %v4087
    %v4089 = vpop.f32.mrb[0].mxu0
    %v4090 = vpop.f32.mrb[0].mxu0
    %v4091 = vpop.f32.mrb[0].mxu0
    %4092 = vdwg.mxu0
    %4093 = vmatprep.subr.bf16.mxu0 0
    %4094 = vmatpush1.bf16.msra.mxu0 %v2997
    %4095 = vmatprep.subr.bf16.mxu0 0
    %4096 = vmatpush1.bf16.msra.mxu0 %v2998
    %4097 = vmatprep.subr.bf16.mxu0 0
    %4098 = vmatpush1.bf16.msra.mxu0 %v2999
    %4099 = vmatprep.subr.bf16.mxu0 0
    %4100 = vmatpush1.bf16.msra.mxu0 %v3000
    %4101 = vmatprep.subr.bf16.mxu0 0
    %4102 = vmatpush1.bf16.msra.mxu0 %v3001
    %4103 = vmatprep.subr.bf16.mxu0 0
    %4104 = vmatpush1.bf16.msra.mxu0 %v3002
    %4105 = vmatprep.subr.bf16.mxu0 0
    %4106 = vmatpush1.bf16.msra.mxu0 %v3003
    %4107 = vmatprep.subr.bf16.mxu0 0
    %4108 = vmatpush1.bf16.msra.mxu0 %v3004
    %4109 = vmatprep.subr.bf16.mxu0 0
    %4110 = vmatpush1.bf16.msra.mxu0 %v3005
    %4111 = vmatprep.subr.bf16.mxu0 0
    %4112 = vmatpush1.bf16.msra.mxu0 %v3006
    %4113 = vmatprep.subr.bf16.mxu0 0
    %4114 = vmatpush1.bf16.msra.mxu0 %v3007
    %4115 = vmatprep.subr.bf16.mxu0 0
    %4116 = vmatpush1.bf16.msra.mxu0 %v3008
    %4117 = vmatprep.subr.bf16.mxu0 0
    %4118 = vmatpush1.bf16.msra.mxu0 %v3009
    %4119 = vmatprep.subr.bf16.mxu0 0
    %4120 = vmatpush1.bf16.msra.mxu0 %v3010
    %4121 = vmatprep.subr.bf16.mxu0 0
    %4122 = vmatpush1.bf16.msra.mxu0 %v3011
    %4123 = vmatprep.subr.bf16.mxu0 0
    %4124 = vmatpush1.bf16.msra.mxu0 %v3012
    %4125 = vmatprep.mubr.bf16.mxu0 %v1076
    %4126 = vmatmul.mubr.bf16.gmra.mrb[0].mxu0 %v1075
    %v4127 = vpop.f32.mrb[0].mxu0
    %v4128 = vadd.f32 %v4088, %v4127
    %v4129 = vpop.f32.mrb[0].mxu0
    %v4130 = vpop.f32.mrb[0].mxu0
    %v4131 = vpop.f32.mrb[0].mxu0
    %4132 = vdwg.mxu0
    %4133 = vmatprep.subr.bf16.mxu0 0
    %4134 = vmatpush1.bf16.msra.mxu0 %v3013
    %4135 = vmatprep.subr.bf16.mxu0 0
    %4136 = vmatpush1.bf16.msra.mxu0 %v3014
    %4137 = vmatprep.subr.bf16.mxu0 0
    %4138 = vmatpush1.bf16.msra.mxu0 %v3015
    %4139 = vmatprep.subr.bf16.mxu0 0
    %4140 = vmatpush1.bf16.msra.mxu0 %v3016
    %4141 = vmatprep.subr.bf16.mxu0 0
    %4142 = vmatpush1.bf16.msra.mxu0 %v3017
    %4143 = vmatprep.subr.bf16.mxu0 0
    %4144 = vmatpush1.bf16.msra.mxu0 %v3018
    %4145 = vmatprep.subr.bf16.mxu0 0
    %4146 = vmatpush1.bf16.msra.mxu0 %v3019
    %4147 = vmatprep.subr.bf16.mxu0 0
    %4148 = vmatpush1.bf16.msra.mxu0 %v3020
    %4149 = vmatprep.subr.bf16.mxu0 0
    %4150 = vmatpush1.bf16.msra.mxu0 %v3021
    %4151 = vmatprep.subr.bf16.mxu0 0
    %4152 = vmatpush1.bf16.msra.mxu0 %v3022
    %4153 = vmatprep.subr.bf16.mxu0 0
    %4154 = vmatpush1.bf16.msra.mxu0 %v3023
    %4155 = vmatprep.subr.bf16.mxu0 0
    %4156 = vmatpush1.bf16.msra.mxu0 %v3024
    %4157 = vmatprep.subr.bf16.mxu0 0
    %4158 = vmatpush1.bf16.msra.mxu0 %v3025
    %4159 = vmatprep.subr.bf16.mxu0 0
    %4160 = vmatpush1.bf16.msra.mxu0 %v3026
    %4161 = vmatprep.subr.bf16.mxu0 0
    %4162 = vmatpush1.bf16.msra.mxu0 %v3027
    %4163 = vmatprep.subr.bf16.mxu0 0
    %4164 = vmatpush1.bf16.msra.mxu0 %v3028
    %4165 = vmatprep.mubr.bf16.mxu0 %v1078
    %4166 = vmatmul.mubr.bf16.gmra.mrb[0].mxu0 %v1077
    %v4167 = vpop.f32.mrb[0].mxu0
    %v4168 = vadd.f32 %v4128, %v4167
    %v4169 = vpop.f32.mrb[0].mxu0
    %v4170 = vpop.f32.mrb[0].mxu0
    %v4171 = vpop.f32.mrb[0].mxu0
    %4172 = vdwg.mxu0
    %4173 = vmatprep.subr.bf16.mxu0 0
    %4174 = vmatpush1.bf16.msra.mxu0 %v3029
    %4175 = vmatprep.subr.bf16.mxu0 0
    %4176 = vmatpush1.bf16.msra.mxu0 %v3030
    %4177 = vmatprep.subr.bf16.mxu0 0
    %4178 = vmatpush1.bf16.msra.mxu0 %v3031
    %4179 = vmatprep.subr.bf16.mxu0 0
    %4180 = vmatpush1.bf16.msra.mxu0 %v3032
    %4181 = vmatprep.subr.bf16.mxu0 0
    %4182 = vmatpush1.bf16.msra.mxu0 %v3033
    %4183 = vmatprep.subr.bf16.mxu0 0
    %4184 = vmatpush1.bf16.msra.mxu0 %v3034
    %4185 = vmatprep.subr.bf16.mxu0 0
    %4186 = vmatpush1.bf16.msra.mxu0 %v3035
    %4187 = vmatprep.subr.bf16.mxu0 0
    %4188 = vmatpush1.bf16.msra.mxu0 %v3036
    %4189 = vmatprep.subr.bf16.mxu0 0
    %4190 = vmatpush1.bf16.msra.mxu0 %v3037
    %4191 = vmatprep.subr.bf16.mxu0 0
    %4192 = vmatpush1.bf16.msra.mxu0 %v3038
    %4193 = vmatprep.subr.bf16.mxu0 0
    %4194 = vmatpush1.bf16.msra.mxu0 %v3039
    %4195 = vmatprep.subr.bf16.mxu0 0
    %4196 = vmatpush1.bf16.msra.mxu0 %v3040
    %4197 = vmatprep.subr.bf16.mxu0 0
    %4198 = vmatpush1.bf16.msra.mxu0 %v3041
    %4199 = vmatprep.subr.bf16.mxu0 0
    %4200 = vmatpush1.bf16.msra.mxu0 %v3042
    %4201 = vmatprep.subr.bf16.mxu0 0
    %4202 = vmatpush1.bf16.msra.mxu0 %v3043
    %4203 = vmatprep.subr.bf16.mxu0 0
    %4204 = vmatpush1.bf16.msra.mxu0 %v3044
    %4205 = vmatprep.mubr.bf16.mxu0 %v1080
    %4206 = vmatmul.mubr.bf16.gmra.mrb[0].mxu0 %v1079
    %v4207 = vpop.f32.mrb[0].mxu0
    %v4208 = vadd.f32 %v4168, %v4207
    %v4209 = vpop.f32.mrb[0].mxu0
    %v4210 = vpop.f32.mrb[0].mxu0
    %v4211 = vpop.f32.mrb[0].mxu0
    %4212 = vdwg.mxu0
    %4213 = vmatprep.subr.bf16.mxu0 0
    %4214 = vmatpush1.bf16.msra.mxu0 %v3045
    %4215 = vmatprep.subr.bf16.mxu0 0
    %4216 = vmatpush1.bf16.msra.mxu0 %v3046
    %4217 = vmatprep.subr.bf16.mxu0 0
    %4218 = vmatpush1.bf16.msra.mxu0 %v3047
    %4219 = vmatprep.subr.bf16.mxu0 0
    %4220 = vmatpush1.bf16.msra.mxu0 %v3048
    %4221 = vmatprep.subr.bf16.mxu0 0
    %4222 = vmatpush1.bf16.msra.mxu0 %v3049
    %4223 = vmatprep.subr.bf16.mxu0 0
    %4224 = vmatpush1.bf16.msra.mxu0 %v3050
    %4225 = vmatprep.subr.bf16.mxu0 0
    %4226 = vmatpush1.bf16.msra.mxu0 %v3051
    %4227 = vmatprep.subr.bf16.mxu0 0
    %4228 = vmatpush1.bf16.msra.mxu0 %v3052
    %4229 = vmatprep.subr.bf16.mxu0 0
    %4230 = vmatpush1.bf16.msra.mxu0 %v3053
    %4231 = vmatprep.subr.bf16.mxu0 0
    %4232 = vmatpush1.bf16.msra.mxu0 %v3054
    %4233 = vmatprep.subr.bf16.mxu0 0
    %4234 = vmatpush1.bf16.msra.mxu0 %v3055
    %4235 = vmatprep.subr.bf16.mxu0 0
    %4236 = vmatpush1.bf16.msra.mxu0 %v3056
    %4237 = vmatprep.subr.bf16.mxu0 0
    %4238 = vmatpush1.bf16.msra.mxu0 %v3057
    %4239 = vmatprep.subr.bf16.mxu0 0
    %4240 = vmatpush1.bf16.msra.mxu0 %v3058
    %4241 = vmatprep.subr.bf16.mxu0 0
    %4242 = vmatpush1.bf16.msra.mxu0 %v3059
    %4243 = vmatprep.subr.bf16.mxu0 0
    %4244 = vmatpush1.bf16.msra.mxu0 %v3060
    %4245 = vmatprep.mubr.bf16.mxu0 %v1082
    %4246 = vmatmul.mubr.bf16.gmra.mrb[0].mxu0 %v1081
    %v4247 = vpop.f32.mrb[0].mxu0
    %v4248 = vadd.f32 %v4208, %v4247
    %v4249 = vpop.f32.mrb[0].mxu0
    %v4250 = vpop.f32.mrb[0].mxu0
    %v4251 = vpop.f32.mrb[0].mxu0
    %4252 = vdwg.mxu0
    %4253 = vmatprep.subr.bf16.mxu0 0
    %4254 = vmatpush1.bf16.msra.mxu0 %v3061
    %4255 = vmatprep.subr.bf16.mxu0 0
    %4256 = vmatpush1.bf16.msra.mxu0 %v3062
    %4257 = vmatprep.subr.bf16.mxu0 0
    %4258 = vmatpush1.bf16.msra.mxu0 %v3063
    %4259 = vmatprep.subr.bf16.mxu0 0
    %4260 = vmatpush1.bf16.msra.mxu0 %v3064
    %4261 = vmatprep.subr.bf16.mxu0 0
    %4262 = vmatpush1.bf16.msra.mxu0 %v3065
    %4263 = vmatprep.subr.bf16.mxu0 0
    %4264 = vmatpush1.bf16.msra.mxu0 %v3066
    %4265 = vmatprep.subr.bf16.mxu0 0
    %4266 = vmatpush1.bf16.msra.mxu0 %v3067
    %4267 = vmatprep.subr.bf16.mxu0 0
    %4268 = vmatpush1.bf16.msra.mxu0 %v3068
    %4269 = vmatprep.subr.bf16.mxu0 0
    %4270 = vmatpush1.bf16.msra.mxu0 %v3069
    %4271 = vmatprep.subr.bf16.mxu0 0
    %4272 = vmatpush1.bf16.msra.mxu0 %v3070
    %4273 = vmatprep.subr.bf16.mxu0 0
    %4274 = vmatpush1.bf16.msra.mxu0 %v3071
    %4275 = vmatprep.subr.bf16.mxu0 0
    %4276 = vmatpush1.bf16.msra.mxu0 %v3072
    %4277 = vmatprep.subr.bf16.mxu0 0
    %4278 = vmatpush1.bf16.msra.mxu0 %v3073
    %4279 = vmatprep.subr.bf16.mxu0 0
    %4280 = vmatpush1.bf16.msra.mxu0 %v3074
    %4281 = vmatprep.subr.bf16.mxu0 0
    %4282 = vmatpush1.bf16.msra.mxu0 %v3075
    %4283 = vmatprep.subr.bf16.mxu0 0
    %4284 = vmatpush1.bf16.msra.mxu0 %v3076
    %4285 = vmatprep.mubr.bf16.mxu0 %v1084
    %4286 = vmatmul.mubr.bf16.gmra.mrb[0].mxu0 %v1083
    %v4287 = vpop.f32.mrb[0].mxu0
    %v4288 = vadd.f32 %v4248, %v4287
    %v4289 = vpop.f32.mrb[0].mxu0
    %v4290 = vpop.f32.mrb[0].mxu0
    %v4291 = vpop.f32.mrb[0].mxu0
    %4292 = vdwg.mxu0
    %4293 = vmatprep.subr.bf16.mxu0 0
    %4294 = vmatpush1.bf16.msra.mxu0 %v3077
    %4295 = vmatprep.subr.bf16.mxu0 0
    %4296 = vmatpush1.bf16.msra.mxu0 %v3078
    %4297 = vmatprep.subr.bf16.mxu0 0
    %4298 = vmatpush1.bf16.msra.mxu0 %v3079
    %4299 = vmatprep.subr.bf16.mxu0 0
    %4300 = vmatpush1.bf16.msra.mxu0 %v3080
    %4301 = vmatprep.subr.bf16.mxu0 0
    %4302 = vmatpush1.bf16.msra.mxu0 %v3081
    %4303 = vmatprep.subr.bf16.mxu0 0
    %4304 = vmatpush1.bf16.msra.mxu0 %v3082
    %4305 = vmatprep.subr.bf16.mxu0 0
    %4306 = vmatpush1.bf16.msra.mxu0 %v3083
    %4307 = vmatprep.subr.bf16.mxu0 0
    %4308 = vmatpush1.bf16.msra.mxu0 %v3084
    %4309 = vmatprep.subr.bf16.mxu0 0
    %4310 = vmatpush1.bf16.msra.mxu0 %v3085
    %4311 = vmatprep.subr.bf16.mxu0 0
    %4312 = vmatpush1.bf16.msra.mxu0 %v3086
    %4313 = vmatprep.subr.bf16.mxu0 0
    %4314 = vmatpush1.bf16.msra.mxu0 %v3087
    %4315 = vmatprep.subr.bf16.mxu0 0
    %4316 = vmatpush1.bf16.msra.mxu0 %v3088
    %4317 = vmatprep.subr.bf16.mxu0 0
    %4318 = vmatpush1.bf16.msra.mxu0 %v3089
    %4319 = vmatprep.subr.bf16.mxu0 0
    %4320 = vmatpush1.bf16.msra.mxu0 %v3090
    %4321 = vmatprep.subr.bf16.mxu0 0
    %4322 = vmatpush1.bf16.msra.mxu0 %v3091
    %4323 = vmatprep.subr.bf16.mxu0 0
    %4324 = vmatpush1.bf16.msra.mxu0 %v3092
    %4325 = vmatprep.mubr.bf16.mxu0 %v1086
    %4326 = vmatmul.mubr.bf16.gmra.mrb[0].mxu0 %v1085
    %v4327 = vpop.f32.mrb[0].mxu0
    %v4328 = vadd.f32 %v4288, %v4327
    %v4329 = vpop.f32.mrb[0].mxu0
    %v4330 = vpop.f32.mrb[0].mxu0
    %v4331 = vpop.f32.mrb[0].mxu0
    %4332 = vdwg.mxu0
    %4333 = vmatprep.subr.bf16.mxu0 0
    %4334 = vmatpush1.bf16.msra.mxu0 %v3093
    %4335 = vmatprep.subr.bf16.mxu0 0
    %4336 = vmatpush1.bf16.msra.mxu0 %v3094
    %4337 = vmatprep.subr.bf16.mxu0 0
    %4338 = vmatpush1.bf16.msra.mxu0 %v3095
    %4339 = vmatprep.subr.bf16.mxu0 0
    %4340 = vmatpush1.bf16.msra.mxu0 %v3096
    %4341 = vmatprep.subr.bf16.mxu0 0
    %4342 = vmatpush1.bf16.msra.mxu0 %v3097
    %4343 = vmatprep.subr.bf16.mxu0 0
    %4344 = vmatpush1.bf16.msra.mxu0 %v3098
    %4345 = vmatprep.subr.bf16.mxu0 0
    %4346 = vmatpush1.bf16.msra.mxu0 %v3099
    %4347 = vmatprep.subr.bf16.mxu0 0
    %4348 = vmatpush1.bf16.msra.mxu0 %v3100
    %4349 = vmatprep.subr.bf16.mxu0 0
    %4350 = vmatpush1.bf16.msra.mxu0 %v3101
    %4351 = vmatprep.subr.bf16.mxu0 0
    %4352 = vmatpush1.bf16.msra.mxu0 %v3102
    %4353 = vmatprep.subr.bf16.mxu0 0
    %4354 = vmatpush1.bf16.msra.mxu0 %v3103
    %4355 = vmatprep.subr.bf16.mxu0 0
    %4356 = vmatpush1.bf16.msra.mxu0 %v3104
    %4357 = vmatprep.subr.bf16.mxu0 0
    %4358 = vmatpush1.bf16.msra.mxu0 %v3105
    %4359 = vmatprep.subr.bf16.mxu0 0
    %4360 = vmatpush1.bf16.msra.mxu0 %v3106
    %4361 = vmatprep.subr.bf16.mxu0 0
    %4362 = vmatpush1.bf16.msra.mxu0 %v3107
    %4363 = vmatprep.subr.bf16.mxu0 0
    %4364 = vmatpush1.bf16.msra.mxu0 %v3108
    %4365 = vmatprep.mubr.bf16.mxu0 %v1088
    %4366 = vmatmul.mubr.bf16.gmra.mrb[0].mxu0 %v1087
    %v4367 = vpop.f32.mrb[0].mxu0
    %v4368 = vadd.f32 %v4328, %v4367
    %v4369 = vpop.f32.mrb[0].mxu0
    %v4370 = vpop.f32.mrb[0].mxu0
    %v4371 = vpop.f32.mrb[0].mxu0
    %4372 = vdwg.mxu0
    %4373 = vmatprep.subr.bf16.mxu0 0
    %4374 = vmatpush1.bf16.msra.mxu0 %v3109
    %4375 = vmatprep.subr.bf16.mxu0 0
    %4376 = vmatpush1.bf16.msra.mxu0 %v3110
    %4377 = vmatprep.subr.bf16.mxu0 0
    %4378 = vmatpush1.bf16.msra.mxu0 %v3111
    %4379 = vmatprep.subr.bf16.mxu0 0
    %4380 = vmatpush1.bf16.msra.mxu0 %v3112
    %4381 = vmatprep.subr.bf16.mxu0 0
    %4382 = vmatpush1.bf16.msra.mxu0 %v3113
    %4383 = vmatprep.subr.bf16.mxu0 0
    %4384 = vmatpush1.bf16.msra.mxu0 %v3114
    %4385 = vmatprep.subr.bf16.mxu0 0
    %4386 = vmatpush1.bf16.msra.mxu0 %v3115
    %4387 = vmatprep.subr.bf16.mxu0 0
    %4388 = vmatpush1.bf16.msra.mxu0 %v3116
    %4389 = vmatprep.subr.bf16.mxu0 0
    %4390 = vmatpush1.bf16.msra.mxu0 %v3117
    %4391 = vmatprep.subr.bf16.mxu0 0
    %4392 = vmatpush1.bf16.msra.mxu0 %v3118
    %4393 = vmatprep.subr.bf16.mxu0 0
    %4394 = vmatpush1.bf16.msra.mxu0 %v3119
    %4395 = vmatprep.subr.bf16.mxu0 0
    %4396 = vmatpush1.bf16.msra.mxu0 %v3120
    %4397 = vmatprep.subr.bf16.mxu0 0
    %4398 = vmatpush1.bf16.msra.mxu0 %v3121
    %4399 = vmatprep.subr.bf16.mxu0 0
    %4400 = vmatpush1.bf16.msra.mxu0 %v3122
    %4401 = vmatprep.subr.bf16.mxu0 0
    %4402 = vmatpush1.bf16.msra.mxu0 %v3123
    %4403 = vmatprep.subr.bf16.mxu0 0
    %4404 = vmatpush1.bf16.msra.mxu0 %v3124
    %4405 = vmatprep.mubr.bf16.mxu0 %v1090
    %4406 = vmatmul.mubr.bf16.gmra.mrb[0].mxu0 %v1089
    %v4407 = vpop.f32.mrb[0].mxu0
    %v4408 = vadd.f32 %v4368, %v4407
    %v4409 = vpop.f32.mrb[0].mxu0
    %v4410 = vpop.f32.mrb[0].mxu0
    %v4411 = vpop.f32.mrb[0].mxu0
    %4412 = vdwg.mxu0
    %4413 = vmatprep.subr.bf16.mxu0 0
    %4414 = vmatpush1.bf16.msra.mxu0 %v3125
    %4415 = vmatprep.subr.bf16.mxu0 0
    %4416 = vmatpush1.bf16.msra.mxu0 %v3126
    %4417 = vmatprep.subr.bf16.mxu0 0
    %4418 = vmatpush1.bf16.msra.mxu0 %v3127
    %4419 = vmatprep.subr.bf16.mxu0 0
    %4420 = vmatpush1.bf16.msra.mxu0 %v3128
    %4421 = vmatprep.subr.bf16.mxu0 0
    %4422 = vmatpush1.bf16.msra.mxu0 %v3129
    %4423 = vmatprep.subr.bf16.mxu0 0
    %4424 = vmatpush1.bf16.msra.mxu0 %v3130
    %4425 = vmatprep.subr.bf16.mxu0 0
    %4426 = vmatpush1.bf16.msra.mxu0 %v3131
    %4427 = vmatprep.subr.bf16.mxu0 0
    %4428 = vmatpush1.bf16.msra.mxu0 %v3132
    %4429 = vmatprep.subr.bf16.mxu0 0
    %4430 = vmatpush1.bf16.msra.mxu0 %v3133
    %4431 = vmatprep.subr.bf16.mxu0 0
    %4432 = vmatpush1.bf16.msra.mxu0 %v3134
    %4433 = vmatprep.subr.bf16.mxu0 0
    %4434 = vmatpush1.bf16.msra.mxu0 %v3135
    %4435 = vmatprep.subr.bf16.mxu0 0
    %4436 = vmatpush1.bf16.msra.mxu0 %v3136
    %4437 = vmatprep.subr.bf16.mxu0 0
    %4438 = vmatpush1.bf16.msra.mxu0 %v3137
    %4439 = vmatprep.subr.bf16.mxu0 0
    %4440 = vmatpush1.bf16.msra.mxu0 %v3138
    %4441 = vmatprep.subr.bf16.mxu0 0
    %4442 = vmatpush1.bf16.msra.mxu0 %v3139
    %4443 = vmatprep.subr.bf16.mxu0 0
    %4444 = vmatpush1.bf16.msra.mxu0 %v3140
    %4445 = vmatprep.mubr.bf16.mxu0 %v1092
    %4446 = vmatmul.mubr.bf16.gmra.mrb[0].mxu0 %v1091
    %v4447 = vpop.f32.mrb[0].mxu0
    %v4448 = vadd.f32 %v4408, %v4447
    %v4449 = vpop.f32.mrb[0].mxu0
    %v4450 = vpop.f32.mrb[0].mxu0
    %v4451 = vpop.f32.mrb[0].mxu0
    %4452 = vdwg.mxu0
    %4453 = vmatprep.subr.bf16.mxu0 0
    %4454 = vmatpush1.bf16.msra.mxu0 %v3141
    %4455 = vmatprep.subr.bf16.mxu0 0
    %4456 = vmatpush1.bf16.msra.mxu0 %v3142
    %4457 = vmatprep.subr.bf16.mxu0 0
    %4458 = vmatpush1.bf16.msra.mxu0 %v3143
    %4459 = vmatprep.subr.bf16.mxu0 0
    %4460 = vmatpush1.bf16.msra.mxu0 %v3144
    %4461 = vmatprep.subr.bf16.mxu0 0
    %4462 = vmatpush1.bf16.msra.mxu0 %v3145
    %4463 = vmatprep.subr.bf16.mxu0 0
    %4464 = vmatpush1.bf16.msra.mxu0 %v3146
    %4465 = vmatprep.subr.bf16.mxu0 0
    %4466 = vmatpush1.bf16.msra.mxu0 %v3147
    %4467 = vmatprep.subr.bf16.mxu0 0
    %4468 = vmatpush1.bf16.msra.mxu0 %v3148
    %4469 = vmatprep.subr.bf16.mxu0 0
    %4470 = vmatpush1.bf16.msra.mxu0 %v3149
    %4471 = vmatprep.subr.bf16.mxu0 0
    %4472 = vmatpush1.bf16.msra.mxu0 %v3150
    %4473 = vmatprep.subr.bf16.mxu0 0
    %4474 = vmatpush1.bf16.msra.mxu0 %v3151
    %4475 = vmatprep.subr.bf16.mxu0 0
    %4476 = vmatpush1.bf16.msra.mxu0 %v3152
    %4477 = vmatprep.subr.bf16.mxu0 0
    %4478 = vmatpush1.bf16.msra.mxu0 %v3153
    %4479 = vmatprep.subr.bf16.mxu0 0
    %4480 = vmatpush1.bf16.msra.mxu0 %v3154
    %4481 = vmatprep.subr.bf16.mxu0 0
    %4482 = vmatpush1.bf16.msra.mxu0 %v3155
    %4483 = vmatprep.subr.bf16.mxu0 0
    %4484 = vmatpush1.bf16.msra.mxu0 %v3156
    %4485 = vmatprep.mubr.bf16.mxu0 %v1094
    %4486 = vmatmul.mubr.bf16.gmra.mrb[0].mxu0 %v1093
    %v4487 = vpop.f32.mrb[0].mxu0
    %v4488 = vadd.f32 %v4448, %v4487
    %v4489 = vpop.f32.mrb[0].mxu0
    %v4490 = vpop.f32.mrb[0].mxu0
    %v4491 = vpop.f32.mrb[0].mxu0
    %4492 = vdwg.mxu0
    %4493 = vmatprep.subr.bf16.mxu0 0
    %4494 = vmatpush1.bf16.msra.mxu0 %v3157
    %4495 = vmatprep.subr.bf16.mxu0 0
    %4496 = vmatpush1.bf16.msra.mxu0 %v3158
    %4497 = vmatprep.subr.bf16.mxu0 0
    %4498 = vmatpush1.bf16.msra.mxu0 %v3159
    %4499 = vmatprep.subr.bf16.mxu0 0
    %4500 = vmatpush1.bf16.msra.mxu0 %v3160
    %4501 = vmatprep.subr.bf16.mxu0 0
    %4502 = vmatpush1.bf16.msra.mxu0 %v3161
    %4503 = vmatprep.subr.bf16.mxu0 0
    %4504 = vmatpush1.bf16.msra.mxu0 %v3162
    %4505 = vmatprep.subr.bf16.mxu0 0
    %4506 = vmatpush1.bf16.msra.mxu0 %v3163
    %4507 = vmatprep.subr.bf16.mxu0 0
    %4508 = vmatpush1.bf16.msra.mxu0 %v3164
    %4509 = vmatprep.subr.bf16.mxu0 0
    %4510 = vmatpush1.bf16.msra.mxu0 %v3165
    %4511 = vmatprep.subr.bf16.mxu0 0
    %4512 = vmatpush1.bf16.msra.mxu0 %v3166
    %4513 = vmatprep.subr.bf16.mxu0 0
    %4514 = vmatpush1.bf16.msra.mxu0 %v3167
    %4515 = vmatprep.subr.bf16.mxu0 0
    %4516 = vmatpush1.bf16.msra.mxu0 %v3168
    %4517 = vmatprep.subr.bf16.mxu0 0
    %4518 = vmatpush1.bf16.msra.mxu0 %v3169
    %4519 = vmatprep.subr.bf16.mxu0 0
    %4520 = vmatpush1.bf16.msra.mxu0 %v3170
    %4521 = vmatprep.subr.bf16.mxu0 0
    %4522 = vmatpush1.bf16.msra.mxu0 %v3171
    %4523 = vmatprep.subr.bf16.mxu0 0
    %4524 = vmatpush1.bf16.msra.mxu0 %v3172
    %4525 = vmatprep.mubr.bf16.mxu0 %v1096
    %4526 = vmatmul.mubr.bf16.gmra.mrb[0].mxu0 %v1095
    %v4527 = vpop.f32.mrb[0].mxu0
    %v4528 = vadd.f32 %v4488, %v4527
    %v4529 = vpop.f32.mrb[0].mxu0
    %v4530 = vpop.f32.mrb[0].mxu0
    %v4531 = vpop.f32.mrb[0].mxu0
    %4532 = vdwg.mxu0
    %4533 = vmatprep.subr.bf16.mxu0 0
    %4534 = vmatpush1.bf16.msra.mxu0 %v3173
    %4535 = vmatprep.subr.bf16.mxu0 0
    %4536 = vmatpush1.bf16.msra.mxu0 %v3174
    %4537 = vmatprep.subr.bf16.mxu0 0
    %4538 = vmatpush1.bf16.msra.mxu0 %v3175
    %4539 = vmatprep.subr.bf16.mxu0 0
    %4540 = vmatpush1.bf16.msra.mxu0 %v3176
    %4541 = vmatprep.subr.bf16.mxu0 0
    %4542 = vmatpush1.bf16.msra.mxu0 %v3177
    %4543 = vmatprep.subr.bf16.mxu0 0
    %4544 = vmatpush1.bf16.msra.mxu0 %v3178
    %4545 = vmatprep.subr.bf16.mxu0 0
    %4546 = vmatpush1.bf16.msra.mxu0 %v3179
    %4547 = vmatprep.subr.bf16.mxu0 0
    %4548 = vmatpush1.bf16.msra.mxu0 %v3180
    %4549 = vmatprep.subr.bf16.mxu0 0
    %4550 = vmatpush1.bf16.msra.mxu0 %v3181
    %4551 = vmatprep.subr.bf16.mxu0 0
    %4552 = vmatpush1.bf16.msra.mxu0 %v3182
    %4553 = vmatprep.subr.bf16.mxu0 0
    %4554 = vmatpush1.bf16.msra.mxu0 %v3183
    %4555 = vmatprep.subr.bf16.mxu0 0
    %4556 = vmatpush1.bf16.msra.mxu0 %v3184
    %4557 = vmatprep.subr.bf16.mxu0 0
    %4558 = vmatpush1.bf16.msra.mxu0 %v3185
    %4559 = vmatprep.subr.bf16.mxu0 0
    %4560 = vmatpush1.bf16.msra.mxu0 %v3186
    %4561 = vmatprep.subr.bf16.mxu0 0
    %4562 = vmatpush1.bf16.msra.mxu0 %v3187
    %4563 = vmatprep.subr.bf16.mxu0 0
    %4564 = vmatpush1.bf16.msra.mxu0 %v3188
    %4565 = vmatprep.mubr.bf16.mxu0 %v1098
    %4566 = vmatmul.mubr.bf16.gmra.mrb[0].mxu0 %v1097
    %v4567 = vpop.f32.mrb[0].mxu0
    %v4568 = vadd.f32 %v4528, %v4567
    %v4569 = vpop.f32.mrb[0].mxu0
    %v4570 = vpop.f32.mrb[0].mxu0
    %v4571 = vpop.f32.mrb[0].mxu0
    %4572 = vdwg.mxu0
    %4573 = vmatprep.subr.bf16.mxu0 0
    %4574 = vmatpush1.bf16.msra.mxu0 %v3189
    %4575 = vmatprep.subr.bf16.mxu0 0
    %4576 = vmatpush1.bf16.msra.mxu0 %v3190
    %4577 = vmatprep.subr.bf16.mxu0 0
    %4578 = vmatpush1.bf16.msra.mxu0 %v3191
    %4579 = vmatprep.subr.bf16.mxu0 0
    %4580 = vmatpush1.bf16.msra.mxu0 %v3192
    %4581 = vmatprep.subr.bf16.mxu0 0
    %4582 = vmatpush1.bf16.msra.mxu0 %v3193
    %4583 = vmatprep.subr.bf16.mxu0 0
    %4584 = vmatpush1.bf16.msra.mxu0 %v3194
    %4585 = vmatprep.subr.bf16.mxu0 0
    %4586 = vmatpush1.bf16.msra.mxu0 %v3195
    %4587 = vmatprep.subr.bf16.mxu0 0
    %4588 = vmatpush1.bf16.msra.mxu0 %v3196
    %4589 = vmatprep.subr.bf16.mxu0 0
    %4590 = vmatpush1.bf16.msra.mxu0 %v3197
    %4591 = vmatprep.subr.bf16.mxu0 0
    %4592 = vmatpush1.bf16.msra.mxu0 %v3198
    %4593 = vmatprep.subr.bf16.mxu0 0
    %4594 = vmatpush1.bf16.msra.mxu0 %v3199
    %4595 = vmatprep.subr.bf16.mxu0 0
    %4596 = vmatpush1.bf16.msra.mxu0 %v3200
    %4597 = vmatprep.subr.bf16.mxu0 0
    %4598 = vmatpush1.bf16.msra.mxu0 %v3201
    %4599 = vmatprep.subr.bf16.mxu0 0
    %4600 = vmatpush1.bf16.msra.mxu0 %v3202
    %4601 = vmatprep.subr.bf16.mxu0 0
    %4602 = vmatpush1.bf16.msra.mxu0 %v3203
    %4603 = vmatprep.subr.bf16.mxu0 0
    %4604 = vmatpush1.bf16.msra.mxu0 %v3204
    %4605 = vmatprep.mubr.bf16.mxu0 %v1100
    %4606 = vmatmul.mubr.bf16.gmra.mrb[0].mxu0 %v1099
    %v4607 = vpop.f32.mrb[0].mxu0
    %v4608 = vadd.f32 %v4568, %v4607
    %v4609 = vpop.f32.mrb[0].mxu0
    %v4610 = vpop.f32.mrb[0].mxu0
    %v4611 = vpop.f32.mrb[0].mxu0
    %4612 = vdwg.mxu0
    %4613 = vmatprep.subr.bf16.mxu0 0
    %4614 = vmatpush1.bf16.msra.mxu0 %v3205
    %4615 = vmatprep.subr.bf16.mxu0 0
    %4616 = vmatpush1.bf16.msra.mxu0 %v3206
    %4617 = vmatprep.subr.bf16.mxu0 0
    %4618 = vmatpush1.bf16.msra.mxu0 %v3207
    %4619 = vmatprep.subr.bf16.mxu0 0
    %4620 = vmatpush1.bf16.msra.mxu0 %v3208
    %4621 = vmatprep.subr.bf16.mxu0 0
    %4622 = vmatpush1.bf16.msra.mxu0 %v3209
    %4623 = vmatprep.subr.bf16.mxu0 0
    %4624 = vmatpush1.bf16.msra.mxu0 %v3210
    %4625 = vmatprep.subr.bf16.mxu0 0
    %4626 = vmatpush1.bf16.msra.mxu0 %v3211
    %4627 = vmatprep.subr.bf16.mxu0 0
    %4628 = vmatpush1.bf16.msra.mxu0 %v3212
    %4629 = vmatprep.subr.bf16.mxu0 0
    %4630 = vmatpush1.bf16.msra.mxu0 %v3213
    %4631 = vmatprep.subr.bf16.mxu0 0
    %4632 = vmatpush1.bf16.msra.mxu0 %v3214
    %4633 = vmatprep.subr.bf16.mxu0 0
    %4634 = vmatpush1.bf16.msra.mxu0 %v3215
    %4635 = vmatprep.subr.bf16.mxu0 0
    %4636 = vmatpush1.bf16.msra.mxu0 %v3216
    %4637 = vmatprep.subr.bf16.mxu0 0
    %4638 = vmatpush1.bf16.msra.mxu0 %v3217
    %4639 = vmatprep.subr.bf16.mxu0 0
    %4640 = vmatpush1.bf16.msra.mxu0 %v3218
    %4641 = vmatprep.subr.bf16.mxu0 0
    %4642 = vmatpush1.bf16.msra.mxu0 %v3219
    %4643 = vmatprep.subr.bf16.mxu0 0
    %4644 = vmatpush1.bf16.msra.mxu0 %v3220
    %4645 = vmatprep.mubr.bf16.mxu0 %v1102
    %4646 = vmatmul.mubr.bf16.gmra.mrb[0].mxu0 %v1101
    %v4647 = vpop.f32.mrb[0].mxu0
    %v4648 = vadd.f32 %v4608, %v4647
    %v4649 = vpop.f32.mrb[0].mxu0
    %v4650 = vpop.f32.mrb[0].mxu0
    %v4651 = vpop.f32.mrb[0].mxu0
    %4652 = vdwg.mxu0
    %4653 = vmatprep.subr.bf16.mxu0 0
    %4654 = vmatpush1.bf16.msra.mxu0 %v3221
    %4655 = vmatprep.subr.bf16.mxu0 0
    %4656 = vmatpush1.bf16.msra.mxu0 %v3222
    %4657 = vmatprep.subr.bf16.mxu0 0
    %4658 = vmatpush1.bf16.msra.mxu0 %v3223
    %4659 = vmatprep.subr.bf16.mxu0 0
    %4660 = vmatpush1.bf16.msra.mxu0 %v3224
    %4661 = vmatprep.subr.bf16.mxu0 0
    %4662 = vmatpush1.bf16.msra.mxu0 %v3225
    %4663 = vmatprep.subr.bf16.mxu0 0
    %4664 = vmatpush1.bf16.msra.mxu0 %v3226
    %4665 = vmatprep.subr.bf16.mxu0 0
    %4666 = vmatpush1.bf16.msra.mxu0 %v3227
    %4667 = vmatprep.subr.bf16.mxu0 0
    %4668 = vmatpush1.bf16.msra.mxu0 %v3228
    %4669 = vmatprep.subr.bf16.mxu0 0
    %4670 = vmatpush1.bf16.msra.mxu0 %v3229
    %4671 = vmatprep.subr.bf16.mxu0 0
    %4672 = vmatpush1.bf16.msra.mxu0 %v3230
    %4673 = vmatprep.subr.bf16.mxu0 0
    %4674 = vmatpush1.bf16.msra.mxu0 %v3231
    %4675 = vmatprep.subr.bf16.mxu0 0
    %4676 = vmatpush1.bf16.msra.mxu0 %v3232
    %4677 = vmatprep.subr.bf16.mxu0 0
    %4678 = vmatpush1.bf16.msra.mxu0 %v3233
    %4679 = vmatprep.subr.bf16.mxu0 0
    %4680 = vmatpush1.bf16.msra.mxu0 %v3234
    %4681 = vmatprep.subr.bf16.mxu0 0
    %4682 = vmatpush1.bf16.msra.mxu0 %v3235
    %4683 = vmatprep.subr.bf16.mxu0 0
    %4684 = vmatpush1.bf16.msra.mxu0 %v3236
    %4685 = vmatprep.mubr.bf16.mxu0 %v1104
    %4686 = vmatmul.mubr.bf16.gmra.mrb[0].mxu0 %v1103
    %v4687 = vpop.f32.mrb[0].mxu0
    %v4688 = vadd.f32 %v4648, %v4687
    %v4689 = vpop.f32.mrb[0].mxu0
    %v4690 = vpop.f32.mrb[0].mxu0
    %v4691 = vpop.f32.mrb[0].mxu0
    %4692 = vdwg.mxu0
    %v4693 = vmax.f32 %v4688, 0.0
    %v4694 = vpack.c.bf16 %v4693, %v4693
    %v4695 = vld [vmem:[%s4] sm:$0xf]
    %v4696 = vld [vmem:[%s4 + $0x4] sm:$0xf]
    %v4697 = vld [vmem:[%s4 + $0x8] sm:$0xf]
    %v4698 = vld [vmem:[%s4 + $0xc] sm:$0xf]
    %v4699 = vld [vmem:[%s4 + $0x10] sm:$0xf]
    %v4700 = vld [vmem:[%s4 + $0x14] sm:$0xf]
    %v4701 = vld [vmem:[%s4 + $0x18] sm:$0xf]
    %v4702 = vld [vmem:[%s4 + $0x1c] sm:$0xf]
    %v4703 = vld [vmem:[%s4 + $0x20] sm:$0xf]
    %v4704 = vld [vmem:[%s4 + $0x24] sm:$0xf]
    %v4705 = vld [vmem:[%s4 + $0x28] sm:$0xf]
    %v4706 = vld [vmem:[%s4 + $0x2c] sm:$0xf]
    %v4707 = vld [vmem:[%s4 + $0x30] sm:$0xf]
    %v4708 = vld [vmem:[%s4 + $0x34] sm:$0xf]
    %v4709 = vld [vmem:[%s4 + $0x38] sm:$0xf]
    %v4710 = vld [vmem:[%s4 + $0x3c] sm:$0xf]
    %v4711 = vld [vmem:[#allocation8] sm:$0x1]
    %v4713 = vlaneseq
    %v4714 = vshrl.u32 %v4713, 7
    %v4715 = vsub.s32 0, %v4714
    %v4716 = vrot.slane %v4711, %v4715
    %v4734 = vunpack.c.l.b16 %v4695
    %v4735 = vunpack.c.l.b16 %v4696
    %v4736 = vunpack.c.l.b16 %v4697
    %v4737 = vunpack.c.l.b16 %v4698
    %v4738 = vunpack.c.l.b16 %v4699
    %v4739 = vunpack.c.l.b16 %v4700
    %v4740 = vunpack.c.l.b16 %v4701
    %v4741 = vunpack.c.l.b16 %v4702
    %v4742 = vunpack.c.l.b16 %v4703
    %v4743 = vunpack.c.l.b16 %v4704
    %v4744 = vunpack.c.l.b16 %v4705
    %v4745 = vunpack.c.l.b16 %v4706
    %v4746 = vunpack.c.l.b16 %v4707
    %v4747 = vunpack.c.l.b16 %v4708
    %v4748 = vunpack.c.l.b16 %v4709
    %v4749 = vunpack.c.l.b16 %v4710
    %v4750 = vpack.c.b16 %v4735, %v4734
    %v4751 = vpack.c.b16 %v4737, %v4736
    %v4752 = vpack.c.b16 %v4739, %v4738
    %v4753 = vpack.c.b16 %v4741, %v4740
    %v4754 = vpack.c.b16 %v4743, %v4742
    %v4755 = vpack.c.b16 %v4745, %v4744
    %v4756 = vpack.c.b16 %v4747, %v4746
    %v4757 = vpack.c.b16 %v4749, %v4748
    %4766 = vmatprep.subr.bf16.mxu0 0
    %4767 = vmatpush1.bf16.msra.mxu0 %v4750
    %4768 = vmatprep.subr.bf16.mxu0 0
    %4769 = vmatpush1.bf16.msra.mxu0 %v4751
    %4770 = vmatprep.subr.bf16.mxu0 0
    %4771 = vmatpush1.bf16.msra.mxu0 %v4752
    %4772 = vmatprep.subr.bf16.mxu0 0
    %4773 = vmatpush1.bf16.msra.mxu0 %v4753
    %4774 = vmatprep.subr.bf16.mxu0 0
    %4775 = vmatpush1.bf16.msra.mxu0 %v4754
    %4776 = vmatprep.subr.bf16.mxu0 0
    %4777 = vmatpush1.bf16.msra.mxu0 %v4755
    %4778 = vmatprep.subr.bf16.mxu0 0
    %4779 = vmatpush1.bf16.msra.mxu0 %v4756
    %4780 = vmatprep.subr.bf16.mxu0 0
    %4781 = vmatpush1.bf16.msra.mxu0 %v4757
    %4782 = vmatprep.subr.bf16.mxu0 0
    %4783 = vmatpush1.bf16.msra.mxu0 0
    %4784 = vmatprep.subr.bf16.mxu0 0
    %4785 = vmatpush1.bf16.msra.mxu0 0
    %4786 = vmatprep.subr.bf16.mxu0 0
    %4787 = vmatpush1.bf16.msra.mxu0 0
    %4788 = vmatprep.subr.bf16.mxu0 0
    %4789 = vmatpush1.bf16.msra.mxu0 0
    %4790 = vmatprep.subr.bf16.mxu0 0
    %4791 = vmatpush1.bf16.msra.mxu0 0
    %4792 = vmatprep.subr.bf16.mxu0 0
    %4793 = vmatpush1.bf16.msra.mxu0 0
    %4794 = vmatprep.subr.bf16.mxu0 0
    %4795 = vmatpush1.bf16.msra.mxu0 0
    %4796 = vmatprep.subr.bf16.mxu0 0
    %4797 = vmatpush1.bf16.msra.mxu0 0
    %4798 = vmatprep.mubr.bf16.mxu0 0
    %4799 = vmatmul.mubr.bf16.gmra.mrb[0].mxu0 %v4694
    %v4800 = vpop.f32.mrb[0].mxu0
    %v4801 = vadd.f32 %v4716, %v4800
    %v4802 = vpop.f32.mrb[0].mxu0
    %v4803 = vpop.f32.mrb[0].mxu0
    %v4804 = vpop.f32.mrb[0].mxu0
    %4805 = vdwg.mxu0
    %v4806 = vmax.f32 %v4801, 0.0
    %v4807 = vpack.c.bf16 %v4806, %v4806
    %v4808 = vld [vmem:[%s6] sm:$0xf]
    %v4809 = vld [vmem:[%s6 + $0x4] sm:$0xf]
    %v4810 = vld [vmem:[%s6 + $0x8] sm:$0xf]
    %v4811 = vld [vmem:[%s6 + $0xc] sm:$0xf]
    %v4812 = vld [vmem:[%s6 + $0x10] sm:$0xf]
    %v4813 = vld [vmem:[%s6 + $0x14] sm:$0xf]
    %v4814 = vld [vmem:[%s6 + $0x18] sm:$0xf]
    %v4815 = vld [vmem:[%s6 + $0x1c] sm:$0xf]
    %v4816 = vld [vmem:[#allocation10] sm:$0x1]
    %v4818 = vlaneseq
    %v4819 = vshrl.u32 %v4818, 7
    %v4820 = vsub.s32 0, %v4819
    %v4821 = vrot.slane %v4816, %v4820
    %v4831 = vunpack.c.l.b16 %v4808
    %v4832 = vunpack.c.l.b16 %v4809
    %v4833 = vunpack.c.l.b16 %v4810
    %v4834 = vunpack.c.l.b16 %v4811
    %v4835 = vunpack.c.l.b16 %v4812
    %v4836 = vunpack.c.l.b16 %v4813
    %v4837 = vunpack.c.l.b16 %v4814
    %v4838 = vunpack.c.l.b16 %v4815
    %v4839 = vpack.c.b16 %v4832, %v4831
    %v4840 = vpack.c.b16 %v4834, %v4833
    %v4841 = vpack.c.b16 %v4836, %v4835
    %v4842 = vpack.c.b16 %v4838, %v4837
    %vm4847 = vcmask 523264
    %v4849 = vsel %vm4847, %v4807, 0
    %4851 = vmatprep.subr.bf16.mxu0 0
    %4852 = vmatpush1.bf16.msra.mxu0 %v4839
    %4853 = vmatprep.subr.bf16.mxu0 0
    %4854 = vmatpush1.bf16.msra.mxu0 %v4840
    %4855 = vmatprep.subr.bf16.mxu0 0
    %4856 = vmatpush1.bf16.msra.mxu0 %v4841
    %4857 = vmatprep.subr.bf16.mxu0 0
    %4858 = vmatpush1.bf16.msra.mxu0 %v4842
    %4859 = vmatprep.subr.bf16.mxu0 0
    %4860 = vmatpush1.bf16.msra.mxu0 0
    %4861 = vmatprep.subr.bf16.mxu0 0
    %4862 = vmatpush1.bf16.msra.mxu0 0
    %4863 = vmatprep.subr.bf16.mxu0 0
    %4864 = vmatpush1.bf16.msra.mxu0 0
    %4865 = vmatprep.subr.bf16.mxu0 0
    %4866 = vmatpush1.bf16.msra.mxu0 0
    %4867 = vmatprep.subr.bf16.mxu0 0
    %4868 = vmatpush1.bf16.msra.mxu0 0
    %4869 = vmatprep.subr.bf16.mxu0 0
    %4870 = vmatpush1.bf16.msra.mxu0 0
    %4871 = vmatprep.subr.bf16.mxu0 0
    %4872 = vmatpush1.bf16.msra.mxu0 0
    %4873 = vmatprep.subr.bf16.mxu0 0
    %4874 = vmatpush1.bf16.msra.mxu0 0
    %4875 = vmatprep.subr.bf16.mxu0 0
    %4876 = vmatpush1.bf16.msra.mxu0 0
    %4877 = vmatprep.subr.bf16.mxu0 0
    %4878 = vmatpush1.bf16.msra.mxu0 0
    %4879 = vmatprep.subr.bf16.mxu0 0
    %4880 = vmatpush1.bf16.msra.mxu0 0
    %4881 = vmatprep.subr.bf16.mxu0 0
    %4882 = vmatpush1.bf16.msra.mxu0 0
    %4883 = vmatprep.mubr.bf16.mxu0 0
    %4884 = vmatmul.mubr.bf16.gmra.mrb[0].mxu0 %v4849
    %v4885 = vpop.f32.mrb[0].mxu0
    %v4886 = vadd.f32 %v4821, %v4885
    %v4887 = vpop.f32.mrb[0].mxu0
    %v4888 = vpop.f32.mrb[0].mxu0
    %v4889 = vpop.f32.mrb[0].mxu0
    %4890 = vdwg.mxu0
    %v4891 = vmax.f32 %v4886, 0.0
    %v4892 = vld [vmem:[#allocation3] sm:$0xff]
    %v4893 = vmul.f32 %v4891, %v4892
    %v4894 = vld [vmem:[#allocation11] sm:$0x1]
    %v4896 = vlaneseq
    %v4897 = vshrl.u32 %v4896, 7
    %v4898 = vsub.s32 0, %v4897
    %v4899 = vrot.slane %v4894, %v4898
    %v4901 = vmul.f32 %v4893, %v4899
    %vm4902 = vcmask 261120
    %v4903 = vsel %vm4902, %v4901, 0.0
    %4904 = vadd.xlane.f32.xlu0 %v4903
    %v4905 = vpop.xlane.xlu0 %4904
    %v4906 = vld [vmem:[#allocation2] sm:$0x1]
    %v4908 = vlaneseq
    %v4909 = vshrl.u32 %v4908, 7
    %v4910 = vsub.s32 0, %v4909
    %v4911 = vrot.slane %v4906, %v4910
    %v4913 = vadd.f32 %v4905, %v4911
    %vm4914 = vcmask 7168
    %4915 = vst.msk [vmem:[%s10] sm:$0xff] %vm4914, %v4913
    // Predicated region
    $region66: #{mlp_forward.1} parent=1 // pred_check
      _
    $region67: #{mlp_forward.1} parent=1 // pred_check_branch
      %4917 = sbr.rel (0) target = $region69
    $region68: #{mlp_forward.1} parent=1 // pred_region
      _
    $region69: #{mlp_forward.1} parent=1 // pred_fallthru
      _
    // Predicated region
    $region70: #{mlp_forward.1} parent=1 // pred_check
      _
    $region71: #{mlp_forward.1} parent=1 // pred_check_branch
      %4919 = sbr.rel (0) target = $region73
    $region72: #{mlp_forward.1} parent=1 // pred_region
      _
    $region73: #{mlp_forward.1} parent=1 // pred_fallthru
      _
    %4920 = vsyncpa [#allocation4], 1
    %4921 = vsyncpa [#allocation6], 1
    %4922 = vsyncpa [#allocation9], 1
    %4923 = vsyncpa [#allocation12], 1

</llo_original>
